<compile_context>
chip_gen: v6e
topology: v6e:2x2x1
jax: 0.10.0
libtpu: 0.0.40
codegen_flags: <defaults>
</compile_context>

<pallas_src>
import functools

import jax
import jax.numpy as jnp
from jax import lax
from jax.experimental import pallas as pl
from jax.experimental.pallas import tpu as pltpu

H = 128       # GRU hidden size / conv channels (fixed by the module)
K = 5         # conv kernel size
PAD = 2       # conv padding (kernel_size=5, stride=1 -> length preserving)
BN_EPS = 1e-5


# ------------------------------- GRU (recurrence only) ------------------------------- #
def gru_kernel(gi_ref, whh_ref, bhh_ref, o_ref):
    # gi_ref: (T, B, 3H) precomputed x @ W_ih^T + b_ih (time-major)
    # whh_ref: (H, 3H) = W_hh^T    bhh_ref: (1, 3H)    o_ref: (T, B, H)
    T, B, _ = gi_ref.shape
    w_hh = whh_ref[...]
    b_hh = jnp.broadcast_to(bhh_ref[...], (B, 3 * H))     # broadcast hoisted out of the loop

    def one_step(t, h):
        gi = gi_ref[t]                                                        # (B, 3H)
        gh = jnp.dot(h, w_hh, preferred_element_type=jnp.float32) + b_hh      # only serial matmul
        r = jax.nn.sigmoid(gi[:, 0:H] + gh[:, 0:H])
        z = jax.nn.sigmoid(gi[:, H:2 * H] + gh[:, H:2 * H])
        n = jnp.tanh(gi[:, 2 * H:] + r * gh[:, 2 * H:])    # b_hn stays inside r*(...), as in PyTorch
        h_new = n + z * (h - n)                            # == (1-z)*n + z*h, one fewer VPU op
        o_ref[t] = h_new
        return h_new

    def two_steps(i, h):                                   # manual 2x unroll of the recurrence
        t0 = 2 * i
        return one_step(t0 + 1, one_step(t0, h))

    h = lax.fori_loop(0, T // 2, two_steps, jnp.zeros((B, H), jnp.float32))
    if T % 2:                                              # static remainder (T is a Python int)
        one_step(T - 1, h)


def gru_forward(z1_tm, w_ih, w_hh, b_ih, b_hh):
    # z1_tm: (T, Bp, H) time-major noise.  Returns hidden-state sequence (T, Bp, H), h0 = 0.
    T, Bp, _ = z1_tm.shape
    # Hoisted input projection: one big (T*Bp, 128) @ (128, 384) class matmul done by XLA on the MXU.
    gi = jnp.einsum("tbh,gh->tbg", z1_tm.astype(jnp.bfloat16), w_ih.astype(jnp.bfloat16),
                    preferred_element_type=jnp.float32) + b_ih
    return pl.pallas_call(
        gru_kernel,
        out_shape=jax.ShapeDtypeStruct((T, Bp, H), jnp.float32),
        in_specs=[pl.BlockSpec(memory_space=pltpu.MemorySpace.VMEM)] * 3,
        out_specs=pl.BlockSpec(memory_space=pltpu.MemorySpace.VMEM),
        compiler_params=pltpu.CompilerParams(vmem_limit_bytes=32 * 1024 * 1024),
    )(gi, jnp.transpose(w_hh), b_hh[None, :])


# ------------------------------------ Conv kernels ------------------------------------ #
def conv5_relu_kernel(x_ref, w_ref, b_ref, o_ref, xp_ref):
    # Conv1d(k=5, pad=2) + folded BatchNorm + ReLU for one batch element.
    # x_ref: (1, T, Cin)   w_ref: (5*Cin, Cout) bf16 (BN folded)   b_ref: (1, Cout) f32
    # o_ref: (1, T, Cout)  xp_ref: (T+4, Cin) f32 scratch (zero-padded copy of x)
    T, Cin = x_ref.shape[1], x_ref.shape[2]
    xp_ref[pl.ds(0, PAD), :] = jnp.zeros((PAD, Cin), jnp.float32)
    xp_ref[pl.ds(T + PAD, PAD), :] = jnp.zeros((PAD, Cin), jnp.float32)
    xp_ref[pl.ds(PAD, T), :] = x_ref[0].astype(jnp.float32)
    xp = xp_ref[...]
    # im2col: lane-concat of the 5 shifted taps -> single long-contraction MXU matmul.
    xe = jnp.concatenate([xp[k:k + T, :] for k in range(K)], axis=1)          # (T, 5*Cin)
    y = jnp.dot(xe.astype(jnp.bfloat16), w_ref[...],
                preferred_element_type=jnp.float32) + b_ref[...]
    o_ref[0] = jnp.maximum(y, 0.0).astype(o_ref.dtype)                        # Dropout(eval) = identity


def upsample_conv_kernel(x_ref, w_ref, b_ref, o_ref, xp_ref, *, act):
    # Fused [2x nearest upsample -> Conv1d(k=5, pad=2) -> (folded BN) -> act], polyphase form.
    # x_ref: (1, T, Cin)   w_ref: (3*Cin, 2*Cout) bf16 packed [even|odd]   b_ref: (1, 2*Cout) f32
    # o_ref: (1, T, 2*Cout) phase-packed   xp_ref: (T+2, Cin) f32 scratch (pad-by-1 of x).
    T, Cin = x_ref.shape[1], x_ref.shape[2]
    xp_ref[pl.ds(0, 1), :] = jnp.zeros((1, Cin), jnp.float32)
    xp_ref[pl.ds(T + 1, 1), :] = jnp.zeros((1, Cin), jnp.float32)
    xp_ref[pl.ds(1, T), :] = x_ref[0].astype(jnp.float32)
    xp = xp_ref[...]
    xe = jnp.concatenate([xp[0:T, :], xp[1:T + 1, :], xp[2:T + 2, :]], axis=1)  # (T, 3*Cin)
    y = jnp.dot(xe.astype(jnp.bfloat16), w_ref[...],
                preferred_element_type=jnp.float32) + b_ref[...]
    y = jnp.maximum(y, 0.0) if act == "relu" else jnp.tanh(y)
    o_ref[0] = y.astype(o_ref.dtype)


def conv5_relu_block(x, w_flat, b):
    B, T, Cin = x.shape
    Cout = w_flat.shape[1]
    return pl.pallas_call(
        conv5_relu_kernel,
        out_shape=jax.ShapeDtypeStruct((B, T, Cout), jnp.bfloat16),
        grid=(B,),
        in_specs=[
            pl.BlockSpec((1, T, Cin), lambda i: (i, 0, 0)),
            pl.BlockSpec((K * Cin, Cout), lambda i: (0, 0)),
            pl.BlockSpec((1, Cout), lambda i: (0, 0)),
        ],
        out_specs=pl.BlockSpec((1, T, Cout), lambda i: (i, 0, 0)),
        scratch_shapes=[pltpu.VMEM((T + 2 * PAD, Cin), jnp.float32)],
        compiler_params=pltpu.CompilerParams(dimension_semantics=("parallel",)),
    )(x, w_flat, b[None, :])


def upsample_conv_block(x, w_pk, b_pk, act):
    B, T, Cin = x.shape
    Cout2 = w_pk.shape[1]                       # 2 * Cout (phase packed)
    out_dtype = jnp.float32 if act == "tanh" else jnp.bfloat16
    y = pl.pallas_call(
        functools.partial(upsample_conv_kernel, act=act),
        out_shape=jax.ShapeDtypeStruct((B, T, Cout2), out_dtype),
        grid=(B,),
        in_specs=[
            pl.BlockSpec((1, T, Cin), lambda i: (i, 0, 0)),
            pl.BlockSpec((3 * Cin, Cout2), lambda i: (0, 0)),
            pl.BlockSpec((1, Cout2), lambda i: (0, 0)),
        ],
        out_specs=pl.BlockSpec((1, T, Cout2), lambda i: (i, 0, 0)),
        scratch_shapes=[pltpu.VMEM((T + 2, Cin), jnp.float32)],
        compiler_params=pltpu.CompilerParams(dimension_semantics=("parallel",)),
    )(x, w_pk, b_pk[None, :])
    # Phase-packed (B, T, 2*Cout) -> time-interleaved (B, 2T, Cout): identical row-major linear order,
    # so this reshape is a zero-copy bitcast in XLA (the upsample interleave is free).
    Cout = Cout2 // 2
    return y.reshape(B, 2 * T) if Cout == 1 else y.reshape(B, 2 * T, Cout)


# ------------------------------------- Parameters ------------------------------------- #
def fold_bn(w, b, gamma, beta, mean, var):
    # Fold eval-mode BatchNorm1d into conv weight (K, Cin, Cout) and bias (Cout,).
    s = gamma / jnp.sqrt(var + BN_EPS)
    return w * s[None, None, :], (b - mean) * s + beta


def pack_upsample_conv(w, b):
    # Polyphase packing of a 5-tap conv that follows a 2x nearest upsample.
    # w: (5, Cin, Cout) (BN already folded), b: (Cout,).
    # Even outputs: x[m-1](w0+w1) + x[m](w2+w3) + x[m+1]w4 ; odd: x[m-1]w0 + x[m](w1+w2) + x[m+1](w3+w4).
    we = jnp.concatenate([w[0] + w[1], w[2] + w[3], w[4]], axis=0)        # (3*Cin, Cout)
    wo = jnp.concatenate([w[0], w[1] + w[2], w[3] + w[4]], axis=0)        # (3*Cin, Cout)
    return jnp.concatenate([we, wo], axis=1), jnp.concatenate([b, b], axis=0)


def init_params(key):
    keys = iter(jax.random.split(key, 16))
    s_gru = 1.0 / jnp.sqrt(jnp.float32(H))
    params = {
        "w_ih": jax.random.uniform(next(keys), (3 * H, H), jnp.float32, -s_gru, s_gru),
        "w_hh": jax.random.uniform(next(keys), (3 * H, H), jnp.float32, -s_gru, s_gru),
        "b_ih": jax.random.uniform(next(keys), (3 * H,), jnp.float32, -s_gru, s_gru),
        "b_hh": jax.random.uniform(next(keys), (3 * H,), jnp.float32, -s_gru, s_gru),
    }
    s_conv = 1.0 / jnp.sqrt(jnp.float32(H * K))
    # NOTE: conv weights stored as (K, Cin, Cout); transpose (2,1,0) when importing PyTorch weights.
    for i, cout in zip((1, 2, 3, 4), (H, H, H, 1)):
        params[f"w{i}"] = jax.random.uniform(next(keys), (K, H, cout), jnp.float32, -s_conv, s_conv)
        params[f"b{i}"] = jax.random.uniform(next(keys), (cout,), jnp.float32, -s_conv, s_conv)
    for i in (1, 2, 3):  # BatchNorm1d eval-mode params / running stats (fresh-module defaults)
        params[f"bn{i}_gamma"] = jnp.ones((H,), jnp.float32)
        params[f"bn{i}_beta"] = jnp.zeros((H,), jnp.float32)
        params[f"bn{i}_mean"] = jnp.zeros((H,), jnp.float32)
        params[f"bn{i}_var"] = jnp.ones((H,), jnp.float32)
    return params


def prepare_inference_params(params):
    # Fold BN, flatten/pack conv weights for the im2col / polyphase kernels, cast matmul weights to bf16.
    p = {"w_ih": params["w_ih"], "b_ih": params["b_ih"],
         "w_hh": params["w_hh"], "b_hh": params["b_hh"]}
    w1, b1 = fold_bn(params["w1"], params["b1"], params["bn1_gamma"], params["bn1_beta"],
                     params["bn1_mean"], params["bn1_var"])
    p["w1_flat"] = w1.reshape(K * H, H).astype(jnp.bfloat16)
    p["b1"] = b1
    for i in (2, 3):
        wi, bi = fold_bn(params[f"w{i}"], params[f"b{i}"], params[f"bn{i}_gamma"],
                         params[f"bn{i}_beta"], params[f"bn{i}_mean"], params[f"bn{i}_var"])
        w_pk, b_pk = pack_upsample_conv(wi, bi)
        p[f"w{i}_pk"] = w_pk.astype(jnp.bfloat16)
        p[f"b{i}_pk"] = b_pk
    w4_pk, b4_pk = pack_upsample_conv(params["w4"], params["b4"])   # no BN on the last conv
    p["w4_pk"] = w4_pk.astype(jnp.bfloat16)
    p["b4_pk"] = b4_pk
    return p


# -------------------------------------- Forward --------------------------------------- #
@functools.partial(jax.jit, static_argnums=(1, 2))
def rnn_generator_forward(p, batch_size, seq_len, key):
    # Pad the batch up to a sublane multiple so the recurrent state is a full (8,128) tile.
    b_pad = ((batch_size + 7) // 8) * 8
    z1 = jax.random.normal(key, (seq_len, b_pad, H), jnp.float32)   # ~ torch.randn(B, T, 128), time-major
    h_seq = gru_forward(z1, p["w_ih"], p["w_hh"], p["b_ih"], p["b_hh"])     # (T, Bp, H)
    x = jnp.transpose(h_seq, (1, 0, 2))[:batch_size]                        # (B, T, H) (small copy)
    x = conv5_relu_block(x, p["w1_flat"], p["b1"])                          # (B, T, 128)
    x = upsample_conv_block(x, p["w2_pk"], p["b2_pk"], "relu")              # (B, 2T, 128)  fused up+conv
    x = upsample_conv_block(x, p["w3_pk"], p["b3_pk"], "relu")              # (B, 4T, 128)  fused up+conv
    y = upsample_conv_block(x, p["w4_pk"], p["b4_pk"], "tanh")              # (B, 8T)       fused up+conv+tanh
    return y                                                                # torch ref returns (B, 8T) for B>1


if __name__ == "__main__":
    key = jax.random.PRNGKey(0)
    pkey, zkey = jax.random.split(key)
    params = prepare_inference_params(init_params(pkey))

    batch_size, seq_len = 2, 8   # small stand-in for seq_gen_length=125
    out = rnn_generator_forward(params, batch_size, seq_len, zkey)
    jax.block_until_ready(out)

    assert out.shape == (batch_size, 8 * seq_len), out.shape
    assert bool(jnp.all(jnp.isfinite(out)))
    assert bool(jnp.all(jnp.abs(out) <= 1.0 + 1e-6))
    print("KERNEL_OK")
</pallas_src>

<mosaic_0001>
module attributes {stable_mosaic.version = 11 : i64} {
  func.func @gru_kernel(%arg0: memref<8x8x384xf32, #tpu.memory_space<vmem>>, %arg1: memref<128x384xf32, #tpu.memory_space<vmem>>, %arg2: memref<1x384xf32, #tpu.memory_space<vmem>>, %arg3: memref<8x8x128xf32, #tpu.memory_space<vmem>>) attributes {dimension_semantics = [], scalar_prefetch = 0 : i64, scratch_operands = 0 : i64, tpu.core_type = #tpu.core_type<tc>} {
    %c0 = arith.constant 0 : index
    %c0_0 = arith.constant 0 : index
    %0 = vector.load %arg1[%c0, %c0_0] : memref<128x384xf32, #tpu.memory_space<vmem>>, vector<128x384xf32>
    %c0_1 = arith.constant 0 : index
    %c0_2 = arith.constant 0 : index
    %1 = vector.load %arg2[%c0_1, %c0_2] : memref<1x384xf32, #tpu.memory_space<vmem>>, vector<1x384xf32>
    %2 = vector.shape_cast %1 : vector<1x384xf32> to vector<1x384xf32>
    %3 = vector.broadcast %2 : vector<1x384xf32> to vector<8x384xf32>
    %cst = arith.constant 0.000000e+00 : f32
    %4 = vector.broadcast %cst : f32 to vector<8x128xf32>
    %c0_i32 = arith.constant 0 : i32
    %c4_i32 = arith.constant 4 : i32
    %5 = arith.addi %c0_i32, %c4_i32 : i32
    %c1_i32 = arith.constant 1 : i32
    %6 = scf.for %arg4 = %c0_i32 to %5 step %c1_i32 iter_args(%arg5 = %4) -> (vector<8x128xf32>)  : i32 {
      %c2_i32 = arith.constant 2 : i32
      %7 = arith.muli %c2_i32, %arg4 : i32
      %c1_i32_4 = arith.constant 1 : i32
      %8 = arith.addi %7, %c1_i32_4 : i32
      %9 = arith.index_cast %7 : i32 to index
      %c0_5 = arith.constant 0 : index
      %c0_6 = arith.constant 0 : index
      %10 = vector.load %arg0[%9, %c0_5, %c0_6] : memref<8x8x384xf32, #tpu.memory_space<vmem>>, vector<1x8x384xf32>
      %11 = vector.shape_cast %10 : vector<1x8x384xf32> to vector<8x384xf32>
      %cst_7 = arith.constant dense<0.000000e+00> : vector<8x384xf32>
      %12 = tpu.matmul %arg5, %0, %cst_7 {dimension_numbers = #tpu.dot_dimension_numbers<[1], [0], [0], [1], [0, 0, 1, 1], [], []>} : vector<8x128xf32>, vector<128x384xf32>, vector<8x384xf32> -> vector<8x384xf32>
      %13 = arith.addf %12, %3 : vector<8x384xf32>
      %14 = vector.extract_strided_slice %11 {offsets = [0, 0], sizes = [8, 128], strides = [1, 1]} : vector<8x384xf32> to vector<8x128xf32>
      %15 = vector.extract_strided_slice %13 {offsets = [0, 0], sizes = [8, 128], strides = [1, 1]} : vector<8x384xf32> to vector<8x128xf32>
      %16 = arith.addf %14, %15 : vector<8x128xf32>
      %17 = arith.negf %16 : vector<8x128xf32>
      %18 = math.exp %17 : vector<8x128xf32>
      %cst_8 = arith.constant 1.000000e+00 : f32
      %19 = vector.broadcast %cst_8 : f32 to vector<8x128xf32>
      %20 = arith.addf %19, %18 : vector<8x128xf32>
      %21 = arith.divf %19, %20 : vector<8x128xf32>
      %22 = vector.extract_strided_slice %11 {offsets = [0, 128], sizes = [8, 128], strides = [1, 1]} : vector<8x384xf32> to vector<8x128xf32>
      %23 = vector.extract_strided_slice %13 {offsets = [0, 128], sizes = [8, 128], strides = [1, 1]} : vector<8x384xf32> to vector<8x128xf32>
      %24 = arith.addf %22, %23 : vector<8x128xf32>
      %25 = arith.negf %24 : vector<8x128xf32>
      %26 = math.exp %25 : vector<8x128xf32>
      %cst_9 = arith.constant 1.000000e+00 : f32
      %27 = vector.broadcast %cst_9 : f32 to vector<8x128xf32>
      %28 = arith.addf %27, %26 : vector<8x128xf32>
      %29 = arith.divf %27, %28 : vector<8x128xf32>
      %30 = vector.extract_strided_slice %11 {offsets = [0, 256], sizes = [8, 128], strides = [1, 1]} : vector<8x384xf32> to vector<8x128xf32>
      %31 = vector.extract_strided_slice %13 {offsets = [0, 256], sizes = [8, 128], strides = [1, 1]} : vector<8x384xf32> to vector<8x128xf32>
      %32 = arith.mulf %21, %31 : vector<8x128xf32>
      %33 = arith.addf %30, %32 : vector<8x128xf32>
      %34 = math.tanh %33 : vector<8x128xf32>
      %35 = arith.subf %arg5, %34 : vector<8x128xf32>
      %36 = arith.mulf %29, %35 : vector<8x128xf32>
      %37 = arith.addf %34, %36 : vector<8x128xf32>
      %38 = arith.index_cast %7 : i32 to index
      %c0_10 = arith.constant 0 : index
      %c0_11 = arith.constant 0 : index
      %39 = vector.load %arg3[%38, %c0_10, %c0_11] : memref<8x8x128xf32, #tpu.memory_space<vmem>>, vector<1x8x128xf32>
      %40 = vector.shape_cast %39 : vector<1x8x128xf32> to vector<8x128xf32>
      %41 = vector.shape_cast %37 : vector<8x128xf32> to vector<1x8x128xf32>
      tpu.vector_store %arg3[%38, %c0_10, %c0_11], %41 {strides = array<i32>} : memref<8x8x128xf32, #tpu.memory_space<vmem>>, vector<1x8x128xf32>,
      %42 = arith.index_cast %8 : i32 to index
      %c0_12 = arith.constant 0 : index
      %c0_13 = arith.constant 0 : index
      %43 = vector.load %arg0[%42, %c0_12, %c0_13] : memref<8x8x384xf32, #tpu.memory_space<vmem>>, vector<1x8x384xf32>
      %44 = vector.shape_cast %43 : vector<1x8x384xf32> to vector<8x384xf32>
      %cst_14 = arith.constant dense<0.000000e+00> : vector<8x384xf32>
      %45 = tpu.matmul %37, %0, %cst_14 {dimension_numbers = #tpu.dot_dimension_numbers<[1], [0], [0], [1], [0, 0, 1, 1], [], []>} : vector<8x128xf32>, vector<128x384xf32>, vector<8x384xf32> -> vector<8x384xf32>
      %46 = arith.addf %45, %3 : vector<8x384xf32>
      %47 = vector.extract_strided_slice %44 {offsets = [0, 0], sizes = [8, 128], strides = [1, 1]} : vector<8x384xf32> to vector<8x128xf32>
      %48 = vector.extract_strided_slice %46 {offsets = [0, 0], sizes = [8, 128], strides = [1, 1]} : vector<8x384xf32> to vector<8x128xf32>
      %49 = arith.addf %47, %48 : vector<8x128xf32>
      %50 = arith.negf %49 : vector<8x128xf32>
      %51 = math.exp %50 : vector<8x128xf32>
      %cst_15 = arith.constant 1.000000e+00 : f32
      %52 = vector.broadcast %cst_15 : f32 to vector<8x128xf32>
      %53 = arith.addf %52, %51 : vector<8x128xf32>
      %54 = arith.divf %52, %53 : vector<8x128xf32>
      %55 = vector.extract_strided_slice %44 {offsets = [0, 128], sizes = [8, 128], strides = [1, 1]} : vector<8x384xf32> to vector<8x128xf32>
      %56 = vector.extract_strided_slice %46 {offsets = [0, 128], sizes = [8, 128], strides = [1, 1]} : vector<8x384xf32> to vector<8x128xf32>
      %57 = arith.addf %55, %56 : vector<8x128xf32>
      %58 = arith.negf %57 : vector<8x128xf32>
      %59 = math.exp %58 : vector<8x128xf32>
      %cst_16 = arith.constant 1.000000e+00 : f32
      %60 = vector.broadcast %cst_16 : f32 to vector<8x128xf32>
      %61 = arith.addf %60, %59 : vector<8x128xf32>
      %62 = arith.divf %60, %61 : vector<8x128xf32>
      %63 = vector.extract_strided_slice %44 {offsets = [0, 256], sizes = [8, 128], strides = [1, 1]} : vector<8x384xf32> to vector<8x128xf32>
      %64 = vector.extract_strided_slice %46 {offsets = [0, 256], sizes = [8, 128], strides = [1, 1]} : vector<8x384xf32> to vector<8x128xf32>
      %65 = arith.mulf %54, %64 : vector<8x128xf32>
      %66 = arith.addf %63, %65 : vector<8x128xf32>
      %67 = math.tanh %66 : vector<8x128xf32>
      %68 = arith.subf %37, %67 : vector<8x128xf32>
      %69 = arith.mulf %62, %68 : vector<8x128xf32>
      %70 = arith.addf %67, %69 : vector<8x128xf32>
      %71 = arith.index_cast %8 : i32 to index
      %c0_17 = arith.constant 0 : index
      %c0_18 = arith.constant 0 : index
      %72 = vector.load %arg3[%71, %c0_17, %c0_18] : memref<8x8x128xf32, #tpu.memory_space<vmem>>, vector<1x8x128xf32>
      %73 = vector.shape_cast %72 : vector<1x8x128xf32> to vector<8x128xf32>
      %74 = vector.shape_cast %70 : vector<8x128xf32> to vector<1x8x128xf32>
      tpu.vector_store %arg3[%71, %c0_17, %c0_18], %74 {strides = array<i32>} : memref<8x8x128xf32, #tpu.memory_space<vmem>>, vector<1x8x128xf32>,
      scf.yield %70 : vector<8x128xf32>
    }
    %c4_i32_3 = arith.constant 4 : i32
    return
  }
}

module attributes {stable_mosaic.version = 11 : i64} {
  func.func @conv5_relu_kernel(%arg0: i32, %arg1: memref<1x8x128xf32, #tpu.memory_space<vmem>>, %arg2: memref<640x128xbf16, #tpu.memory_space<vmem>>, %arg3: memref<1x128xf32, #tpu.memory_space<vmem>>, %arg4: memref<1x8x128xbf16, #tpu.memory_space<vmem>>, %arg5: memref<12x128xf32, #tpu.memory_space<vmem>>) attributes {dimension_semantics = [#tpu.dimension_semantics<parallel>], iteration_bounds = array<i64: 2>, scalar_prefetch = 0 : i64, scratch_operands = 1 : i64, tpu.core_type = #tpu.core_type<tc>, window_params = [{transform_indices = @transform_0, window_bounds = array<i64: 1, 8, 128>}, {pipeline_mode = #tpu.pipeline_mode<synchronous>, transform_indices = @transform_1, window_bounds = array<i64: 640, 128>}, {pipeline_mode = #tpu.pipeline_mode<synchronous>, transform_indices = @transform_2, window_bounds = array<i64: 1, 128>}, {transform_indices = @transform_3, window_bounds = array<i64: 1, 8, 128>}]} {
    %cst = arith.constant 0.000000e+00 : f32
    %0 = vector.broadcast %cst : f32 to vector<2x128xf32>
    %c0 = arith.constant 0 : index
    %c0_0 = arith.constant 0 : index
    %1 = vector.load %arg5[%c0, %c0_0] : memref<12x128xf32, #tpu.memory_space<vmem>>, vector<2x128xf32>
    tpu.vector_store %arg5[%c0, %c0_0], %0 {strides = array<i32>} : memref<12x128xf32, #tpu.memory_space<vmem>>, vector<2x128xf32>,
    %cst_1 = arith.constant 0.000000e+00 : f32
    %2 = vector.broadcast %cst_1 : f32 to vector<2x128xf32>
    %c10 = arith.constant 10 : index
    %c0_2 = arith.constant 0 : index
    %3 = vector.load %arg5[%c10, %c0_2] : memref<12x128xf32, #tpu.memory_space<vmem>>, vector<2x128xf32>
    tpu.vector_store %arg5[%c10, %c0_2], %2 {strides = array<i32>} : memref<12x128xf32, #tpu.memory_space<vmem>>, vector<2x128xf32>,
    %c0_3 = arith.constant 0 : index
    %c0_4 = arith.constant 0 : index
    %c0_5 = arith.constant 0 : index
    %4 = vector.load %arg1[%c0_3, %c0_4, %c0_5] : memref<1x8x128xf32, #tpu.memory_space<vmem>>, vector<1x8x128xf32>
    %5 = vector.shape_cast %4 : vector<1x8x128xf32> to vector<8x128xf32>
    %c2 = arith.constant 2 : index
    %c0_6 = arith.constant 0 : index
    %6 = vector.load %arg5[%c2, %c0_6] : memref<12x128xf32, #tpu.memory_space<vmem>>, vector<8x128xf32>
    tpu.vector_store %arg5[%c2, %c0_6], %5 {strides = array<i32>} : memref<12x128xf32, #tpu.memory_space<vmem>>, vector<8x128xf32>,
    %c0_7 = arith.constant 0 : index
    %c0_8 = arith.constant 0 : index
    %7 = vector.load %arg5[%c0_7, %c0_8] : memref<12x128xf32, #tpu.memory_space<vmem>>, vector<12x128xf32>
    %8 = vector.extract_strided_slice %7 {offsets = [0, 0], sizes = [8, 128], strides = [1, 1]} : vector<12x128xf32> to vector<8x128xf32>
    %9 = vector.extract_strided_slice %7 {offsets = [1, 0], sizes = [8, 128], strides = [1, 1]} : vector<12x128xf32> to vector<8x128xf32>
    %10 = vector.extract_strided_slice %7 {offsets = [2, 0], sizes = [8, 128], strides = [1, 1]} : vector<12x128xf32> to vector<8x128xf32>
    %11 = vector.extract_strided_slice %7 {offsets = [3, 0], sizes = [8, 128], strides = [1, 1]} : vector<12x128xf32> to vector<8x128xf32>
    %12 = vector.extract_strided_slice %7 {offsets = [4, 0], sizes = [8, 128], strides = [1, 1]} : vector<12x128xf32> to vector<8x128xf32>
    %13 = tpu.concatenate %8, %9, %10, %11, %12 in 1 : vector<8x128xf32>, vector<8x128xf32>, vector<8x128xf32>, vector<8x128xf32>, vector<8x128xf32> -> vector<8x640xf32>
    %14 = arith.truncf %13 : vector<8x640xf32> to vector<8x640xbf16>
    %c0_9 = arith.constant 0 : index
    %c0_10 = arith.constant 0 : index
    %15 = vector.load %arg2[%c0_9, %c0_10] : memref<640x128xbf16, #tpu.memory_space<vmem>>, vector<640x128xbf16>
    %cst_11 = arith.constant dense<0.000000e+00> : vector<8x128xf32>
    %16 = tpu.matmul %14, %15, %cst_11 {dimension_numbers = #tpu.dot_dimension_numbers<[1], [0], [0], [1], [0, 0, 1, 1], [], []>} : vector<8x640xbf16>, vector<640x128xbf16>, vector<8x128xf32> -> vector<8x128xf32>
    %c0_12 = arith.constant 0 : index
    %c0_13 = arith.constant 0 : index
    %17 = vector.load %arg3[%c0_12, %c0_13] : memref<1x128xf32, #tpu.memory_space<vmem>>, vector<1x128xf32>
    %18 = vector.broadcast %17 : vector<1x128xf32> to vector<8x128xf32>
    %19 = arith.addf %16, %18 : vector<8x128xf32>
    %cst_14 = arith.constant 0.000000e+00 : f32
    %20 = vector.broadcast %cst_14 : f32 to vector<8x128xf32>
    %21 = arith.maximumf %19, %20 : vector<8x128xf32>
    %22 = arith.truncf %21 : vector<8x128xf32> to vector<8x128xbf16>
    %c0_15 = arith.constant 0 : index
    %c0_16 = arith.constant 0 : index
    %c0_17 = arith.constant 0 : index
    %23 = vector.load %arg4[%c0_15, %c0_16, %c0_17] : memref<1x8x128xbf16, #tpu.memory_space<vmem>>, vector<1x8x128xbf16>
    %24 = vector.shape_cast %23 : vector<1x8x128xbf16> to vector<8x128xbf16>
    %25 = vector.shape_cast %22 : vector<8x128xbf16> to vector<1x8x128xbf16>
    tpu.vector_store %arg4[%c0_15, %c0_16, %c0_17], %25 {strides = array<i32>} : memref<1x8x128xbf16, #tpu.memory_space<vmem>>, vector<1x8x128xbf16>,
    return
  }
  func.func @transform_0(%arg0: i32) -> (i32, i32, i32) {
    %c0_i32 = arith.constant 0 : i32
    %c0_i32_0 = arith.constant 0 : i32
    %c0_i32_1 = arith.constant 0 : i32
    return %arg0, %c0_i32, %c0_i32_0 : i32, i32, i32
  }
  func.func @transform_1(%arg0: i32) -> (i32, i32) {
    %c0_i32 = arith.constant 0 : i32
    %c0_i32_0 = arith.constant 0 : i32
    %c0_i32_1 = arith.constant 0 : i32
    return %c0_i32, %c0_i32_0 : i32, i32
  }
  func.func @transform_2(%arg0: i32) -> (i32, i32) {
    %c0_i32 = arith.constant 0 : i32
    %c0_i32_0 = arith.constant 0 : i32
    %c0_i32_1 = arith.constant 0 : i32
    return %c0_i32, %c0_i32_0 : i32, i32
  }
  func.func @transform_3(%arg0: i32) -> (i32, i32, i32) {
    %c0_i32 = arith.constant 0 : i32
    %c0_i32_0 = arith.constant 0 : i32
    %c0_i32_1 = arith.constant 0 : i32
    return %arg0, %c0_i32, %c0_i32_0 : i32, i32, i32
  }
}

module attributes {stable_mosaic.version = 11 : i64} {
  func.func @upsample_conv_kernel(%arg0: i32, %arg1: memref<1x8x128xbf16, #tpu.memory_space<vmem>>, %arg2: memref<384x256xbf16, #tpu.memory_space<vmem>>, %arg3: memref<1x256xf32, #tpu.memory_space<vmem>>, %arg4: memref<1x8x256xbf16, #tpu.memory_space<vmem>>, %arg5: memref<10x128xf32, #tpu.memory_space<vmem>>) attributes {dimension_semantics = [#tpu.dimension_semantics<parallel>], iteration_bounds = array<i64: 2>, scalar_prefetch = 0 : i64, scratch_operands = 1 : i64, tpu.core_type = #tpu.core_type<tc>, window_params = [{transform_indices = @transform_0, window_bounds = array<i64: 1, 8, 128>}, {pipeline_mode = #tpu.pipeline_mode<synchronous>, transform_indices = @transform_1, window_bounds = array<i64: 384, 256>}, {pipeline_mode = #tpu.pipeline_mode<synchronous>, transform_indices = @transform_2, window_bounds = array<i64: 1, 256>}, {transform_indices = @transform_3, window_bounds = array<i64: 1, 8, 256>}]} {
    %cst = arith.constant 0.000000e+00 : f32
    %0 = vector.broadcast %cst : f32 to vector<1x128xf32>
    %c0 = arith.constant 0 : index
    %c0_0 = arith.constant 0 : index
    %1 = vector.load %arg5[%c0, %c0_0] : memref<10x128xf32, #tpu.memory_space<vmem>>, vector<1x128xf32>
    tpu.vector_store %arg5[%c0, %c0_0], %0 {strides = array<i32>} : memref<10x128xf32, #tpu.memory_space<vmem>>, vector<1x128xf32>,
    %cst_1 = arith.constant 0.000000e+00 : f32
    %2 = vector.broadcast %cst_1 : f32 to vector<1x128xf32>
    %c9 = arith.constant 9 : index
    %c0_2 = arith.constant 0 : index
    %3 = vector.load %arg5[%c9, %c0_2] : memref<10x128xf32, #tpu.memory_space<vmem>>, vector<1x128xf32>
    tpu.vector_store %arg5[%c9, %c0_2], %2 {strides = array<i32>} : memref<10x128xf32, #tpu.memory_space<vmem>>, vector<1x128xf32>,
    %c0_3 = arith.constant 0 : index
    %c0_4 = arith.constant 0 : index
    %c0_5 = arith.constant 0 : index
    %4 = vector.load %arg1[%c0_3, %c0_4, %c0_5] : memref<1x8x128xbf16, #tpu.memory_space<vmem>>, vector<1x8x128xbf16>
    %5 = vector.shape_cast %4 : vector<1x8x128xbf16> to vector<8x128xbf16>
    %6 = arith.extf %5 : vector<8x128xbf16> to vector<8x128xf32>
    %c1 = arith.constant 1 : index
    %c0_6 = arith.constant 0 : index
    %7 = vector.load %arg5[%c1, %c0_6] : memref<10x128xf32, #tpu.memory_space<vmem>>, vector<8x128xf32>
    tpu.vector_store %arg5[%c1, %c0_6], %6 {strides = array<i32>} : memref<10x128xf32, #tpu.memory_space<vmem>>, vector<8x128xf32>,
    %c0_7 = arith.constant 0 : index
    %c0_8 = arith.constant 0 : index
    %8 = vector.load %arg5[%c0_7, %c0_8] : memref<10x128xf32, #tpu.memory_space<vmem>>, vector<10x128xf32>
    %9 = vector.extract_strided_slice %8 {offsets = [0, 0], sizes = [8, 128], strides = [1, 1]} : vector<10x128xf32> to vector<8x128xf32>
    %10 = vector.extract_strided_slice %8 {offsets = [1, 0], sizes = [8, 128], strides = [1, 1]} : vector<10x128xf32> to vector<8x128xf32>
    %11 = vector.extract_strided_slice %8 {offsets = [2, 0], sizes = [8, 128], strides = [1, 1]} : vector<10x128xf32> to vector<8x128xf32>
    %12 = tpu.concatenate %9, %10, %11 in 1 : vector<8x128xf32>, vector<8x128xf32>, vector<8x128xf32> -> vector<8x384xf32>
    %13 = arith.truncf %12 : vector<8x384xf32> to vector<8x384xbf16>
    %c0_9 = arith.constant 0 : index
    %c0_10 = arith.constant 0 : index
    %14 = vector.load %arg2[%c0_9, %c0_10] : memref<384x256xbf16, #tpu.memory_space<vmem>>, vector<384x256xbf16>
    %cst_11 = arith.constant dense<0.000000e+00> : vector<8x256xf32>
    %15 = tpu.matmul %13, %14, %cst_11 {dimension_numbers = #tpu.dot_dimension_numbers<[1], [0], [0], [1], [0, 0, 1, 1], [], []>} : vector<8x384xbf16>, vector<384x256xbf16>, vector<8x256xf32> -> vector<8x256xf32>
    %c0_12 = arith.constant 0 : index
    %c0_13 = arith.constant 0 : index
    %16 = vector.load %arg3[%c0_12, %c0_13] : memref<1x256xf32, #tpu.memory_space<vmem>>, vector<1x256xf32>
    %17 = vector.broadcast %16 : vector<1x256xf32> to vector<8x256xf32>
    %18 = arith.addf %15, %17 : vector<8x256xf32>
    %cst_14 = arith.constant 0.000000e+00 : f32
    %19 = vector.broadcast %cst_14 : f32 to vector<8x256xf32>
    %20 = arith.maximumf %18, %19 : vector<8x256xf32>
    %21 = arith.truncf %20 : vector<8x256xf32> to vector<8x256xbf16>
    %c0_15 = arith.constant 0 : index
    %c0_16 = arith.constant 0 : index
    %c0_17 = arith.constant 0 : index
    %22 = vector.load %arg4[%c0_15, %c0_16, %c0_17] : memref<1x8x256xbf16, #tpu.memory_space<vmem>>, vector<1x8x256xbf16>
    %23 = vector.shape_cast %22 : vector<1x8x256xbf16> to vector<8x256xbf16>
    %24 = vector.shape_cast %21 : vector<8x256xbf16> to vector<1x8x256xbf16>
    tpu.vector_store %arg4[%c0_15, %c0_16, %c0_17], %24 {strides = array<i32>} : memref<1x8x256xbf16, #tpu.memory_space<vmem>>, vector<1x8x256xbf16>,
    return
  }
  func.func @transform_0(%arg0: i32) -> (i32, i32, i32) {
    %c0_i32 = arith.constant 0 : i32
    %c0_i32_0 = arith.constant 0 : i32
    %c0_i32_1 = arith.constant 0 : i32
    return %arg0, %c0_i32, %c0_i32_0 : i32, i32, i32
  }
  func.func @transform_1(%arg0: i32) -> (i32, i32) {
    %c0_i32 = arith.constant 0 : i32
    %c0_i32_0 = arith.constant 0 : i32
    %c0_i32_1 = arith.constant 0 : i32
    return %c0_i32, %c0_i32_0 : i32, i32
  }
  func.func @transform_2(%arg0: i32) -> (i32, i32) {
    %c0_i32 = arith.constant 0 : i32
    %c0_i32_0 = arith.constant 0 : i32
    %c0_i32_1 = arith.constant 0 : i32
    return %c0_i32, %c0_i32_0 : i32, i32
  }
  func.func @transform_3(%arg0: i32) -> (i32, i32, i32) {
    %c0_i32 = arith.constant 0 : i32
    %c0_i32_0 = arith.constant 0 : i32
    %c0_i32_1 = arith.constant 0 : i32
    return %arg0, %c0_i32, %c0_i32_0 : i32, i32, i32
  }
}

module attributes {stable_mosaic.version = 11 : i64} {
  func.func @upsample_conv_kernel(%arg0: i32, %arg1: memref<1x16x128xbf16, #tpu.memory_space<vmem>>, %arg2: memref<384x256xbf16, #tpu.memory_space<vmem>>, %arg3: memref<1x256xf32, #tpu.memory_space<vmem>>, %arg4: memref<1x16x256xbf16, #tpu.memory_space<vmem>>, %arg5: memref<18x128xf32, #tpu.memory_space<vmem>>) attributes {dimension_semantics = [#tpu.dimension_semantics<parallel>], iteration_bounds = array<i64: 2>, scalar_prefetch = 0 : i64, scratch_operands = 1 : i64, tpu.core_type = #tpu.core_type<tc>, window_params = [{transform_indices = @transform_0, window_bounds = array<i64: 1, 16, 128>}, {pipeline_mode = #tpu.pipeline_mode<synchronous>, transform_indices = @transform_1, window_bounds = array<i64: 384, 256>}, {pipeline_mode = #tpu.pipeline_mode<synchronous>, transform_indices = @transform_2, window_bounds = array<i64: 1, 256>}, {transform_indices = @transform_3, window_bounds = array<i64: 1, 16, 256>}]} {
    %cst = arith.constant 0.000000e+00 : f32
    %0 = vector.broadcast %cst : f32 to vector<1x128xf32>
    %c0 = arith.constant 0 : index
    %c0_0 = arith.constant 0 : index
    %1 = vector.load %arg5[%c0, %c0_0] : memref<18x128xf32, #tpu.memory_space<vmem>>, vector<1x128xf32>
    tpu.vector_store %arg5[%c0, %c0_0], %0 {strides = array<i32>} : memref<18x128xf32, #tpu.memory_space<vmem>>, vector<1x128xf32>,
    %cst_1 = arith.constant 0.000000e+00 : f32
    %2 = vector.broadcast %cst_1 : f32 to vector<1x128xf32>
    %c17 = arith.constant 17 : index
    %c0_2 = arith.constant 0 : index
    %3 = vector.load %arg5[%c17, %c0_2] : memref<18x128xf32, #tpu.memory_space<vmem>>, vector<1x128xf32>
    tpu.vector_store %arg5[%c17, %c0_2], %2 {strides = array<i32>} : memref<18x128xf32, #tpu.memory_space<vmem>>, vector<1x128xf32>,
    %c0_3 = arith.constant 0 : index
    %c0_4 = arith.constant 0 : index
    %c0_5 = arith.constant 0 : index
    %4 = vector.load %arg1[%c0_3, %c0_4, %c0_5] : memref<1x16x128xbf16, #tpu.memory_space<vmem>>, vector<1x16x128xbf16>
    %5 = vector.shape_cast %4 : vector<1x16x128xbf16> to vector<16x128xbf16>
    %6 = arith.extf %5 : vector<16x128xbf16> to vector<16x128xf32>
    %c1 = arith.constant 1 : index
    %c0_6 = arith.constant 0 : index
    %7 = vector.load %arg5[%c1, %c0_6] : memref<18x128xf32, #tpu.memory_space<vmem>>, vector<16x128xf32>
    tpu.vector_store %arg5[%c1, %c0_6], %6 {strides = array<i32>} : memref<18x128xf32, #tpu.memory_space<vmem>>, vector<16x128xf32>,
    %c0_7 = arith.constant 0 : index
    %c0_8 = arith.constant 0 : index
    %8 = vector.load %arg5[%c0_7, %c0_8] : memref<18x128xf32, #tpu.memory_space<vmem>>, vector<18x128xf32>
    %9 = vector.extract_strided_slice %8 {offsets = [0, 0], sizes = [16, 128], strides = [1, 1]} : vector<18x128xf32> to vector<16x128xf32>
    %10 = vector.extract_strided_slice %8 {offsets = [1, 0], sizes = [16, 128], strides = [1, 1]} : vector<18x128xf32> to vector<16x128xf32>
    %11 = vector.extract_strided_slice %8 {offsets = [2, 0], sizes = [16, 128], strides = [1, 1]} : vector<18x128xf32> to vector<16x128xf32>
    %12 = tpu.concatenate %9, %10, %11 in 1 : vector<16x128xf32>, vector<16x128xf32>, vector<16x128xf32> -> vector<16x384xf32>
    %13 = arith.truncf %12 : vector<16x384xf32> to vector<16x384xbf16>
    %c0_9 = arith.constant 0 : index
    %c0_10 = arith.constant 0 : index
    %14 = vector.load %arg2[%c0_9, %c0_10] : memref<384x256xbf16, #tpu.memory_space<vmem>>, vector<384x256xbf16>
    %cst_11 = arith.constant dense<0.000000e+00> : vector<16x256xf32>
    %15 = tpu.matmul %13, %14, %cst_11 {dimension_numbers = #tpu.dot_dimension_numbers<[1], [0], [0], [1], [0, 0, 1, 1], [], []>} : vector<16x384xbf16>, vector<384x256xbf16>, vector<16x256xf32> -> vector<16x256xf32>
    %c0_12 = arith.constant 0 : index
    %c0_13 = arith.constant 0 : index
    %16 = vector.load %arg3[%c0_12, %c0_13] : memref<1x256xf32, #tpu.memory_space<vmem>>, vector<1x256xf32>
    %17 = vector.broadcast %16 : vector<1x256xf32> to vector<16x256xf32>
    %18 = arith.addf %15, %17 : vector<16x256xf32>
    %cst_14 = arith.constant 0.000000e+00 : f32
    %19 = vector.broadcast %cst_14 : f32 to vector<16x256xf32>
    %20 = arith.maximumf %18, %19 : vector<16x256xf32>
    %21 = arith.truncf %20 : vector<16x256xf32> to vector<16x256xbf16>
    %c0_15 = arith.constant 0 : index
    %c0_16 = arith.constant 0 : index
    %c0_17 = arith.constant 0 : index
    %22 = vector.load %arg4[%c0_15, %c0_16, %c0_17] : memref<1x16x256xbf16, #tpu.memory_space<vmem>>, vector<1x16x256xbf16>
    %23 = vector.shape_cast %22 : vector<1x16x256xbf16> to vector<16x256xbf16>
    %24 = vector.shape_cast %21 : vector<16x256xbf16> to vector<1x16x256xbf16>
    tpu.vector_store %arg4[%c0_15, %c0_16, %c0_17], %24 {strides = array<i32>} : memref<1x16x256xbf16, #tpu.memory_space<vmem>>, vector<1x16x256xbf16>,
    return
  }
  func.func @transform_0(%arg0: i32) -> (i32, i32, i32) {
    %c0_i32 = arith.constant 0 : i32
    %c0_i32_0 = arith.constant 0 : i32
    %c0_i32_1 = arith.constant 0 : i32
    return %arg0, %c0_i32, %c0_i32_0 : i32, i32, i32
  }
  func.func @transform_1(%arg0: i32) -> (i32, i32) {
    %c0_i32 = arith.constant 0 : i32
    %c0_i32_0 = arith.constant 0 : i32
    %c0_i32_1 = arith.constant 0 : i32
    return %c0_i32, %c0_i32_0 : i32, i32
  }
  func.func @transform_2(%arg0: i32) -> (i32, i32) {
    %c0_i32 = arith.constant 0 : i32
    %c0_i32_0 = arith.constant 0 : i32
    %c0_i32_1 = arith.constant 0 : i32
    return %c0_i32, %c0_i32_0 : i32, i32
  }
  func.func @transform_3(%arg0: i32) -> (i32, i32, i32) {
    %c0_i32 = arith.constant 0 : i32
    %c0_i32_0 = arith.constant 0 : i32
    %c0_i32_1 = arith.constant 0 : i32
    return %arg0, %c0_i32, %c0_i32_0 : i32, i32, i32
  }
}

module attributes {stable_mosaic.version = 11 : i64} {
  func.func @upsample_conv_kernel(%arg0: i32, %arg1: memref<1x32x128xbf16, #tpu.memory_space<vmem>>, %arg2: memref<384x2xbf16, #tpu.memory_space<vmem>>, %arg3: memref<1x2xf32, #tpu.memory_space<vmem>>, %arg4: memref<1x32x2xf32, #tpu.memory_space<vmem>>, %arg5: memref<34x128xf32, #tpu.memory_space<vmem>>) attributes {dimension_semantics = [#tpu.dimension_semantics<parallel>], iteration_bounds = array<i64: 2>, scalar_prefetch = 0 : i64, scratch_operands = 1 : i64, tpu.core_type = #tpu.core_type<tc>, window_params = [{transform_indices = @transform_0, window_bounds = array<i64: 1, 32, 128>}, {pipeline_mode = #tpu.pipeline_mode<synchronous>, transform_indices = @transform_1, window_bounds = array<i64: 384, 2>}, {pipeline_mode = #tpu.pipeline_mode<synchronous>, transform_indices = @transform_2, window_bounds = array<i64: 1, 2>}, {transform_indices = @transform_3, window_bounds = array<i64: 1, 32, 2>}]} {
    %cst = arith.constant 0.000000e+00 : f32
    %0 = vector.broadcast %cst : f32 to vector<1x128xf32>
    %c0 = arith.constant 0 : index
    %c0_0 = arith.constant 0 : index
    %1 = vector.load %arg5[%c0, %c0_0] : memref<34x128xf32, #tpu.memory_space<vmem>>, vector<1x128xf32>
    tpu.vector_store %arg5[%c0, %c0_0], %0 {strides = array<i32>} : memref<34x128xf32, #tpu.memory_space<vmem>>, vector<1x128xf32>,
    %cst_1 = arith.constant 0.000000e+00 : f32
    %2 = vector.broadcast %cst_1 : f32 to vector<1x128xf32>
    %c33 = arith.constant 33 : index
    %c0_2 = arith.constant 0 : index
    %3 = vector.load %arg5[%c33, %c0_2] : memref<34x128xf32, #tpu.memory_space<vmem>>, vector<1x128xf32>
    tpu.vector_store %arg5[%c33, %c0_2], %2 {strides = array<i32>} : memref<34x128xf32, #tpu.memory_space<vmem>>, vector<1x128xf32>,
    %c0_3 = arith.constant 0 : index
    %c0_4 = arith.constant 0 : index
    %c0_5 = arith.constant 0 : index
    %4 = vector.load %arg1[%c0_3, %c0_4, %c0_5] : memref<1x32x128xbf16, #tpu.memory_space<vmem>>, vector<1x32x128xbf16>
    %5 = vector.shape_cast %4 : vector<1x32x128xbf16> to vector<32x128xbf16>
    %6 = arith.extf %5 : vector<32x128xbf16> to vector<32x128xf32>
    %c1 = arith.constant 1 : index
    %c0_6 = arith.constant 0 : index
    %7 = vector.load %arg5[%c1, %c0_6] : memref<34x128xf32, #tpu.memory_space<vmem>>, vector<32x128xf32>
    tpu.vector_store %arg5[%c1, %c0_6], %6 {strides = array<i32>} : memref<34x128xf32, #tpu.memory_space<vmem>>, vector<32x128xf32>,
    %c0_7 = arith.constant 0 : index
    %c0_8 = arith.constant 0 : index
    %8 = vector.load %arg5[%c0_7, %c0_8] : memref<34x128xf32, #tpu.memory_space<vmem>>, vector<34x128xf32>
    %9 = vector.extract_strided_slice %8 {offsets = [0, 0], sizes = [32, 128], strides = [1, 1]} : vector<34x128xf32> to vector<32x128xf32>
    %10 = vector.extract_strided_slice %8 {offsets = [1, 0], sizes = [32, 128], strides = [1, 1]} : vector<34x128xf32> to vector<32x128xf32>
    %11 = vector.extract_strided_slice %8 {offsets = [2, 0], sizes = [32, 128], strides = [1, 1]} : vector<34x128xf32> to vector<32x128xf32>
    %12 = tpu.concatenate %9, %10, %11 in 1 : vector<32x128xf32>, vector<32x128xf32>, vector<32x128xf32> -> vector<32x384xf32>
    %13 = arith.truncf %12 : vector<32x384xf32> to vector<32x384xbf16>
    %c0_9 = arith.constant 0 : index
    %c0_10 = arith.constant 0 : index
    %14 = vector.load %arg2[%c0_9, %c0_10] : memref<384x2xbf16, #tpu.memory_space<vmem>>, vector<384x2xbf16>
    %cst_11 = arith.constant dense<0.000000e+00> : vector<32x2xf32>
    %15 = tpu.matmul %13, %14, %cst_11 {dimension_numbers = #tpu.dot_dimension_numbers<[1], [0], [0], [1], [0, 0, 1, 1], [], []>} : vector<32x384xbf16>, vector<384x2xbf16>, vector<32x2xf32> -> vector<32x2xf32>
    %c0_12 = arith.constant 0 : index
    %c0_13 = arith.constant 0 : index
    %16 = vector.load %arg3[%c0_12, %c0_13] : memref<1x2xf32, #tpu.memory_space<vmem>>, vector<1x2xf32>
    %17 = vector.broadcast %16 : vector<1x2xf32> to vector<32x2xf32>
    %18 = arith.addf %15, %17 : vector<32x2xf32>
    %19 = math.tanh %18 : vector<32x2xf32>
    %c0_14 = arith.constant 0 : index
    %c0_15 = arith.constant 0 : index
    %c0_16 = arith.constant 0 : index
    %20 = vector.load %arg4[%c0_14, %c0_15, %c0_16] : memref<1x32x2xf32, #tpu.memory_space<vmem>>, vector<1x32x2xf32>
    %21 = vector.shape_cast %20 : vector<1x32x2xf32> to vector<32x2xf32>
    %22 = vector.shape_cast %19 : vector<32x2xf32> to vector<1x32x2xf32>
    tpu.vector_store %arg4[%c0_14, %c0_15, %c0_16], %22 {strides = array<i32>} : memref<1x32x2xf32, #tpu.memory_space<vmem>>, vector<1x32x2xf32>,
    return
  }
  func.func @transform_0(%arg0: i32) -> (i32, i32, i32) {
    %c0_i32 = arith.constant 0 : i32
    %c0_i32_0 = arith.constant 0 : i32
    %c0_i32_1 = arith.constant 0 : i32
    return %arg0, %c0_i32, %c0_i32_0 : i32, i32, i32
  }
  func.func @transform_1(%arg0: i32) -> (i32, i32) {
    %c0_i32 = arith.constant 0 : i32
    %c0_i32_0 = arith.constant 0 : i32
    %c0_i32_1 = arith.constant 0 : i32
    return %c0_i32, %c0_i32_0 : i32, i32
  }
  func.func @transform_2(%arg0: i32) -> (i32, i32) {
    %c0_i32 = arith.constant 0 : i32
    %c0_i32_0 = arith.constant 0 : i32
    %c0_i32_1 = arith.constant 0 : i32
    return %c0_i32, %c0_i32_0 : i32, i32
  }
  func.func @transform_3(%arg0: i32) -> (i32, i32, i32) {
    %c0_i32 = arith.constant 0 : i32
    %c0_i32_0 = arith.constant 0 : i32
    %c0_i32_1 = arith.constant 0 : i32
    return %arg0, %c0_i32, %c0_i32_0 : i32, i32, i32
  }
}

</mosaic_0001>

<llo_original>
// kernel: rnn_generator_forward.7
$region0: #{rnn_generator_forward.7}
  #allocation0 [shape = 'u32[]', space=smem, size = 0x4, offset = 0x4, fixed_abs, tag = 'smem constant byte address 0x4 - core index']
  #allocation1 [shape = 'u32[144,128]{1,0:T(1,128)}', space=vmem, size = 0x12000, scoped, tag = 'internal scratch']
  #allocation2 [shape = 'f32[10,128]{1,0:T(8,128)}', space=vmem, size = 0x2000, scoped, tag = 'scratch operand']
  %s0 = inlined_call_operand.vmem [shape: bf16[2,8,128], index: 0, kind: input, shape index: {}]
  %s1 = inlined_call_operand.vmem [shape: bf16[384,256], index: 1, kind: input, shape index: {}]
  %s2 = inlined_call_operand.vmem [shape: f32[1,256], index: 2, kind: input, shape index: {}]
  %s3 = inlined_call_operand.vmem [shape: bf16[2,8,256], index: 3, kind: output, shape index: {}]
  %s4 = sld [smem:[#allocation0]]
  $region45: #{rnn_generator_forward.7} parent=0
    _
  %s6 = ssub.s32 1, %s4
  %s7 = scalar_select 0, %s6, %s4
  loop: start=0, step=1, limit=4
  $region2: #{rnn_generator_forward.7} parent=0 // loop_pre_header
    _
  $region3: #{rnn_generator_forward.7} parent=0 // loop_header
    %s9 = sphi 0, %s13
    %p10 = scmp.ge.s32.totalorder %s9, 4
    %s19 = sphi 0, %s21
    %s22 = sphi 0, %s19
    %s23 = sphi 0, %s22
    %s39 = sphi 0, %s23
    %s43 = sphi 0, %s43
    %s45 = sphi 0, %s43
    %s46 = sphi 0, %s45
    %s60 = sphi 0, %s46
    %s64 = sphi 0, %s64
    %s66 = sphi 0, %s64
    %s67 = sphi 0, %s66
    %s81 = sphi 0, %s67
    %s87 = sphi 0, %s89
    %s90 = sphi 0, %s87
    %s91 = sphi 0, %s90
    %s107 = sphi 0, %s91
  $region4: #{rnn_generator_forward.7} parent=0 // loop_header_branch
    %12 = sbr.rel (%p10) target = $region8
  $region5: #{rnn_generator_forward.7} parent=0 // loop_body
    %s14 = ssub.s32 %s9, 1
    %s15 = ssub.s32 %s9, 2
    %s16 = sadd.s32 %s9, 1
    %s17 = ssub.s32 %s9, %s16
    %p18 = scmp.eq.s32.totalorder %s17, 0
    %s20 = sadd.s32 %s19, 1
    %s21 = scalar_select %p18, %s19, %s20
    %p24 = pneg %p18
    %p25 = scmp.eq.s32.totalorder %s9, 1
    %p26 = por %p24, %p25
    %p27 = scmp.ne.s32.totalorder %s19, %s22
    %p28 = scmp.eq.s32.totalorder %s9, 0
    %p29 = por %p27, %p28
    %p30 = scmp.ne.s32.totalorder %s19, %s22
    %p31 = scmp.eq.s32.totalorder %s14, 1
    %p32 = por %p30, %p31
    %p33 = scmp.ne.s32.totalorder %s22, %s23
    %p34 = scmp.eq.s32.totalorder %s14, 0
    %p35 = por %p33, %p34
    %p36 = scmp.ne.s32.totalorder %s22, %s23
    %p37 = scmp.eq.s32.totalorder %s15, 1
    %p38 = por %p36, %p37
    %p40 = scmp.ne.s32.totalorder %s23, %s39
    %p41 = scmp.eq.s32.totalorder %s15, 0
    %p42 = por %p40, %p41
    %s44 = sadd.s32 %s43, 1
    %p47 = scmp.eq.s32.totalorder %s9, 1
    %p48 = scmp.ne.s32.totalorder %s43, %s45
    %p49 = scmp.eq.s32.totalorder %s9, 0
    %p50 = por %p48, %p49
    %p51 = scmp.ne.s32.totalorder %s43, %s45
    %p52 = scmp.eq.s32.totalorder %s14, 1
    %p53 = por %p51, %p52
    %p54 = scmp.ne.s32.totalorder %s45, %s46
    %p55 = scmp.eq.s32.totalorder %s14, 0
    %p56 = por %p54, %p55
    %p57 = scmp.ne.s32.totalorder %s45, %s46
    %p58 = scmp.eq.s32.totalorder %s15, 1
    %p59 = por %p57, %p58
    %p61 = scmp.ne.s32.totalorder %s46, %s60
    %p62 = scmp.eq.s32.totalorder %s15, 0
    %p63 = por %p61, %p62
    %s65 = sadd.s32 %s64, 1
    %p68 = scmp.eq.s32.totalorder %s9, 1
    %p69 = scmp.ne.s32.totalorder %s64, %s66
    %p70 = scmp.eq.s32.totalorder %s9, 0
    %p71 = por %p69, %p70
    %p72 = scmp.ne.s32.totalorder %s64, %s66
    %p73 = scmp.eq.s32.totalorder %s14, 1
    %p74 = por %p72, %p73
    %p75 = scmp.ne.s32.totalorder %s66, %s67
    %p76 = scmp.eq.s32.totalorder %s14, 0
    %p77 = por %p75, %p76
    %p78 = scmp.ne.s32.totalorder %s66, %s67
    %p79 = scmp.eq.s32.totalorder %s15, 1
    %p80 = por %p78, %p79
    %p82 = scmp.ne.s32.totalorder %s67, %s81
    %p83 = scmp.eq.s32.totalorder %s15, 0
    %p84 = por %p82, %p83
    %s85 = ssub.s32 %s9, %s16
    %p86 = scmp.eq.s32.totalorder %s85, 0
    %s88 = sadd.s32 %s87, 1
    %s89 = scalar_select %p86, %s87, %s88
    %p92 = pneg %p86
    %p93 = scmp.eq.s32.totalorder %s9, 1
    %p94 = por %p92, %p93
    %p95 = scmp.ne.s32.totalorder %s87, %s90
    %p96 = scmp.eq.s32.totalorder %s9, 0
    %p97 = por %p95, %p96
    %p98 = scmp.ne.s32.totalorder %s87, %s90
    %p99 = scmp.eq.s32.totalorder %s14, 1
    %p100 = por %p98, %p99
    %p101 = scmp.ne.s32.totalorder %s90, %s91
    %p102 = scmp.eq.s32.totalorder %s14, 0
    %p103 = por %p101, %p102
    %p104 = scmp.ne.s32.totalorder %s90, %s91
    %p105 = scmp.eq.s32.totalorder %s15, 1
    %p106 = por %p104, %p105
    %p108 = scmp.ne.s32.totalorder %s91, %s107
    %p109 = scmp.eq.s32.totalorder %s15, 0
    %p110 = por %p108, %p109
    %p111 = scmp.le.s32.totalorder 1, %s9
    %p112 = scmp.lt.s32.totalorder %s9, 3
    %p113 = pnand %p111, %p112
    %p114 = pneg %p113
    // Predicated region
    $region9: #{rnn_generator_forward.7} parent=5 // pred_check
      _
    $region10: #{rnn_generator_forward.7} parent=5 // pred_check_branch
      %116 = sbr.rel (%p113) target = $region12
    $region11: #{rnn_generator_forward.7} parent=5 // pred_region
      %s117 = ssub.s32 %s9, 1
      // Predicated region
      $region13: #{rnn_generator_forward.7} parent=11 // pred_check
        %p118 = pneg %p56
      $region14: #{rnn_generator_forward.7} parent=11 // pred_check_branch
        %120 = sbr.rel (%p118) target = $region16
      $region15: #{rnn_generator_forward.7} parent=11 // pred_region
        _
      $region16: #{rnn_generator_forward.7} parent=11 // pred_fallthru
        _
      // Predicated region
      $region17: #{rnn_generator_forward.7} parent=11 // pred_check
        %p121 = pneg %p77
      $region18: #{rnn_generator_forward.7} parent=11 // pred_check_branch
        %123 = sbr.rel (%p121) target = $region20
      $region19: #{rnn_generator_forward.7} parent=11 // pred_region
        _
      $region20: #{rnn_generator_forward.7} parent=11 // pred_fallthru
        _
    $region12: #{rnn_generator_forward.7} parent=5 // pred_fallthru
      _
    %p124 = scmp.lt.s32.totalorder %s9, 2
    // Predicated region
    $region21: #{rnn_generator_forward.7} parent=5 // pred_check
      %p125 = pneg %p124
    $region22: #{rnn_generator_forward.7} parent=5 // pred_check_branch
      %127 = sbr.rel (%p125) target = $region24
    $region23: #{rnn_generator_forward.7} parent=5 // pred_region
      // Predicated region
      $region25: #{rnn_generator_forward.7} parent=23 // pred_check
        %p128 = pneg %p29
      $region26: #{rnn_generator_forward.7} parent=23 // pred_check_branch
        %130 = sbr.rel (%p128) target = $region28
      $region27: #{rnn_generator_forward.7} parent=23 // pred_region
        %p131 = scmp.lt.s32.totalorder %s9, 1
        %s132 = scalar_select %p131, %s9, 1
        %s133 = smul.addr %s132, 4
        %s134 = scalar_lea.vmem %s0, %s133
      $region28: #{rnn_generator_forward.7} parent=23 // pred_fallthru
        _
    $region24: #{rnn_generator_forward.7} parent=5 // pred_fallthru
      _
    %p135 = scmp.le.s32.totalorder 1, %s9
    %p136 = scmp.lt.s32.totalorder %s9, 3
    %p137 = pnand %p135, %p136
    %p138 = pneg %p137
    // Predicated region
    $region29: #{rnn_generator_forward.7} parent=5 // pred_check
      _
    $region30: #{rnn_generator_forward.7} parent=5 // pred_check_branch
      %140 = sbr.rel (%p137) target = $region32
    $region31: #{rnn_generator_forward.7} parent=5 // pred_region
      %s141 = ssub.s32 %s9, 1
      %p142 = scmp.lt.s32.totalorder %s14, 1
      %s143 = scalar_select %p142, %s14, 1
      %s144 = smul.addr %s143, 4
      %s145 = scalar_lea.vmem %s0, %s144
      %p146 = pneg %p35
      %p147 = pneg %p32
      %p148 = pneg %p56
      %p149 = pneg %p53
      %p150 = pneg %p77
      %p151 = pneg %p74
      %p152 = pneg %p103
      %p153 = pneg %p100
      %p154 = scmp.lt.s32.totalorder %s14, 1
      %s155 = scalar_select %p154, %s14, 1
      %s156 = smul.addr %s155, 2
      %s157 = smul.addr %s156, 4
      %s158 = scalar_lea.vmem %s3, %s157
      %p159 = scmp.lt.s32.totalorder %s14, 1
      %s160 = scalar_select %p159, %s14, 1
      %s161 = smul.addr %s160, 4
      %s162 = scalar_lea.vmem %s0, %s161
      %p163 = scmp.lt.s32.totalorder %s14, 1
      %s164 = scalar_select %p163, %s14, 1
      %s165 = smul.addr %s164, 2
      %s166 = smul.addr %s165, 4
      %s167 = scalar_lea.vmem %s3, %s166
      %169 = vst [vmem:[#allocation2] sm:$0x1] 0.0
      %170 = vst [vmem:[#allocation2 + $0x9] sm:$0x1] 0.0
      %v171 = vld [vmem:[%s162] sm:$0xf]
      %v172 = vunpack.c.l.bf16 %v171
      %173 = vst [vmem:[#allocation2 + $0x1] sm:$0xff] %v172
      %v174 = vld [vmem:[#allocation2] sm:$0xff]
      %v175 = vld [vmem:[#allocation2 + $0x8] sm:$0x3]
      %vm178 = vcmask 1046528
      %v179 = vrot.slane %v174, 1
      %v180 = vrot.slane %v175, 1
      %v181 = vsel %vm178, %v179, %v180
      %vm183 = vcmask 1045504
      %v184 = vrot.slane %v174, 2
      %v185 = vrot.slane %v175, 2
      %v186 = vsel %vm183, %v184, %v185
      %v188 = vpack.c.bf16 %v174, %v174
      %v189 = vpack.c.bf16 %v181, %v181
      %v190 = vpack.c.bf16 %v186, %v186
      %v191 = vld [vmem:[%s1] sm:$0xff]
      %v192 = vld [vmem:[%s1 + $0x8] sm:$0xff]
      %v193 = vld [vmem:[%s1 + $0x10] sm:$0xff]
      %v194 = vld [vmem:[%s1 + $0x18] sm:$0xff]
      %v195 = vld [vmem:[%s1 + $0x20] sm:$0xff]
      %v196 = vld [vmem:[%s1 + $0x28] sm:$0xff]
      %v197 = vld [vmem:[%s1 + $0x30] sm:$0xff]
      %v198 = vld [vmem:[%s1 + $0x38] sm:$0xff]
      %v199 = vld [vmem:[%s1 + $0x40] sm:$0xff]
      %v200 = vld [vmem:[%s1 + $0x48] sm:$0xff]
      %v201 = vld [vmem:[%s1 + $0x50] sm:$0xff]
      %v202 = vld [vmem:[%s1 + $0x58] sm:$0xff]
      %v203 = vld [vmem:[%s1 + $0x60] sm:$0xff]
      %v204 = vld [vmem:[%s1 + $0x68] sm:$0xff]
      %v205 = vld [vmem:[%s1 + $0x70] sm:$0xff]
      %v206 = vld [vmem:[%s1 + $0x78] sm:$0xff]
      %v207 = vld [vmem:[%s1 + $0x80] sm:$0xff]
      %v208 = vld [vmem:[%s1 + $0x88] sm:$0xff]
      %v209 = vld [vmem:[%s1 + $0x90] sm:$0xff]
      %v210 = vld [vmem:[%s1 + $0x98] sm:$0xff]
      %v211 = vld [vmem:[%s1 + $0xa0] sm:$0xff]
      %v212 = vld [vmem:[%s1 + $0xa8] sm:$0xff]
      %v213 = vld [vmem:[%s1 + $0xb0] sm:$0xff]
      %v214 = vld [vmem:[%s1 + $0xb8] sm:$0xff]
      %v215 = vld [vmem:[%s1 + $0xc0] sm:$0xff]
      %v216 = vld [vmem:[%s1 + $0xc8] sm:$0xff]
      %v217 = vld [vmem:[%s1 + $0xd0] sm:$0xff]
      %v218 = vld [vmem:[%s1 + $0xd8] sm:$0xff]
      %v219 = vld [vmem:[%s1 + $0xe0] sm:$0xff]
      %v220 = vld [vmem:[%s1 + $0xe8] sm:$0xff]
      %v221 = vld [vmem:[%s1 + $0xf0] sm:$0xff]
      %v222 = vld [vmem:[%s1 + $0xf8] sm:$0xff]
      %v223 = vld [vmem:[%s1 + $0x100] sm:$0xff]
      %v224 = vld [vmem:[%s1 + $0x108] sm:$0xff]
      %v225 = vld [vmem:[%s1 + $0x110] sm:$0xff]
      %v226 = vld [vmem:[%s1 + $0x118] sm:$0xff]
      %v227 = vld [vmem:[%s1 + $0x120] sm:$0xff]
      %v228 = vld [vmem:[%s1 + $0x128] sm:$0xff]
      %v229 = vld [vmem:[%s1 + $0x130] sm:$0xff]
      %v230 = vld [vmem:[%s1 + $0x138] sm:$0xff]
      %v231 = vld [vmem:[%s1 + $0x140] sm:$0xff]
      %v232 = vld [vmem:[%s1 + $0x148] sm:$0xff]
      %v233 = vld [vmem:[%s1 + $0x150] sm:$0xff]
      %v234 = vld [vmem:[%s1 + $0x158] sm:$0xff]
      %v235 = vld [vmem:[%s1 + $0x160] sm:$0xff]
      %v236 = vld [vmem:[%s1 + $0x168] sm:$0xff]
      %v237 = vld [vmem:[%s1 + $0x170] sm:$0xff]
      %v238 = vld [vmem:[%s1 + $0x178] sm:$0xff]
      %v239 = vld [vmem:[%s2] sm:$0x3]
      %v241 = vlaneseq
      %v242 = vshrl.u32 %v241, 7
      %v243 = vsub.s32 0, %v242
      %v244 = vrot.slane %v239, %v243
      %v245 = vlaneseq
      %v246 = vshrl.u32 %v245, 7
      %v247 = vsub.s32 1, %v246
      %v248 = vrot.slane %v239, %v247
      %v299 = vunpack.c.l.b16 %v191
      %v300 = vunpack.c.h.b16 %v191
      %v301 = vunpack.c.l.b16 %v192
      %v302 = vunpack.c.h.b16 %v192
      %v303 = vunpack.c.l.b16 %v193
      %v304 = vunpack.c.h.b16 %v193
      %v305 = vunpack.c.l.b16 %v194
      %v306 = vunpack.c.h.b16 %v194
      %v307 = vunpack.c.l.b16 %v195
      %v308 = vunpack.c.h.b16 %v195
      %v309 = vunpack.c.l.b16 %v196
      %v310 = vunpack.c.h.b16 %v196
      %v311 = vunpack.c.l.b16 %v197
      %v312 = vunpack.c.h.b16 %v197
      %v313 = vunpack.c.l.b16 %v198
      %v314 = vunpack.c.h.b16 %v198
      %v315 = vunpack.c.l.b16 %v199
      %v316 = vunpack.c.h.b16 %v199
      %v317 = vunpack.c.l.b16 %v200
      %v318 = vunpack.c.h.b16 %v200
      %v319 = vunpack.c.l.b16 %v201
      %v320 = vunpack.c.h.b16 %v201
      %v321 = vunpack.c.l.b16 %v202
      %v322 = vunpack.c.h.b16 %v202
      %v323 = vunpack.c.l.b16 %v203
      %v324 = vunpack.c.h.b16 %v203
      %v325 = vunpack.c.l.b16 %v204
      %v326 = vunpack.c.h.b16 %v204
      %v327 = vunpack.c.l.b16 %v205
      %v328 = vunpack.c.h.b16 %v205
      %v329 = vunpack.c.l.b16 %v206
      %v330 = vunpack.c.h.b16 %v206
      %v331 = vunpack.c.l.b16 %v207
      %v332 = vunpack.c.h.b16 %v207
      %v333 = vunpack.c.l.b16 %v208
      %v334 = vunpack.c.h.b16 %v208
      %v335 = vunpack.c.l.b16 %v209
      %v336 = vunpack.c.h.b16 %v209
      %v337 = vunpack.c.l.b16 %v210
      %v338 = vunpack.c.h.b16 %v210
      %v339 = vunpack.c.l.b16 %v211
      %v340 = vunpack.c.h.b16 %v211
      %v341 = vunpack.c.l.b16 %v212
      %v342 = vunpack.c.h.b16 %v212
      %v343 = vunpack.c.l.b16 %v213
      %v344 = vunpack.c.h.b16 %v213
      %v345 = vunpack.c.l.b16 %v214
      %v346 = vunpack.c.h.b16 %v214
      %v347 = vunpack.c.l.b16 %v215
      %v348 = vunpack.c.h.b16 %v215
      %v349 = vunpack.c.l.b16 %v216
      %v350 = vunpack.c.h.b16 %v216
      %v351 = vunpack.c.l.b16 %v217
      %v352 = vunpack.c.h.b16 %v217
      %v353 = vunpack.c.l.b16 %v218
      %v354 = vunpack.c.h.b16 %v218
      %v355 = vunpack.c.l.b16 %v219
      %v356 = vunpack.c.h.b16 %v219
      %v357 = vunpack.c.l.b16 %v220
      %v358 = vunpack.c.h.b16 %v220
      %v359 = vunpack.c.l.b16 %v221
      %v360 = vunpack.c.h.b16 %v221
      %v361 = vunpack.c.l.b16 %v222
      %v362 = vunpack.c.h.b16 %v222
      %v363 = vunpack.c.l.b16 %v223
      %v364 = vunpack.c.h.b16 %v223
      %v365 = vunpack.c.l.b16 %v224
      %v366 = vunpack.c.h.b16 %v224
      %v367 = vunpack.c.l.b16 %v225
      %v368 = vunpack.c.h.b16 %v225
      %v369 = vunpack.c.l.b16 %v226
      %v370 = vunpack.c.h.b16 %v226
      %v371 = vunpack.c.l.b16 %v227
      %v372 = vunpack.c.h.b16 %v227
      %v373 = vunpack.c.l.b16 %v228
      %v374 = vunpack.c.h.b16 %v228
      %v375 = vunpack.c.l.b16 %v229
      %v376 = vunpack.c.h.b16 %v229
      %v377 = vunpack.c.l.b16 %v230
      %v378 = vunpack.c.h.b16 %v230
      %v379 = vunpack.c.l.b16 %v231
      %v380 = vunpack.c.h.b16 %v231
      %v381 = vunpack.c.l.b16 %v232
      %v382 = vunpack.c.h.b16 %v232
      %v383 = vunpack.c.l.b16 %v233
      %v384 = vunpack.c.h.b16 %v233
      %v385 = vunpack.c.l.b16 %v234
      %v386 = vunpack.c.h.b16 %v234
      %v387 = vunpack.c.l.b16 %v235
      %v388 = vunpack.c.h.b16 %v235
      %v389 = vunpack.c.l.b16 %v236
      %v390 = vunpack.c.h.b16 %v236
      %v391 = vunpack.c.l.b16 %v237
      %v392 = vunpack.c.h.b16 %v237
      %v393 = vunpack.c.l.b16 %v238
      %v394 = vunpack.c.h.b16 %v238
      %v395 = vpack.c.b16 %v301, %v299
      %v396 = vpack.c.b16 %v302, %v300
      %v397 = vpack.c.b16 %v305, %v303
      %v398 = vpack.c.b16 %v306, %v304
      %v399 = vpack.c.b16 %v309, %v307
      %v400 = vpack.c.b16 %v310, %v308
      %v401 = vpack.c.b16 %v313, %v311
      %v402 = vpack.c.b16 %v314, %v312
      %v403 = vpack.c.b16 %v317, %v315
      %v404 = vpack.c.b16 %v318, %v316
      %v405 = vpack.c.b16 %v321, %v319
      %v406 = vpack.c.b16 %v322, %v320
      %v407 = vpack.c.b16 %v325, %v323
      %v408 = vpack.c.b16 %v326, %v324
      %v409 = vpack.c.b16 %v329, %v327
      %v410 = vpack.c.b16 %v330, %v328
      %v411 = vpack.c.b16 %v333, %v331
      %v412 = vpack.c.b16 %v334, %v332
      %v413 = vpack.c.b16 %v337, %v335
      %v414 = vpack.c.b16 %v338, %v336
      %v415 = vpack.c.b16 %v341, %v339
      %v416 = vpack.c.b16 %v342, %v340
      %v417 = vpack.c.b16 %v345, %v343
      %v418 = vpack.c.b16 %v346, %v344
      %v419 = vpack.c.b16 %v349, %v347
      %v420 = vpack.c.b16 %v350, %v348
      %v421 = vpack.c.b16 %v353, %v351
      %v422 = vpack.c.b16 %v354, %v352
      %v423 = vpack.c.b16 %v357, %v355
      %v424 = vpack.c.b16 %v358, %v356
      %v425 = vpack.c.b16 %v361, %v359
      %v426 = vpack.c.b16 %v362, %v360
      %v427 = vpack.c.b16 %v365, %v363
      %v428 = vpack.c.b16 %v366, %v364
      %v429 = vpack.c.b16 %v369, %v367
      %v430 = vpack.c.b16 %v370, %v368
      %v431 = vpack.c.b16 %v373, %v371
      %v432 = vpack.c.b16 %v374, %v372
      %v433 = vpack.c.b16 %v377, %v375
      %v434 = vpack.c.b16 %v378, %v376
      %v435 = vpack.c.b16 %v381, %v379
      %v436 = vpack.c.b16 %v382, %v380
      %v437 = vpack.c.b16 %v385, %v383
      %v438 = vpack.c.b16 %v386, %v384
      %v439 = vpack.c.b16 %v389, %v387
      %v440 = vpack.c.b16 %v390, %v388
      %v441 = vpack.c.b16 %v393, %v391
      %v442 = vpack.c.b16 %v394, %v392
      %491 = vmatprep.subr.bf16.mxu0 %v410
      %492 = vmatpush1.bf16.msra.mxu0 %v409
      %493 = vmatprep.subr.bf16.mxu0 %v408
      %494 = vmatpush1.bf16.msra.mxu0 %v407
      %495 = vmatprep.subr.bf16.mxu0 %v406
      %496 = vmatpush1.bf16.msra.mxu0 %v405
      %497 = vmatprep.subr.bf16.mxu0 %v404
      %498 = vmatpush1.bf16.msra.mxu0 %v403
      %499 = vmatprep.subr.bf16.mxu0 %v402
      %500 = vmatpush1.bf16.msra.mxu0 %v401
      %501 = vmatprep.subr.bf16.mxu0 %v400
      %502 = vmatpush1.bf16.msra.mxu0 %v399
      %503 = vmatprep.subr.bf16.mxu0 %v398
      %504 = vmatpush1.bf16.msra.mxu0 %v397
      %505 = vmatprep.subr.bf16.mxu0 %v396
      %506 = vmatpush1.bf16.msra.mxu0 %v395
      %507 = vmatprep.subr.bf16.mxu0 %v426
      %508 = vmatpush2.bf16.msra.mxu0 %v425
      %509 = vmatprep.subr.bf16.mxu0 %v424
      %510 = vmatpush2.bf16.msra.mxu0 %v423
      %511 = vmatprep.subr.bf16.mxu0 %v422
      %512 = vmatpush2.bf16.msra.mxu0 %v421
      %513 = vmatprep.subr.bf16.mxu0 %v420
      %514 = vmatpush2.bf16.msra.mxu0 %v419
      %515 = vmatprep.subr.bf16.mxu0 %v418
      %516 = vmatpush2.bf16.msra.mxu0 %v417
      %517 = vmatprep.subr.bf16.mxu0 %v416
      %518 = vmatpush2.bf16.msra.mxu0 %v415
      %519 = vmatprep.subr.bf16.mxu0 %v414
      %520 = vmatpush2.bf16.msra.mxu0 %v413
      %521 = vmatprep.subr.bf16.mxu0 %v412
      %522 = vmatpush2.bf16.msra.mxu0 %v411
      %523 = vmatprep.mubr.bf16.mxu0 %v189
      %524 = vmatmul.mubr.bf16.gmra.mxu0 %v188
      %v525 = vpop.f32.mrf.mxu0
      %v526 = vadd.f32 %v244, %v525
      %v527 = vpop.f32.mrf.mxu0
      %v528 = vadd.f32 %v248, %v527
      %v529 = vpop.f32.mrf.mxu0
      %v530 = vpop.f32.mrf.mxu0
      %531 = vdwg.mxu0
      %532 = vmatprep.subr.bf16.mxu0 %v442
      %533 = vmatpush1.bf16.msra.mxu0 %v441
      %534 = vmatprep.subr.bf16.mxu0 %v440
      %535 = vmatpush1.bf16.msra.mxu0 %v439
      %536 = vmatprep.subr.bf16.mxu0 %v438
      %537 = vmatpush1.bf16.msra.mxu0 %v437
      %538 = vmatprep.subr.bf16.mxu0 %v436
      %539 = vmatpush1.bf16.msra.mxu0 %v435
      %540 = vmatprep.subr.bf16.mxu0 %v434
      %541 = vmatpush1.bf16.msra.mxu0 %v433
      %542 = vmatprep.subr.bf16.mxu0 %v432
      %543 = vmatpush1.bf16.msra.mxu0 %v431
      %544 = vmatprep.subr.bf16.mxu0 %v430
      %545 = vmatpush1.bf16.msra.mxu0 %v429
      %546 = vmatprep.subr.bf16.mxu0 %v428
      %547 = vmatpush1.bf16.msra.mxu0 %v427
      %548 = vmatprep.subr.bf16.mxu0 0
      %549 = vmatpush2.bf16.msra.mxu0 0
      %550 = vmatprep.subr.bf16.mxu0 0
      %551 = vmatpush2.bf16.msra.mxu0 0
      %552 = vmatprep.subr.bf16.mxu0 0
      %553 = vmatpush2.bf16.msra.mxu0 0
      %554 = vmatprep.subr.bf16.mxu0 0
      %555 = vmatpush2.bf16.msra.mxu0 0
      %556 = vmatprep.subr.bf16.mxu0 0
      %557 = vmatpush2.bf16.msra.mxu0 0
      %558 = vmatprep.subr.bf16.mxu0 0
      %559 = vmatpush2.bf16.msra.mxu0 0
      %560 = vmatprep.subr.bf16.mxu0 0
      %561 = vmatpush2.bf16.msra.mxu0 0
      %562 = vmatprep.subr.bf16.mxu0 0
      %563 = vmatpush2.bf16.msra.mxu0 0
      %564 = vmatprep.mubr.bf16.mxu0 0
      %565 = vmatmul.mubr.bf16.gmra.mxu0 %v190
      %v566 = vpop.f32.mrf.mxu0
      %v567 = vadd.f32 %v526, %v566
      %v568 = vpop.f32.mrf.mxu0
      %v569 = vadd.f32 %v528, %v568
      %v570 = vpop.f32.mrf.mxu0
      %v571 = vpop.f32.mrf.mxu0
      %572 = vdwg.mxu0
      %v573 = vmax.f32 %v567, 0.0
      %v574 = vmax.f32 %v569, 0.0
      %v575 = vpack.c.bf16 %v573, %v573
      %v576 = vpack.c.bf16 %v574, %v574
      %v579 = vunpack.c.l.b16 %v575
      %v580 = vunpack.c.l.b16 %v576
      %v581 = vpack.c.b16 %v580, %v579
      %583 = vst [vmem:[%s167] sm:$0xff] %v581
      %p584 = scmp.lt.s32.totalorder %s14, 1
      %s585 = scalar_select %p584, %s14, 1
      %s586 = smul.addr %s585, 2
      %s587 = smul.addr %s586, 4
      %s588 = scalar_lea.vmem %s3, %s587
      // Predicated region
      $region33: #{rnn_generator_forward.7} parent=31 // pred_check
        %p589 = pneg %p100
      $region34: #{rnn_generator_forward.7} parent=31 // pred_check_branch
        %591 = sbr.rel (%p589) target = $region36
      $region35: #{rnn_generator_forward.7} parent=31 // pred_region
        _
      $region36: #{rnn_generator_forward.7} parent=31 // pred_fallthru
        _
    $region32: #{rnn_generator_forward.7} parent=5 // pred_fallthru
      _
    %p592 = scmp.le.s32.totalorder 2, %s9
    // Predicated region
    $region37: #{rnn_generator_forward.7} parent=5 // pred_check
      %p593 = pneg %p592
    $region38: #{rnn_generator_forward.7} parent=5 // pred_check_branch
      %595 = sbr.rel (%p593) target = $region40
    $region39: #{rnn_generator_forward.7} parent=5 // pred_region
      %s596 = ssub.s32 %s9, 2
      // Predicated region
      $region41: #{rnn_generator_forward.7} parent=39 // pred_check
        %p597 = pneg %p106
      $region42: #{rnn_generator_forward.7} parent=39 // pred_check_branch
        %599 = sbr.rel (%p597) target = $region44
      $region43: #{rnn_generator_forward.7} parent=39 // pred_region
        %p600 = scmp.lt.s32.totalorder %s15, 1
        %s601 = scalar_select %p600, %s15, 1
        %s602 = smul.addr %s601, 2
        %s603 = smul.addr %s602, 4
        %s604 = scalar_lea.vmem %s3, %s603
      $region44: #{rnn_generator_forward.7} parent=39 // pred_fallthru
        _
    $region40: #{rnn_generator_forward.7} parent=5 // pred_fallthru
      _
  $region6: #{rnn_generator_forward.7} parent=0 // loop_footer
    %s13 = sadd.s32 1, %s9
  $region7: #{rnn_generator_forward.7} parent=0 // loop_footer_branch
    %8 = sbr.rel target = $region3
  $region8: #{rnn_generator_forward.7} parent=0 // loop_exit
    _

// kernel: rnn_generator_forward.5
$region0: #{rnn_generator_forward.5}
  #allocation0 [shape = 'u32[]', space=smem, size = 0x4, offset = 0x4, fixed_abs, tag = 'smem constant byte address 0x4 - core index']
  #allocation1 [shape = 'u32[144,128]{1,0:T(1,128)}', space=vmem, size = 0x12000, scoped, tag = 'internal scratch']
  %s0 = inlined_call_operand.vmem [shape: f32[8,8,384], index: 0, kind: input, shape index: {}]
  %s1 = inlined_call_operand.vmem [shape: f32[128,384], index: 1, kind: input, shape index: {}]
  %s2 = inlined_call_operand.vmem [shape: f32[1,384], index: 2, kind: input, shape index: {}]
  %s3 = inlined_call_operand.vmem [shape: f32[8,8,128], index: 3, kind: output, shape index: {}]
  %s4 = sld [smem:[#allocation0]]
  $region29: #{rnn_generator_forward.5} parent=0
    _
  %s6 = ssub.s32 1, %s4
  %s7 = scalar_select 0, %s6, %s4
  // Predicated region
  $region2: #{rnn_generator_forward.5} parent=0 // pred_check
    _
  $region3: #{rnn_generator_forward.5} parent=0 // pred_check_branch
    %9 = sbr.rel (0) target = $region5
  $region4: #{rnn_generator_forward.5} parent=0 // pred_region
    _
  $region5: #{rnn_generator_forward.5} parent=0 // pred_fallthru
    _
  // Predicated region
  $region6: #{rnn_generator_forward.5} parent=0 // pred_check
    _
  $region7: #{rnn_generator_forward.5} parent=0 // pred_check_branch
    %11 = sbr.rel (0) target = $region9
  $region8: #{rnn_generator_forward.5} parent=0 // pred_region
    _
  $region9: #{rnn_generator_forward.5} parent=0 // pred_fallthru
    _
  // Predicated region
  $region10: #{rnn_generator_forward.5} parent=0 // pred_check
    _
  $region11: #{rnn_generator_forward.5} parent=0 // pred_check_branch
    %13 = sbr.rel (0) target = $region13
  $region12: #{rnn_generator_forward.5} parent=0 // pred_region
    _
  $region13: #{rnn_generator_forward.5} parent=0 // pred_fallthru
    _
  %v14 = vld [vmem:[%s1] sm:$0xff]
  %v15 = vld [vmem:[%s1 + $0x8] sm:$0xff]
  %v16 = vld [vmem:[%s1 + $0x10] sm:$0xff]
  %v17 = vld [vmem:[%s1 + $0x18] sm:$0xff]
  %v18 = vld [vmem:[%s1 + $0x20] sm:$0xff]
  %v19 = vld [vmem:[%s1 + $0x28] sm:$0xff]
  %v20 = vld [vmem:[%s1 + $0x30] sm:$0xff]
  %v21 = vld [vmem:[%s1 + $0x38] sm:$0xff]
  %v22 = vld [vmem:[%s1 + $0x40] sm:$0xff]
  %v23 = vld [vmem:[%s1 + $0x48] sm:$0xff]
  %v24 = vld [vmem:[%s1 + $0x50] sm:$0xff]
  %v25 = vld [vmem:[%s1 + $0x58] sm:$0xff]
  %v26 = vld [vmem:[%s1 + $0x60] sm:$0xff]
  %v27 = vld [vmem:[%s1 + $0x68] sm:$0xff]
  %v28 = vld [vmem:[%s1 + $0x70] sm:$0xff]
  %v29 = vld [vmem:[%s1 + $0x78] sm:$0xff]
  %v30 = vld [vmem:[%s1 + $0x80] sm:$0xff]
  %v31 = vld [vmem:[%s1 + $0x88] sm:$0xff]
  %v32 = vld [vmem:[%s1 + $0x90] sm:$0xff]
  %v33 = vld [vmem:[%s1 + $0x98] sm:$0xff]
  %v34 = vld [vmem:[%s1 + $0xa0] sm:$0xff]
  %v35 = vld [vmem:[%s1 + $0xa8] sm:$0xff]
  %v36 = vld [vmem:[%s1 + $0xb0] sm:$0xff]
  %v37 = vld [vmem:[%s1 + $0xb8] sm:$0xff]
  %v38 = vld [vmem:[%s1 + $0xc0] sm:$0xff]
  %v39 = vld [vmem:[%s1 + $0xc8] sm:$0xff]
  %v40 = vld [vmem:[%s1 + $0xd0] sm:$0xff]
  %v41 = vld [vmem:[%s1 + $0xd8] sm:$0xff]
  %v42 = vld [vmem:[%s1 + $0xe0] sm:$0xff]
  %v43 = vld [vmem:[%s1 + $0xe8] sm:$0xff]
  %v44 = vld [vmem:[%s1 + $0xf0] sm:$0xff]
  %v45 = vld [vmem:[%s1 + $0xf8] sm:$0xff]
  %v46 = vld [vmem:[%s1 + $0x100] sm:$0xff]
  %v47 = vld [vmem:[%s1 + $0x108] sm:$0xff]
  %v48 = vld [vmem:[%s1 + $0x110] sm:$0xff]
  %v49 = vld [vmem:[%s1 + $0x118] sm:$0xff]
  %v50 = vld [vmem:[%s1 + $0x120] sm:$0xff]
  %v51 = vld [vmem:[%s1 + $0x128] sm:$0xff]
  %v52 = vld [vmem:[%s1 + $0x130] sm:$0xff]
  %v53 = vld [vmem:[%s1 + $0x138] sm:$0xff]
  %v54 = vld [vmem:[%s1 + $0x140] sm:$0xff]
  %v55 = vld [vmem:[%s1 + $0x148] sm:$0xff]
  %v56 = vld [vmem:[%s1 + $0x150] sm:$0xff]
  %v57 = vld [vmem:[%s1 + $0x158] sm:$0xff]
  %v58 = vld [vmem:[%s1 + $0x160] sm:$0xff]
  %v59 = vld [vmem:[%s1 + $0x168] sm:$0xff]
  %v60 = vld [vmem:[%s1 + $0x170] sm:$0xff]
  %v61 = vld [vmem:[%s1 + $0x178] sm:$0xff]
  %v62 = vld [vmem:[%s2] sm:$0x7]
  %v64 = vlaneseq
  %v65 = vshrl.u32 %v64, 7
  %v66 = vsub.s32 0, %v65
  %v67 = vrot.slane %v62, %v66
  %v68 = vlaneseq
  %v69 = vshrl.u32 %v68, 7
  %v70 = vsub.s32 1, %v69
  %v71 = vrot.slane %v62, %v70
  %v72 = vlaneseq
  %v73 = vshrl.u32 %v72, 7
  %v74 = vsub.s32 2, %v73
  %v75 = vrot.slane %v62, %v74
  loop: start=0, step=1, limit=4
  $region14: #{rnn_generator_forward.5} parent=0 // loop_pre_header
    _
  $region15: #{rnn_generator_forward.5} parent=0 // loop_header
    %s80 = sphi 0, %s84
    %p81 = scmp.ge.s32.totalorder %s80, 4
    %v85 = vphi 0.0, %v424
  $region16: #{rnn_generator_forward.5} parent=0 // loop_header_branch
    %83 = sbr.rel (%p81) target = $region20
  $region17: #{rnn_generator_forward.5} parent=0 // loop_body
    %s86 = smul.u32 %s80, 2
    %s87 = sadd.s32 %s86, 1
    %s88 = smul.u32 %s86, 3
    %s89 = smul.addr %s88, 8
    %s90 = scalar_lea.vmem %s0, %s89
    %v91 = vld [vmem:[%s90] sm:$0xff]
    %v92 = vld [vmem:[%s90 + $0x8] sm:$0xff]
    %v93 = vld [vmem:[%s90 + $0x10] sm:$0xff]
    %94 = vmatprep.subr.mxu0 %v60
    %95 = vmatpush1.msra.mxu0 %v59
    %96 = vmatprep.subr.mxu0 %v57
    %97 = vmatpush1.msra.mxu0 %v56
    %98 = vmatprep.subr.mxu0 %v54
    %99 = vmatpush1.msra.mxu0 %v53
    %100 = vmatprep.subr.mxu0 %v51
    %101 = vmatpush1.msra.mxu0 %v50
    %102 = vmatprep.subr.mxu0 %v48
    %103 = vmatpush1.msra.mxu0 %v47
    %104 = vmatprep.subr.mxu0 %v45
    %105 = vmatpush1.msra.mxu0 %v44
    %106 = vmatprep.subr.mxu0 %v42
    %107 = vmatpush1.msra.mxu0 %v41
    %108 = vmatprep.subr.mxu0 %v39
    %109 = vmatpush1.msra.mxu0 %v38
    %110 = vmatprep.subr.mxu0 %v36
    %111 = vmatpush1.msra.mxu0 %v35
    %112 = vmatprep.subr.mxu0 %v33
    %113 = vmatpush1.msra.mxu0 %v32
    %114 = vmatprep.subr.mxu0 %v30
    %115 = vmatpush1.msra.mxu0 %v29
    %116 = vmatprep.subr.mxu0 %v27
    %117 = vmatpush1.msra.mxu0 %v26
    %118 = vmatprep.subr.mxu0 %v24
    %119 = vmatpush1.msra.mxu0 %v23
    %120 = vmatprep.subr.mxu0 %v21
    %121 = vmatpush1.msra.mxu0 %v20
    %122 = vmatprep.subr.mxu0 %v18
    %123 = vmatpush1.msra.mxu0 %v17
    %124 = vmatprep.subr.mxu0 %v15
    %125 = vmatpush1.msra.mxu0 %v14
    %126 = vmatprep.subr.mxu0 0.0
    %127 = vmatpush2.msra.mxu0 0.0
    %128 = vmatprep.subr.mxu0 0.0
    %129 = vmatpush2.msra.mxu0 0.0
    %130 = vmatprep.subr.mxu0 0.0
    %131 = vmatpush2.msra.mxu0 0.0
    %132 = vmatprep.subr.mxu0 0.0
    %133 = vmatpush2.msra.mxu0 0.0
    %134 = vmatprep.subr.mxu0 0.0
    %135 = vmatpush2.msra.mxu0 0.0
    %136 = vmatprep.subr.mxu0 0.0
    %137 = vmatpush2.msra.mxu0 0.0
    %138 = vmatprep.subr.mxu0 0.0
    %139 = vmatpush2.msra.mxu0 0.0
    %140 = vmatprep.subr.mxu0 0.0
    %141 = vmatpush2.msra.mxu0 0.0
    %142 = vmatprep.subr.mxu0 0.0
    %143 = vmatpush2.msra.mxu0 0.0
    %144 = vmatprep.subr.mxu0 0.0
    %145 = vmatpush2.msra.mxu0 0.0
    %146 = vmatprep.subr.mxu0 0.0
    %147 = vmatpush2.msra.mxu0 0.0
    %148 = vmatprep.subr.mxu0 0.0
    %149 = vmatpush2.msra.mxu0 0.0
    %150 = vmatprep.subr.mxu0 0.0
    %151 = vmatpush2.msra.mxu0 0.0
    %152 = vmatprep.subr.mxu0 0.0
    %153 = vmatpush2.msra.mxu0 0.0
    %154 = vmatprep.subr.mxu0 0.0
    %155 = vmatpush2.msra.mxu0 0.0
    %156 = vmatprep.subr.mxu0 0.0
    %157 = vmatpush2.msra.mxu0 0.0
    %158 = vmatprep.mubr.f32.mxu0 0.0
    %159 = vmatmul.mubr.f32.gmra.mxu0 %v85
    %v160 = vpop.f32.mrf.mxu0
    %v161 = vadd.f32 %v67, %v160
    %v162 = vpop.f32.mrf.mxu0
    %v163 = vadd.f32 %v71, %v162
    %164 = vdwg.mxu0
    %165 = vmatprep.subr.mxu0 0.0
    %166 = vmatpush1.msra.mxu0 %v61
    %167 = vmatprep.subr.mxu0 0.0
    %168 = vmatpush1.msra.mxu0 %v58
    %169 = vmatprep.subr.mxu0 0.0
    %170 = vmatpush1.msra.mxu0 %v55
    %171 = vmatprep.subr.mxu0 0.0
    %172 = vmatpush1.msra.mxu0 %v52
    %173 = vmatprep.subr.mxu0 0.0
    %174 = vmatpush1.msra.mxu0 %v49
    %175 = vmatprep.subr.mxu0 0.0
    %176 = vmatpush1.msra.mxu0 %v46
    %177 = vmatprep.subr.mxu0 0.0
    %178 = vmatpush1.msra.mxu0 %v43
    %179 = vmatprep.subr.mxu0 0.0
    %180 = vmatpush1.msra.mxu0 %v40
    %181 = vmatprep.subr.mxu0 0.0
    %182 = vmatpush1.msra.mxu0 %v37
    %183 = vmatprep.subr.mxu0 0.0
    %184 = vmatpush1.msra.mxu0 %v34
    %185 = vmatprep.subr.mxu0 0.0
    %186 = vmatpush1.msra.mxu0 %v31
    %187 = vmatprep.subr.mxu0 0.0
    %188 = vmatpush1.msra.mxu0 %v28
    %189 = vmatprep.subr.mxu0 0.0
    %190 = vmatpush1.msra.mxu0 %v25
    %191 = vmatprep.subr.mxu0 0.0
    %192 = vmatpush1.msra.mxu0 %v22
    %193 = vmatprep.subr.mxu0 0.0
    %194 = vmatpush1.msra.mxu0 %v19
    %195 = vmatprep.subr.mxu0 0.0
    %196 = vmatpush1.msra.mxu0 %v16
    %197 = vmatprep.subr.mxu0 0.0
    %198 = vmatpush2.msra.mxu0 0.0
    %199 = vmatprep.subr.mxu0 0.0
    %200 = vmatpush2.msra.mxu0 0.0
    %201 = vmatprep.subr.mxu0 0.0
    %202 = vmatpush2.msra.mxu0 0.0
    %203 = vmatprep.subr.mxu0 0.0
    %204 = vmatpush2.msra.mxu0 0.0
    %205 = vmatprep.subr.mxu0 0.0
    %206 = vmatpush2.msra.mxu0 0.0
    %207 = vmatprep.subr.mxu0 0.0
    %208 = vmatpush2.msra.mxu0 0.0
    %209 = vmatprep.subr.mxu0 0.0
    %210 = vmatpush2.msra.mxu0 0.0
    %211 = vmatprep.subr.mxu0 0.0
    %212 = vmatpush2.msra.mxu0 0.0
    %213 = vmatprep.subr.mxu0 0.0
    %214 = vmatpush2.msra.mxu0 0.0
    %215 = vmatprep.subr.mxu0 0.0
    %216 = vmatpush2.msra.mxu0 0.0
    %217 = vmatprep.subr.mxu0 0.0
    %218 = vmatpush2.msra.mxu0 0.0
    %219 = vmatprep.subr.mxu0 0.0
    %220 = vmatpush2.msra.mxu0 0.0
    %221 = vmatprep.subr.mxu0 0.0
    %222 = vmatpush2.msra.mxu0 0.0
    %223 = vmatprep.subr.mxu0 0.0
    %224 = vmatpush2.msra.mxu0 0.0
    %225 = vmatprep.subr.mxu0 0.0
    %226 = vmatpush2.msra.mxu0 0.0
    %227 = vmatprep.subr.mxu0 0.0
    %228 = vmatpush2.msra.mxu0 0.0
    %229 = vmatprep.mubr.f32.mxu0 0.0
    %230 = vmatmul.mubr.f32.gmra.mxu0 %v85
    %v231 = vpop.f32.mrf.mxu0
    %v232 = vadd.f32 %v75, %v231
    %v233 = vpop.f32.mrf.mxu0
    %234 = vdwg.mxu0
    %v235 = vadd.f32 %v91, %v161
    %v236 = vxor.u32 %v235, 2147483648
    %v237 = vmul.f32 %v236, 1.442695
    %v238 = vpow.pop %v237
    %v239 = vadd.f32 %v238, 1.0
    %v240 = vrcp.pop %v239
    %v241 = vmul.f32 1.0, %v240
    %v242 = vadd.f32 %v92, %v163
    %v243 = vxor.u32 %v242, 2147483648
    %v244 = vmul.f32 %v243, 1.442695
    %v245 = vpow.pop %v244
    %v246 = vadd.f32 %v245, 1.0
    %v247 = vrcp.pop %v246
    %v248 = vmul.f32 1.0, %v247
    %v249 = vmul.f32 %v241, %v232
    %v250 = vadd.f32 %v93, %v249
    %v251 = vtanh.pop %v250
    %v252 = vsub.f32 %v85, %v251
    %v253 = vmul.f32 %v248, %v252
    %v254 = vadd.f32 %v251, %v253
    %s255 = smul.u32 %s86, 8
    %s256 = scalar_lea.vmem %s3, %s255
    %257 = vst [vmem:[%s256] sm:$0xff] %v254
    %s258 = smul.u32 %s87, 3
    %s259 = smul.addr %s258, 8
    %s260 = scalar_lea.vmem %s0, %s259
    %v261 = vld [vmem:[%s260] sm:$0xff]
    %v262 = vld [vmem:[%s260 + $0x8] sm:$0xff]
    %v263 = vld [vmem:[%s260 + $0x10] sm:$0xff]
    %264 = vmatprep.subr.mxu0 %v60
    %265 = vmatpush1.msra.mxu0 %v59
    %266 = vmatprep.subr.mxu0 %v57
    %267 = vmatpush1.msra.mxu0 %v56
    %268 = vmatprep.subr.mxu0 %v54
    %269 = vmatpush1.msra.mxu0 %v53
    %270 = vmatprep.subr.mxu0 %v51
    %271 = vmatpush1.msra.mxu0 %v50
    %272 = vmatprep.subr.mxu0 %v48
    %273 = vmatpush1.msra.mxu0 %v47
    %274 = vmatprep.subr.mxu0 %v45
    %275 = vmatpush1.msra.mxu0 %v44
    %276 = vmatprep.subr.mxu0 %v42
    %277 = vmatpush1.msra.mxu0 %v41
    %278 = vmatprep.subr.mxu0 %v39
    %279 = vmatpush1.msra.mxu0 %v38
    %280 = vmatprep.subr.mxu0 %v36
    %281 = vmatpush1.msra.mxu0 %v35
    %282 = vmatprep.subr.mxu0 %v33
    %283 = vmatpush1.msra.mxu0 %v32
    %284 = vmatprep.subr.mxu0 %v30
    %285 = vmatpush1.msra.mxu0 %v29
    %286 = vmatprep.subr.mxu0 %v27
    %287 = vmatpush1.msra.mxu0 %v26
    %288 = vmatprep.subr.mxu0 %v24
    %289 = vmatpush1.msra.mxu0 %v23
    %290 = vmatprep.subr.mxu0 %v21
    %291 = vmatpush1.msra.mxu0 %v20
    %292 = vmatprep.subr.mxu0 %v18
    %293 = vmatpush1.msra.mxu0 %v17
    %294 = vmatprep.subr.mxu0 %v15
    %295 = vmatpush1.msra.mxu0 %v14
    %296 = vmatprep.subr.mxu0 0.0
    %297 = vmatpush2.msra.mxu0 0.0
    %298 = vmatprep.subr.mxu0 0.0
    %299 = vmatpush2.msra.mxu0 0.0
    %300 = vmatprep.subr.mxu0 0.0
    %301 = vmatpush2.msra.mxu0 0.0
    %302 = vmatprep.subr.mxu0 0.0
    %303 = vmatpush2.msra.mxu0 0.0
    %304 = vmatprep.subr.mxu0 0.0
    %305 = vmatpush2.msra.mxu0 0.0
    %306 = vmatprep.subr.mxu0 0.0
    %307 = vmatpush2.msra.mxu0 0.0
    %308 = vmatprep.subr.mxu0 0.0
    %309 = vmatpush2.msra.mxu0 0.0
    %310 = vmatprep.subr.mxu0 0.0
    %311 = vmatpush2.msra.mxu0 0.0
    %312 = vmatprep.subr.mxu0 0.0
    %313 = vmatpush2.msra.mxu0 0.0
    %314 = vmatprep.subr.mxu0 0.0
    %315 = vmatpush2.msra.mxu0 0.0
    %316 = vmatprep.subr.mxu0 0.0
    %317 = vmatpush2.msra.mxu0 0.0
    %318 = vmatprep.subr.mxu0 0.0
    %319 = vmatpush2.msra.mxu0 0.0
    %320 = vmatprep.subr.mxu0 0.0
    %321 = vmatpush2.msra.mxu0 0.0
    %322 = vmatprep.subr.mxu0 0.0
    %323 = vmatpush2.msra.mxu0 0.0
    %324 = vmatprep.subr.mxu0 0.0
    %325 = vmatpush2.msra.mxu0 0.0
    %326 = vmatprep.subr.mxu0 0.0
    %327 = vmatpush2.msra.mxu0 0.0
    %328 = vmatprep.mubr.f32.mxu0 0.0
    %329 = vmatmul.mubr.f32.gmra.mxu0 %v254
    %v330 = vpop.f32.mrf.mxu0
    %v331 = vadd.f32 %v67, %v330
    %v332 = vpop.f32.mrf.mxu0
    %v333 = vadd.f32 %v71, %v332
    %334 = vdwg.mxu0
    %335 = vmatprep.subr.mxu0 0.0
    %336 = vmatpush1.msra.mxu0 %v61
    %337 = vmatprep.subr.mxu0 0.0
    %338 = vmatpush1.msra.mxu0 %v58
    %339 = vmatprep.subr.mxu0 0.0
    %340 = vmatpush1.msra.mxu0 %v55
    %341 = vmatprep.subr.mxu0 0.0
    %342 = vmatpush1.msra.mxu0 %v52
    %343 = vmatprep.subr.mxu0 0.0
    %344 = vmatpush1.msra.mxu0 %v49
    %345 = vmatprep.subr.mxu0 0.0
    %346 = vmatpush1.msra.mxu0 %v46
    %347 = vmatprep.subr.mxu0 0.0
    %348 = vmatpush1.msra.mxu0 %v43
    %349 = vmatprep.subr.mxu0 0.0
    %350 = vmatpush1.msra.mxu0 %v40
    %351 = vmatprep.subr.mxu0 0.0
    %352 = vmatpush1.msra.mxu0 %v37
    %353 = vmatprep.subr.mxu0 0.0
    %354 = vmatpush1.msra.mxu0 %v34
    %355 = vmatprep.subr.mxu0 0.0
    %356 = vmatpush1.msra.mxu0 %v31
    %357 = vmatprep.subr.mxu0 0.0
    %358 = vmatpush1.msra.mxu0 %v28
    %359 = vmatprep.subr.mxu0 0.0
    %360 = vmatpush1.msra.mxu0 %v25
    %361 = vmatprep.subr.mxu0 0.0
    %362 = vmatpush1.msra.mxu0 %v22
    %363 = vmatprep.subr.mxu0 0.0
    %364 = vmatpush1.msra.mxu0 %v19
    %365 = vmatprep.subr.mxu0 0.0
    %366 = vmatpush1.msra.mxu0 %v16
    %367 = vmatprep.subr.mxu0 0.0
    %368 = vmatpush2.msra.mxu0 0.0
    %369 = vmatprep.subr.mxu0 0.0
    %370 = vmatpush2.msra.mxu0 0.0
    %371 = vmatprep.subr.mxu0 0.0
    %372 = vmatpush2.msra.mxu0 0.0
    %373 = vmatprep.subr.mxu0 0.0
    %374 = vmatpush2.msra.mxu0 0.0
    %375 = vmatprep.subr.mxu0 0.0
    %376 = vmatpush2.msra.mxu0 0.0
    %377 = vmatprep.subr.mxu0 0.0
    %378 = vmatpush2.msra.mxu0 0.0
    %379 = vmatprep.subr.mxu0 0.0
    %380 = vmatpush2.msra.mxu0 0.0
    %381 = vmatprep.subr.mxu0 0.0
    %382 = vmatpush2.msra.mxu0 0.0
    %383 = vmatprep.subr.mxu0 0.0
    %384 = vmatpush2.msra.mxu0 0.0
    %385 = vmatprep.subr.mxu0 0.0
    %386 = vmatpush2.msra.mxu0 0.0
    %387 = vmatprep.subr.mxu0 0.0
    %388 = vmatpush2.msra.mxu0 0.0
    %389 = vmatprep.subr.mxu0 0.0
    %390 = vmatpush2.msra.mxu0 0.0
    %391 = vmatprep.subr.mxu0 0.0
    %392 = vmatpush2.msra.mxu0 0.0
    %393 = vmatprep.subr.mxu0 0.0
    %394 = vmatpush2.msra.mxu0 0.0
    %395 = vmatprep.subr.mxu0 0.0
    %396 = vmatpush2.msra.mxu0 0.0
    %397 = vmatprep.subr.mxu0 0.0
    %398 = vmatpush2.msra.mxu0 0.0
    %399 = vmatprep.mubr.f32.mxu0 0.0
    %400 = vmatmul.mubr.f32.gmra.mxu0 %v254
    %v401 = vpop.f32.mrf.mxu0
    %v402 = vadd.f32 %v75, %v401
    %v403 = vpop.f32.mrf.mxu0
    %404 = vdwg.mxu0
    %v405 = vadd.f32 %v261, %v331
    %v406 = vxor.u32 %v405, 2147483648
    %v407 = vmul.f32 %v406, 1.442695
    %v408 = vpow.pop %v407
    %v409 = vadd.f32 %v408, 1.0
    %v410 = vrcp.pop %v409
    %v411 = vmul.f32 1.0, %v410
    %v412 = vadd.f32 %v262, %v333
    %v413 = vxor.u32 %v412, 2147483648
    %v414 = vmul.f32 %v413, 1.442695
    %v415 = vpow.pop %v414
    %v416 = vadd.f32 %v415, 1.0
    %v417 = vrcp.pop %v416
    %v418 = vmul.f32 1.0, %v417
    %v419 = vmul.f32 %v411, %v402
    %v420 = vadd.f32 %v263, %v419
    %v421 = vtanh.pop %v420
    %v422 = vsub.f32 %v254, %v421
    %v423 = vmul.f32 %v418, %v422
    %v424 = vadd.f32 %v421, %v423
    %s425 = smul.u32 %s87, 8
    %s426 = scalar_lea.vmem %s3, %s425
    %427 = vst [vmem:[%s426] sm:$0xff] %v424
  $region18: #{rnn_generator_forward.5} parent=0 // loop_footer
    %s84 = sadd.s32 1, %s80
  $region19: #{rnn_generator_forward.5} parent=0 // loop_footer_branch
    %79 = sbr.rel target = $region15
  $region20: #{rnn_generator_forward.5} parent=0 // loop_exit
    _
  // Predicated region
  $region21: #{rnn_generator_forward.5} parent=0 // pred_check
    _
  $region22: #{rnn_generator_forward.5} parent=0 // pred_check_branch
    %429 = sbr.rel (0) target = $region24
  $region23: #{rnn_generator_forward.5} parent=0 // pred_region
    _
  $region24: #{rnn_generator_forward.5} parent=0 // pred_fallthru
    _
  // Predicated region
  $region25: #{rnn_generator_forward.5} parent=0 // pred_check
    _
  $region26: #{rnn_generator_forward.5} parent=0 // pred_check_branch
    %431 = sbr.rel (0) target = $region28
  $region27: #{rnn_generator_forward.5} parent=0 // pred_region
    _
  $region28: #{rnn_generator_forward.5} parent=0 // pred_fallthru
    _

// kernel: rnn_generator_forward.6
$region0: #{rnn_generator_forward.6}
  #allocation0 [shape = 'u32[]', space=smem, size = 0x4, offset = 0x4, fixed_abs, tag = 'smem constant byte address 0x4 - core index']
  #allocation1 [shape = 'u32[144,128]{1,0:T(1,128)}', space=vmem, size = 0x12000, scoped, tag = 'internal scratch']
  #allocation2 [shape = 'f32[12,128]{1,0:T(8,128)}', space=vmem, size = 0x2000, scoped, tag = 'scratch operand']
  %s0 = inlined_call_operand.vmem [shape: f32[2,8,128], index: 0, kind: input, shape index: {}]
  %s1 = inlined_call_operand.vmem [shape: bf16[640,128], index: 1, kind: input, shape index: {}]
  %s2 = inlined_call_operand.vmem [shape: f32[1,128], index: 2, kind: input, shape index: {}]
  %s3 = inlined_call_operand.vmem [shape: bf16[2,8,128], index: 3, kind: output, shape index: {}]
  %s4 = sld [smem:[#allocation0]]
  $region45: #{rnn_generator_forward.6} parent=0
    _
  %s6 = ssub.s32 1, %s4
  %s7 = scalar_select 0, %s6, %s4
  loop: start=0, step=1, limit=4
  $region2: #{rnn_generator_forward.6} parent=0 // loop_pre_header
    _
  $region3: #{rnn_generator_forward.6} parent=0 // loop_header
    %s9 = sphi 0, %s13
    %p10 = scmp.ge.s32.totalorder %s9, 4
    %s19 = sphi 0, %s21
    %s22 = sphi 0, %s19
    %s23 = sphi 0, %s22
    %s39 = sphi 0, %s23
    %s43 = sphi 0, %s43
    %s45 = sphi 0, %s43
    %s46 = sphi 0, %s45
    %s60 = sphi 0, %s46
    %s64 = sphi 0, %s64
    %s66 = sphi 0, %s64
    %s67 = sphi 0, %s66
    %s81 = sphi 0, %s67
    %s87 = sphi 0, %s89
    %s90 = sphi 0, %s87
    %s91 = sphi 0, %s90
    %s107 = sphi 0, %s91
  $region4: #{rnn_generator_forward.6} parent=0 // loop_header_branch
    %12 = sbr.rel (%p10) target = $region8
  $region5: #{rnn_generator_forward.6} parent=0 // loop_body
    %s14 = ssub.s32 %s9, 1
    %s15 = ssub.s32 %s9, 2
    %s16 = sadd.s32 %s9, 1
    %s17 = ssub.s32 %s9, %s16
    %p18 = scmp.eq.s32.totalorder %s17, 0
    %s20 = sadd.s32 %s19, 1
    %s21 = scalar_select %p18, %s19, %s20
    %p24 = pneg %p18
    %p25 = scmp.eq.s32.totalorder %s9, 1
    %p26 = por %p24, %p25
    %p27 = scmp.ne.s32.totalorder %s19, %s22
    %p28 = scmp.eq.s32.totalorder %s9, 0
    %p29 = por %p27, %p28
    %p30 = scmp.ne.s32.totalorder %s19, %s22
    %p31 = scmp.eq.s32.totalorder %s14, 1
    %p32 = por %p30, %p31
    %p33 = scmp.ne.s32.totalorder %s22, %s23
    %p34 = scmp.eq.s32.totalorder %s14, 0
    %p35 = por %p33, %p34
    %p36 = scmp.ne.s32.totalorder %s22, %s23
    %p37 = scmp.eq.s32.totalorder %s15, 1
    %p38 = por %p36, %p37
    %p40 = scmp.ne.s32.totalorder %s23, %s39
    %p41 = scmp.eq.s32.totalorder %s15, 0
    %p42 = por %p40, %p41
    %s44 = sadd.s32 %s43, 1
    %p47 = scmp.eq.s32.totalorder %s9, 1
    %p48 = scmp.ne.s32.totalorder %s43, %s45
    %p49 = scmp.eq.s32.totalorder %s9, 0
    %p50 = por %p48, %p49
    %p51 = scmp.ne.s32.totalorder %s43, %s45
    %p52 = scmp.eq.s32.totalorder %s14, 1
    %p53 = por %p51, %p52
    %p54 = scmp.ne.s32.totalorder %s45, %s46
    %p55 = scmp.eq.s32.totalorder %s14, 0
    %p56 = por %p54, %p55
    %p57 = scmp.ne.s32.totalorder %s45, %s46
    %p58 = scmp.eq.s32.totalorder %s15, 1
    %p59 = por %p57, %p58
    %p61 = scmp.ne.s32.totalorder %s46, %s60
    %p62 = scmp.eq.s32.totalorder %s15, 0
    %p63 = por %p61, %p62
    %s65 = sadd.s32 %s64, 1
    %p68 = scmp.eq.s32.totalorder %s9, 1
    %p69 = scmp.ne.s32.totalorder %s64, %s66
    %p70 = scmp.eq.s32.totalorder %s9, 0
    %p71 = por %p69, %p70
    %p72 = scmp.ne.s32.totalorder %s64, %s66
    %p73 = scmp.eq.s32.totalorder %s14, 1
    %p74 = por %p72, %p73
    %p75 = scmp.ne.s32.totalorder %s66, %s67
    %p76 = scmp.eq.s32.totalorder %s14, 0
    %p77 = por %p75, %p76
    %p78 = scmp.ne.s32.totalorder %s66, %s67
    %p79 = scmp.eq.s32.totalorder %s15, 1
    %p80 = por %p78, %p79
    %p82 = scmp.ne.s32.totalorder %s67, %s81
    %p83 = scmp.eq.s32.totalorder %s15, 0
    %p84 = por %p82, %p83
    %s85 = ssub.s32 %s9, %s16
    %p86 = scmp.eq.s32.totalorder %s85, 0
    %s88 = sadd.s32 %s87, 1
    %s89 = scalar_select %p86, %s87, %s88
    %p92 = pneg %p86
    %p93 = scmp.eq.s32.totalorder %s9, 1
    %p94 = por %p92, %p93
    %p95 = scmp.ne.s32.totalorder %s87, %s90
    %p96 = scmp.eq.s32.totalorder %s9, 0
    %p97 = por %p95, %p96
    %p98 = scmp.ne.s32.totalorder %s87, %s90
    %p99 = scmp.eq.s32.totalorder %s14, 1
    %p100 = por %p98, %p99
    %p101 = scmp.ne.s32.totalorder %s90, %s91
    %p102 = scmp.eq.s32.totalorder %s14, 0
    %p103 = por %p101, %p102
    %p104 = scmp.ne.s32.totalorder %s90, %s91
    %p105 = scmp.eq.s32.totalorder %s15, 1
    %p106 = por %p104, %p105
    %p108 = scmp.ne.s32.totalorder %s91, %s107
    %p109 = scmp.eq.s32.totalorder %s15, 0
    %p110 = por %p108, %p109
    %p111 = scmp.le.s32.totalorder 1, %s9
    %p112 = scmp.lt.s32.totalorder %s9, 3
    %p113 = pnand %p111, %p112
    %p114 = pneg %p113
    // Predicated region
    $region9: #{rnn_generator_forward.6} parent=5 // pred_check
      _
    $region10: #{rnn_generator_forward.6} parent=5 // pred_check_branch
      %116 = sbr.rel (%p113) target = $region12
    $region11: #{rnn_generator_forward.6} parent=5 // pred_region
      %s117 = ssub.s32 %s9, 1
      // Predicated region
      $region13: #{rnn_generator_forward.6} parent=11 // pred_check
        %p118 = pneg %p56
      $region14: #{rnn_generator_forward.6} parent=11 // pred_check_branch
        %120 = sbr.rel (%p118) target = $region16
      $region15: #{rnn_generator_forward.6} parent=11 // pred_region
        _
      $region16: #{rnn_generator_forward.6} parent=11 // pred_fallthru
        _
      // Predicated region
      $region17: #{rnn_generator_forward.6} parent=11 // pred_check
        %p121 = pneg %p77
      $region18: #{rnn_generator_forward.6} parent=11 // pred_check_branch
        %123 = sbr.rel (%p121) target = $region20
      $region19: #{rnn_generator_forward.6} parent=11 // pred_region
        _
      $region20: #{rnn_generator_forward.6} parent=11 // pred_fallthru
        _
    $region12: #{rnn_generator_forward.6} parent=5 // pred_fallthru
      _
    %p124 = scmp.lt.s32.totalorder %s9, 2
    // Predicated region
    $region21: #{rnn_generator_forward.6} parent=5 // pred_check
      %p125 = pneg %p124
    $region22: #{rnn_generator_forward.6} parent=5 // pred_check_branch
      %127 = sbr.rel (%p125) target = $region24
    $region23: #{rnn_generator_forward.6} parent=5 // pred_region
      // Predicated region
      $region25: #{rnn_generator_forward.6} parent=23 // pred_check
        %p128 = pneg %p29
      $region26: #{rnn_generator_forward.6} parent=23 // pred_check_branch
        %130 = sbr.rel (%p128) target = $region28
      $region27: #{rnn_generator_forward.6} parent=23 // pred_region
        %p131 = scmp.lt.s32.totalorder %s9, 1
        %s132 = scalar_select %p131, %s9, 1
        %s133 = smul.addr %s132, 8
        %s134 = scalar_lea.vmem %s0, %s133
      $region28: #{rnn_generator_forward.6} parent=23 // pred_fallthru
        _
    $region24: #{rnn_generator_forward.6} parent=5 // pred_fallthru
      _
    %p135 = scmp.le.s32.totalorder 1, %s9
    %p136 = scmp.lt.s32.totalorder %s9, 3
    %p137 = pnand %p135, %p136
    %p138 = pneg %p137
    // Predicated region
    $region29: #{rnn_generator_forward.6} parent=5 // pred_check
      _
    $region30: #{rnn_generator_forward.6} parent=5 // pred_check_branch
      %140 = sbr.rel (%p137) target = $region32
    $region31: #{rnn_generator_forward.6} parent=5 // pred_region
      %s141 = ssub.s32 %s9, 1
      %p142 = scmp.lt.s32.totalorder %s14, 1
      %s143 = scalar_select %p142, %s14, 1
      %s144 = smul.addr %s143, 8
      %s145 = scalar_lea.vmem %s0, %s144
      %p146 = pneg %p35
      %p147 = pneg %p32
      %p148 = pneg %p56
      %p149 = pneg %p53
      %p150 = pneg %p77
      %p151 = pneg %p74
      %p152 = pneg %p103
      %p153 = pneg %p100
      %p154 = scmp.lt.s32.totalorder %s14, 1
      %s155 = scalar_select %p154, %s14, 1
      %s156 = smul.addr %s155, 4
      %s157 = scalar_lea.vmem %s3, %s156
      %p158 = scmp.lt.s32.totalorder %s14, 1
      %s159 = scalar_select %p158, %s14, 1
      %s160 = smul.addr %s159, 8
      %s161 = scalar_lea.vmem %s0, %s160
      %p162 = scmp.lt.s32.totalorder %s14, 1
      %s163 = scalar_select %p162, %s14, 1
      %s164 = smul.addr %s163, 4
      %s165 = scalar_lea.vmem %s3, %s164
      %167 = vst [vmem:[#allocation2] sm:$0x3] 0.0
      %168 = vst [vmem:[#allocation2 + $0xa] sm:$0x3] 0.0
      %v169 = vld [vmem:[%s161] sm:$0xff]
      %170 = vst [vmem:[#allocation2 + $0x2] sm:$0xff] %v169
      %v171 = vld [vmem:[#allocation2] sm:$0xff]
      %v172 = vld [vmem:[#allocation2 + $0x8] sm:$0xf]
      %vm175 = vcmask 1046528
      %v176 = vrot.slane %v171, 1
      %v177 = vrot.slane %v172, 1
      %v178 = vsel %vm175, %v176, %v177
      %vm180 = vcmask 1045504
      %v181 = vrot.slane %v171, 2
      %v182 = vrot.slane %v172, 2
      %v183 = vsel %vm180, %v181, %v182
      %vm185 = vcmask 1044480
      %v186 = vrot.slane %v171, 3
      %v187 = vrot.slane %v172, 3
      %v188 = vsel %vm185, %v186, %v187
      %vm190 = vcmask 1043456
      %v191 = vrot.slane %v171, 4
      %v192 = vrot.slane %v172, 4
      %v193 = vsel %vm190, %v191, %v192
      %v195 = vpack.c.bf16 %v171, %v171
      %v196 = vpack.c.bf16 %v178, %v178
      %v197 = vpack.c.bf16 %v183, %v183
      %v198 = vpack.c.bf16 %v188, %v188
      %v199 = vpack.c.bf16 %v193, %v193
      %v200 = vld [vmem:[%s1] sm:$0xf]
      %v201 = vld [vmem:[%s1 + $0x4] sm:$0xf]
      %v202 = vld [vmem:[%s1 + $0x8] sm:$0xf]
      %v203 = vld [vmem:[%s1 + $0xc] sm:$0xf]
      %v204 = vld [vmem:[%s1 + $0x10] sm:$0xf]
      %v205 = vld [vmem:[%s1 + $0x14] sm:$0xf]
      %v206 = vld [vmem:[%s1 + $0x18] sm:$0xf]
      %v207 = vld [vmem:[%s1 + $0x1c] sm:$0xf]
      %v208 = vld [vmem:[%s1 + $0x20] sm:$0xf]
      %v209 = vld [vmem:[%s1 + $0x24] sm:$0xf]
      %v210 = vld [vmem:[%s1 + $0x28] sm:$0xf]
      %v211 = vld [vmem:[%s1 + $0x2c] sm:$0xf]
      %v212 = vld [vmem:[%s1 + $0x30] sm:$0xf]
      %v213 = vld [vmem:[%s1 + $0x34] sm:$0xf]
      %v214 = vld [vmem:[%s1 + $0x38] sm:$0xf]
      %v215 = vld [vmem:[%s1 + $0x3c] sm:$0xf]
      %v216 = vld [vmem:[%s1 + $0x40] sm:$0xf]
      %v217 = vld [vmem:[%s1 + $0x44] sm:$0xf]
      %v218 = vld [vmem:[%s1 + $0x48] sm:$0xf]
      %v219 = vld [vmem:[%s1 + $0x4c] sm:$0xf]
      %v220 = vld [vmem:[%s1 + $0x50] sm:$0xf]
      %v221 = vld [vmem:[%s1 + $0x54] sm:$0xf]
      %v222 = vld [vmem:[%s1 + $0x58] sm:$0xf]
      %v223 = vld [vmem:[%s1 + $0x5c] sm:$0xf]
      %v224 = vld [vmem:[%s1 + $0x60] sm:$0xf]
      %v225 = vld [vmem:[%s1 + $0x64] sm:$0xf]
      %v226 = vld [vmem:[%s1 + $0x68] sm:$0xf]
      %v227 = vld [vmem:[%s1 + $0x6c] sm:$0xf]
      %v228 = vld [vmem:[%s1 + $0x70] sm:$0xf]
      %v229 = vld [vmem:[%s1 + $0x74] sm:$0xf]
      %v230 = vld [vmem:[%s1 + $0x78] sm:$0xf]
      %v231 = vld [vmem:[%s1 + $0x7c] sm:$0xf]
      %v232 = vld [vmem:[%s1 + $0x80] sm:$0xf]
      %v233 = vld [vmem:[%s1 + $0x84] sm:$0xf]
      %v234 = vld [vmem:[%s1 + $0x88] sm:$0xf]
      %v235 = vld [vmem:[%s1 + $0x8c] sm:$0xf]
      %v236 = vld [vmem:[%s1 + $0x90] sm:$0xf]
      %v237 = vld [vmem:[%s1 + $0x94] sm:$0xf]
      %v238 = vld [vmem:[%s1 + $0x98] sm:$0xf]
      %v239 = vld [vmem:[%s1 + $0x9c] sm:$0xf]
      %v240 = vld [vmem:[%s1 + $0xa0] sm:$0xf]
      %v241 = vld [vmem:[%s1 + $0xa4] sm:$0xf]
      %v242 = vld [vmem:[%s1 + $0xa8] sm:$0xf]
      %v243 = vld [vmem:[%s1 + $0xac] sm:$0xf]
      %v244 = vld [vmem:[%s1 + $0xb0] sm:$0xf]
      %v245 = vld [vmem:[%s1 + $0xb4] sm:$0xf]
      %v246 = vld [vmem:[%s1 + $0xb8] sm:$0xf]
      %v247 = vld [vmem:[%s1 + $0xbc] sm:$0xf]
      %v248 = vld [vmem:[%s1 + $0xc0] sm:$0xf]
      %v249 = vld [vmem:[%s1 + $0xc4] sm:$0xf]
      %v250 = vld [vmem:[%s1 + $0xc8] sm:$0xf]
      %v251 = vld [vmem:[%s1 + $0xcc] sm:$0xf]
      %v252 = vld [vmem:[%s1 + $0xd0] sm:$0xf]
      %v253 = vld [vmem:[%s1 + $0xd4] sm:$0xf]
      %v254 = vld [vmem:[%s1 + $0xd8] sm:$0xf]
      %v255 = vld [vmem:[%s1 + $0xdc] sm:$0xf]
      %v256 = vld [vmem:[%s1 + $0xe0] sm:$0xf]
      %v257 = vld [vmem:[%s1 + $0xe4] sm:$0xf]
      %v258 = vld [vmem:[%s1 + $0xe8] sm:$0xf]
      %v259 = vld [vmem:[%s1 + $0xec] sm:$0xf]
      %v260 = vld [vmem:[%s1 + $0xf0] sm:$0xf]
      %v261 = vld [vmem:[%s1 + $0xf4] sm:$0xf]
      %v262 = vld [vmem:[%s1 + $0xf8] sm:$0xf]
      %v263 = vld [vmem:[%s1 + $0xfc] sm:$0xf]
      %v264 = vld [vmem:[%s1 + $0x100] sm:$0xf]
      %v265 = vld [vmem:[%s1 + $0x104] sm:$0xf]
      %v266 = vld [vmem:[%s1 + $0x108] sm:$0xf]
      %v267 = vld [vmem:[%s1 + $0x10c] sm:$0xf]
      %v268 = vld [vmem:[%s1 + $0x110] sm:$0xf]
      %v269 = vld [vmem:[%s1 + $0x114] sm:$0xf]
      %v270 = vld [vmem:[%s1 + $0x118] sm:$0xf]
      %v271 = vld [vmem:[%s1 + $0x11c] sm:$0xf]
      %v272 = vld [vmem:[%s1 + $0x120] sm:$0xf]
      %v273 = vld [vmem:[%s1 + $0x124] sm:$0xf]
      %v274 = vld [vmem:[%s1 + $0x128] sm:$0xf]
      %v275 = vld [vmem:[%s1 + $0x12c] sm:$0xf]
      %v276 = vld [vmem:[%s1 + $0x130] sm:$0xf]
      %v277 = vld [vmem:[%s1 + $0x134] sm:$0xf]
      %v278 = vld [vmem:[%s1 + $0x138] sm:$0xf]
      %v279 = vld [vmem:[%s1 + $0x13c] sm:$0xf]
      %v280 = vld [vmem:[%s2] sm:$0x1]
      %v282 = vlaneseq
      %v283 = vshrl.u32 %v282, 7
      %v284 = vsub.s32 0, %v283
      %v285 = vrot.slane %v280, %v284
      %v367 = vunpack.c.l.b16 %v200
      %v368 = vunpack.c.l.b16 %v201
      %v369 = vunpack.c.l.b16 %v202
      %v370 = vunpack.c.l.b16 %v203
      %v371 = vunpack.c.l.b16 %v204
      %v372 = vunpack.c.l.b16 %v205
      %v373 = vunpack.c.l.b16 %v206
      %v374 = vunpack.c.l.b16 %v207
      %v375 = vunpack.c.l.b16 %v208
      %v376 = vunpack.c.l.b16 %v209
      %v377 = vunpack.c.l.b16 %v210
      %v378 = vunpack.c.l.b16 %v211
      %v379 = vunpack.c.l.b16 %v212
      %v380 = vunpack.c.l.b16 %v213
      %v381 = vunpack.c.l.b16 %v214
      %v382 = vunpack.c.l.b16 %v215
      %v383 = vunpack.c.l.b16 %v216
      %v384 = vunpack.c.l.b16 %v217
      %v385 = vunpack.c.l.b16 %v218
      %v386 = vunpack.c.l.b16 %v219
      %v387 = vunpack.c.l.b16 %v220
      %v388 = vunpack.c.l.b16 %v221
      %v389 = vunpack.c.l.b16 %v222
      %v390 = vunpack.c.l.b16 %v223
      %v391 = vunpack.c.l.b16 %v224
      %v392 = vunpack.c.l.b16 %v225
      %v393 = vunpack.c.l.b16 %v226
      %v394 = vunpack.c.l.b16 %v227
      %v395 = vunpack.c.l.b16 %v228
      %v396 = vunpack.c.l.b16 %v229
      %v397 = vunpack.c.l.b16 %v230
      %v398 = vunpack.c.l.b16 %v231
      %v399 = vunpack.c.l.b16 %v232
      %v400 = vunpack.c.l.b16 %v233
      %v401 = vunpack.c.l.b16 %v234
      %v402 = vunpack.c.l.b16 %v235
      %v403 = vunpack.c.l.b16 %v236
      %v404 = vunpack.c.l.b16 %v237
      %v405 = vunpack.c.l.b16 %v238
      %v406 = vunpack.c.l.b16 %v239
      %v407 = vunpack.c.l.b16 %v240
      %v408 = vunpack.c.l.b16 %v241
      %v409 = vunpack.c.l.b16 %v242
      %v410 = vunpack.c.l.b16 %v243
      %v411 = vunpack.c.l.b16 %v244
      %v412 = vunpack.c.l.b16 %v245
      %v413 = vunpack.c.l.b16 %v246
      %v414 = vunpack.c.l.b16 %v247
      %v415 = vunpack.c.l.b16 %v248
      %v416 = vunpack.c.l.b16 %v249
      %v417 = vunpack.c.l.b16 %v250
      %v418 = vunpack.c.l.b16 %v251
      %v419 = vunpack.c.l.b16 %v252
      %v420 = vunpack.c.l.b16 %v253
      %v421 = vunpack.c.l.b16 %v254
      %v422 = vunpack.c.l.b16 %v255
      %v423 = vunpack.c.l.b16 %v256
      %v424 = vunpack.c.l.b16 %v257
      %v425 = vunpack.c.l.b16 %v258
      %v426 = vunpack.c.l.b16 %v259
      %v427 = vunpack.c.l.b16 %v260
      %v428 = vunpack.c.l.b16 %v261
      %v429 = vunpack.c.l.b16 %v262
      %v430 = vunpack.c.l.b16 %v263
      %v431 = vunpack.c.l.b16 %v264
      %v432 = vunpack.c.l.b16 %v265
      %v433 = vunpack.c.l.b16 %v266
      %v434 = vunpack.c.l.b16 %v267
      %v435 = vunpack.c.l.b16 %v268
      %v436 = vunpack.c.l.b16 %v269
      %v437 = vunpack.c.l.b16 %v270
      %v438 = vunpack.c.l.b16 %v271
      %v439 = vunpack.c.l.b16 %v272
      %v440 = vunpack.c.l.b16 %v273
      %v441 = vunpack.c.l.b16 %v274
      %v442 = vunpack.c.l.b16 %v275
      %v443 = vunpack.c.l.b16 %v276
      %v444 = vunpack.c.l.b16 %v277
      %v445 = vunpack.c.l.b16 %v278
      %v446 = vunpack.c.l.b16 %v279
      %v447 = vpack.c.b16 %v368, %v367
      %v448 = vpack.c.b16 %v370, %v369
      %v449 = vpack.c.b16 %v372, %v371
      %v450 = vpack.c.b16 %v374, %v373
      %v451 = vpack.c.b16 %v376, %v375
      %v452 = vpack.c.b16 %v378, %v377
      %v453 = vpack.c.b16 %v380, %v379
      %v454 = vpack.c.b16 %v382, %v381
      %v455 = vpack.c.b16 %v384, %v383
      %v456 = vpack.c.b16 %v386, %v385
      %v457 = vpack.c.b16 %v388, %v387
      %v458 = vpack.c.b16 %v390, %v389
      %v459 = vpack.c.b16 %v392, %v391
      %v460 = vpack.c.b16 %v394, %v393
      %v461 = vpack.c.b16 %v396, %v395
      %v462 = vpack.c.b16 %v398, %v397
      %v463 = vpack.c.b16 %v400, %v399
      %v464 = vpack.c.b16 %v402, %v401
      %v465 = vpack.c.b16 %v404, %v403
      %v466 = vpack.c.b16 %v406, %v405
      %v467 = vpack.c.b16 %v408, %v407
      %v468 = vpack.c.b16 %v410, %v409
      %v469 = vpack.c.b16 %v412, %v411
      %v470 = vpack.c.b16 %v414, %v413
      %v471 = vpack.c.b16 %v416, %v415
      %v472 = vpack.c.b16 %v418, %v417
      %v473 = vpack.c.b16 %v420, %v419
      %v474 = vpack.c.b16 %v422, %v421
      %v475 = vpack.c.b16 %v424, %v423
      %v476 = vpack.c.b16 %v426, %v425
      %v477 = vpack.c.b16 %v428, %v427
      %v478 = vpack.c.b16 %v430, %v429
      %v479 = vpack.c.b16 %v432, %v431
      %v480 = vpack.c.b16 %v434, %v433
      %v481 = vpack.c.b16 %v436, %v435
      %v482 = vpack.c.b16 %v438, %v437
      %v483 = vpack.c.b16 %v440, %v439
      %v484 = vpack.c.b16 %v442, %v441
      %v485 = vpack.c.b16 %v444, %v443
      %v486 = vpack.c.b16 %v446, %v445
      %527 = vmatprep.subr.bf16.mxu0 0
      %528 = vmatpush1.bf16.msra.mxu0 %v454
      %529 = vmatprep.subr.bf16.mxu0 0
      %530 = vmatpush1.bf16.msra.mxu0 %v453
      %531 = vmatprep.subr.bf16.mxu0 0
      %532 = vmatpush1.bf16.msra.mxu0 %v452
      %533 = vmatprep.subr.bf16.mxu0 0
      %534 = vmatpush1.bf16.msra.mxu0 %v451
      %535 = vmatprep.subr.bf16.mxu0 0
      %536 = vmatpush1.bf16.msra.mxu0 %v450
      %537 = vmatprep.subr.bf16.mxu0 0
      %538 = vmatpush1.bf16.msra.mxu0 %v449
      %539 = vmatprep.subr.bf16.mxu0 0
      %540 = vmatpush1.bf16.msra.mxu0 %v448
      %541 = vmatprep.subr.bf16.mxu0 0
      %542 = vmatpush1.bf16.msra.mxu0 %v447
      %543 = vmatprep.subr.bf16.mxu0 0
      %544 = vmatpush2.bf16.msra.mxu0 %v462
      %545 = vmatprep.subr.bf16.mxu0 0
      %546 = vmatpush2.bf16.msra.mxu0 %v461
      %547 = vmatprep.subr.bf16.mxu0 0
      %548 = vmatpush2.bf16.msra.mxu0 %v460
      %549 = vmatprep.subr.bf16.mxu0 0
      %550 = vmatpush2.bf16.msra.mxu0 %v459
      %551 = vmatprep.subr.bf16.mxu0 0
      %552 = vmatpush2.bf16.msra.mxu0 %v458
      %553 = vmatprep.subr.bf16.mxu0 0
      %554 = vmatpush2.bf16.msra.mxu0 %v457
      %555 = vmatprep.subr.bf16.mxu0 0
      %556 = vmatpush2.bf16.msra.mxu0 %v456
      %557 = vmatprep.subr.bf16.mxu0 0
      %558 = vmatpush2.bf16.msra.mxu0 %v455
      %559 = vmatprep.mubr.bf16.mxu0 %v196
      %560 = vmatmul.mubr.bf16.gmra.mxu0 %v195
      %v561 = vpop.f32.mrf.mxu0
      %v562 = vadd.f32 %v285, %v561
      %v563 = vpop.f32.mrf.mxu0
      %v564 = vpop.f32.mrf.mxu0
      %v565 = vpop.f32.mrf.mxu0
      %566 = vdwg.mxu0
      %567 = vmatprep.subr.bf16.mxu0 0
      %568 = vmatpush1.bf16.msra.mxu0 %v470
      %569 = vmatprep.subr.bf16.mxu0 0
      %570 = vmatpush1.bf16.msra.mxu0 %v469
      %571 = vmatprep.subr.bf16.mxu0 0
      %572 = vmatpush1.bf16.msra.mxu0 %v468
      %573 = vmatprep.subr.bf16.mxu0 0
      %574 = vmatpush1.bf16.msra.mxu0 %v467
      %575 = vmatprep.subr.bf16.mxu0 0
      %576 = vmatpush1.bf16.msra.mxu0 %v466
      %577 = vmatprep.subr.bf16.mxu0 0
      %578 = vmatpush1.bf16.msra.mxu0 %v465
      %579 = vmatprep.subr.bf16.mxu0 0
      %580 = vmatpush1.bf16.msra.mxu0 %v464
      %581 = vmatprep.subr.bf16.mxu0 0
      %582 = vmatpush1.bf16.msra.mxu0 %v463
      %583 = vmatprep.subr.bf16.mxu0 0
      %584 = vmatpush2.bf16.msra.mxu0 %v478
      %585 = vmatprep.subr.bf16.mxu0 0
      %586 = vmatpush2.bf16.msra.mxu0 %v477
      %587 = vmatprep.subr.bf16.mxu0 0
      %588 = vmatpush2.bf16.msra.mxu0 %v476
      %589 = vmatprep.subr.bf16.mxu0 0
      %590 = vmatpush2.bf16.msra.mxu0 %v475
      %591 = vmatprep.subr.bf16.mxu0 0
      %592 = vmatpush2.bf16.msra.mxu0 %v474
      %593 = vmatprep.subr.bf16.mxu0 0
      %594 = vmatpush2.bf16.msra.mxu0 %v473
      %595 = vmatprep.subr.bf16.mxu0 0
      %596 = vmatpush2.bf16.msra.mxu0 %v472
      %597 = vmatprep.subr.bf16.mxu0 0
      %598 = vmatpush2.bf16.msra.mxu0 %v471
      %599 = vmatprep.mubr.bf16.mxu0 %v198
      %600 = vmatmul.mubr.bf16.gmra.mxu0 %v197
      %v601 = vpop.f32.mrf.mxu0
      %v602 = vadd.f32 %v562, %v601
      %v603 = vpop.f32.mrf.mxu0
      %v604 = vpop.f32.mrf.mxu0
      %v605 = vpop.f32.mrf.mxu0
      %606 = vdwg.mxu0
      %607 = vmatprep.subr.bf16.mxu0 0
      %608 = vmatpush1.bf16.msra.mxu0 %v486
      %609 = vmatprep.subr.bf16.mxu0 0
      %610 = vmatpush1.bf16.msra.mxu0 %v485
      %611 = vmatprep.subr.bf16.mxu0 0
      %612 = vmatpush1.bf16.msra.mxu0 %v484
      %613 = vmatprep.subr.bf16.mxu0 0
      %614 = vmatpush1.bf16.msra.mxu0 %v483
      %615 = vmatprep.subr.bf16.mxu0 0
      %616 = vmatpush1.bf16.msra.mxu0 %v482
      %617 = vmatprep.subr.bf16.mxu0 0
      %618 = vmatpush1.bf16.msra.mxu0 %v481
      %619 = vmatprep.subr.bf16.mxu0 0
      %620 = vmatpush1.bf16.msra.mxu0 %v480
      %621 = vmatprep.subr.bf16.mxu0 0
      %622 = vmatpush1.bf16.msra.mxu0 %v479
      %623 = vmatprep.subr.bf16.mxu0 0
      %624 = vmatpush2.bf16.msra.mxu0 0
      %625 = vmatprep.subr.bf16.mxu0 0
      %626 = vmatpush2.bf16.msra.mxu0 0
      %627 = vmatprep.subr.bf16.mxu0 0
      %628 = vmatpush2.bf16.msra.mxu0 0
      %629 = vmatprep.subr.bf16.mxu0 0
      %630 = vmatpush2.bf16.msra.mxu0 0
      %631 = vmatprep.subr.bf16.mxu0 0
      %632 = vmatpush2.bf16.msra.mxu0 0
      %633 = vmatprep.subr.bf16.mxu0 0
      %634 = vmatpush2.bf16.msra.mxu0 0
      %635 = vmatprep.subr.bf16.mxu0 0
      %636 = vmatpush2.bf16.msra.mxu0 0
      %637 = vmatprep.subr.bf16.mxu0 0
      %638 = vmatpush2.bf16.msra.mxu0 0
      %639 = vmatprep.mubr.bf16.mxu0 0
      %640 = vmatmul.mubr.bf16.gmra.mxu0 %v199
      %v641 = vpop.f32.mrf.mxu0
      %v642 = vadd.f32 %v602, %v641
      %v643 = vpop.f32.mrf.mxu0
      %v644 = vpop.f32.mrf.mxu0
      %v645 = vpop.f32.mrf.mxu0
      %646 = vdwg.mxu0
      %v647 = vmax.f32 %v642, 0.0
      %v648 = vpack.c.bf16 %v647, %v647
      %649 = vst [vmem:[%s165] sm:$0xf] %v648
      %p650 = scmp.lt.s32.totalorder %s14, 1
      %s651 = scalar_select %p650, %s14, 1
      %s652 = smul.addr %s651, 4
      %s653 = scalar_lea.vmem %s3, %s652
      // Predicated region
      $region33: #{rnn_generator_forward.6} parent=31 // pred_check
        %p654 = pneg %p100
      $region34: #{rnn_generator_forward.6} parent=31 // pred_check_branch
        %656 = sbr.rel (%p654) target = $region36
      $region35: #{rnn_generator_forward.6} parent=31 // pred_region
        _
      $region36: #{rnn_generator_forward.6} parent=31 // pred_fallthru
        _
    $region32: #{rnn_generator_forward.6} parent=5 // pred_fallthru
      _
    %p657 = scmp.le.s32.totalorder 2, %s9
    // Predicated region
    $region37: #{rnn_generator_forward.6} parent=5 // pred_check
      %p658 = pneg %p657
    $region38: #{rnn_generator_forward.6} parent=5 // pred_check_branch
      %660 = sbr.rel (%p658) target = $region40
    $region39: #{rnn_generator_forward.6} parent=5 // pred_region
      %s661 = ssub.s32 %s9, 2
      // Predicated region
      $region41: #{rnn_generator_forward.6} parent=39 // pred_check
        %p662 = pneg %p106
      $region42: #{rnn_generator_forward.6} parent=39 // pred_check_branch
        %664 = sbr.rel (%p662) target = $region44
      $region43: #{rnn_generator_forward.6} parent=39 // pred_region
        %p665 = scmp.lt.s32.totalorder %s15, 1
        %s666 = scalar_select %p665, %s15, 1
        %s667 = smul.addr %s666, 4
        %s668 = scalar_lea.vmem %s3, %s667
      $region44: #{rnn_generator_forward.6} parent=39 // pred_fallthru
        _
    $region40: #{rnn_generator_forward.6} parent=5 // pred_fallthru
      _
  $region6: #{rnn_generator_forward.6} parent=0 // loop_footer
    %s13 = sadd.s32 1, %s9
  $region7: #{rnn_generator_forward.6} parent=0 // loop_footer_branch
    %8 = sbr.rel target = $region3
  $region8: #{rnn_generator_forward.6} parent=0 // loop_exit
    _

// kernel: rnn_generator_forward.8
$region0: #{rnn_generator_forward.8}
  #allocation0 [shape = 'u32[]', space=smem, size = 0x4, offset = 0x4, fixed_abs, tag = 'smem constant byte address 0x4 - core index']
  #allocation1 [shape = 'u32[144,128]{1,0:T(1,128)}', space=vmem, size = 0x12000, scoped, tag = 'internal scratch']
  #allocation2 [shape = 'f32[18,128]{1,0:T(8,128)}', space=vmem, size = 0x3000, scoped, tag = 'scratch operand']
  %s0 = inlined_call_operand.vmem [shape: bf16[2,16,128], index: 0, kind: input, shape index: {}]
  %s1 = inlined_call_operand.vmem [shape: bf16[384,256], index: 1, kind: input, shape index: {}]
  %s2 = inlined_call_operand.vmem [shape: f32[1,256], index: 2, kind: input, shape index: {}]
  %s3 = inlined_call_operand.vmem [shape: bf16[2,16,256], index: 3, kind: output, shape index: {}]
  %s4 = sld [smem:[#allocation0]]
  $region45: #{rnn_generator_forward.8} parent=0
    _
  %s6 = ssub.s32 1, %s4
  %s7 = scalar_select 0, %s6, %s4
  loop: start=0, step=1, limit=4
  $region2: #{rnn_generator_forward.8} parent=0 // loop_pre_header
    _
  $region3: #{rnn_generator_forward.8} parent=0 // loop_header
    %s9 = sphi 0, %s13
    %p10 = scmp.ge.s32.totalorder %s9, 4
    %s19 = sphi 0, %s21
    %s22 = sphi 0, %s19
    %s23 = sphi 0, %s22
    %s39 = sphi 0, %s23
    %s43 = sphi 0, %s43
    %s45 = sphi 0, %s43
    %s46 = sphi 0, %s45
    %s60 = sphi 0, %s46
    %s64 = sphi 0, %s64
    %s66 = sphi 0, %s64
    %s67 = sphi 0, %s66
    %s81 = sphi 0, %s67
    %s87 = sphi 0, %s89
    %s90 = sphi 0, %s87
    %s91 = sphi 0, %s90
    %s107 = sphi 0, %s91
  $region4: #{rnn_generator_forward.8} parent=0 // loop_header_branch
    %12 = sbr.rel (%p10) target = $region8
  $region5: #{rnn_generator_forward.8} parent=0 // loop_body
    %s14 = ssub.s32 %s9, 1
    %s15 = ssub.s32 %s9, 2
    %s16 = sadd.s32 %s9, 1
    %s17 = ssub.s32 %s9, %s16
    %p18 = scmp.eq.s32.totalorder %s17, 0
    %s20 = sadd.s32 %s19, 1
    %s21 = scalar_select %p18, %s19, %s20
    %p24 = pneg %p18
    %p25 = scmp.eq.s32.totalorder %s9, 1
    %p26 = por %p24, %p25
    %p27 = scmp.ne.s32.totalorder %s19, %s22
    %p28 = scmp.eq.s32.totalorder %s9, 0
    %p29 = por %p27, %p28
    %p30 = scmp.ne.s32.totalorder %s19, %s22
    %p31 = scmp.eq.s32.totalorder %s14, 1
    %p32 = por %p30, %p31
    %p33 = scmp.ne.s32.totalorder %s22, %s23
    %p34 = scmp.eq.s32.totalorder %s14, 0
    %p35 = por %p33, %p34
    %p36 = scmp.ne.s32.totalorder %s22, %s23
    %p37 = scmp.eq.s32.totalorder %s15, 1
    %p38 = por %p36, %p37
    %p40 = scmp.ne.s32.totalorder %s23, %s39
    %p41 = scmp.eq.s32.totalorder %s15, 0
    %p42 = por %p40, %p41
    %s44 = sadd.s32 %s43, 1
    %p47 = scmp.eq.s32.totalorder %s9, 1
    %p48 = scmp.ne.s32.totalorder %s43, %s45
    %p49 = scmp.eq.s32.totalorder %s9, 0
    %p50 = por %p48, %p49
    %p51 = scmp.ne.s32.totalorder %s43, %s45
    %p52 = scmp.eq.s32.totalorder %s14, 1
    %p53 = por %p51, %p52
    %p54 = scmp.ne.s32.totalorder %s45, %s46
    %p55 = scmp.eq.s32.totalorder %s14, 0
    %p56 = por %p54, %p55
    %p57 = scmp.ne.s32.totalorder %s45, %s46
    %p58 = scmp.eq.s32.totalorder %s15, 1
    %p59 = por %p57, %p58
    %p61 = scmp.ne.s32.totalorder %s46, %s60
    %p62 = scmp.eq.s32.totalorder %s15, 0
    %p63 = por %p61, %p62
    %s65 = sadd.s32 %s64, 1
    %p68 = scmp.eq.s32.totalorder %s9, 1
    %p69 = scmp.ne.s32.totalorder %s64, %s66
    %p70 = scmp.eq.s32.totalorder %s9, 0
    %p71 = por %p69, %p70
    %p72 = scmp.ne.s32.totalorder %s64, %s66
    %p73 = scmp.eq.s32.totalorder %s14, 1
    %p74 = por %p72, %p73
    %p75 = scmp.ne.s32.totalorder %s66, %s67
    %p76 = scmp.eq.s32.totalorder %s14, 0
    %p77 = por %p75, %p76
    %p78 = scmp.ne.s32.totalorder %s66, %s67
    %p79 = scmp.eq.s32.totalorder %s15, 1
    %p80 = por %p78, %p79
    %p82 = scmp.ne.s32.totalorder %s67, %s81
    %p83 = scmp.eq.s32.totalorder %s15, 0
    %p84 = por %p82, %p83
    %s85 = ssub.s32 %s9, %s16
    %p86 = scmp.eq.s32.totalorder %s85, 0
    %s88 = sadd.s32 %s87, 1
    %s89 = scalar_select %p86, %s87, %s88
    %p92 = pneg %p86
    %p93 = scmp.eq.s32.totalorder %s9, 1
    %p94 = por %p92, %p93
    %p95 = scmp.ne.s32.totalorder %s87, %s90
    %p96 = scmp.eq.s32.totalorder %s9, 0
    %p97 = por %p95, %p96
    %p98 = scmp.ne.s32.totalorder %s87, %s90
    %p99 = scmp.eq.s32.totalorder %s14, 1
    %p100 = por %p98, %p99
    %p101 = scmp.ne.s32.totalorder %s90, %s91
    %p102 = scmp.eq.s32.totalorder %s14, 0
    %p103 = por %p101, %p102
    %p104 = scmp.ne.s32.totalorder %s90, %s91
    %p105 = scmp.eq.s32.totalorder %s15, 1
    %p106 = por %p104, %p105
    %p108 = scmp.ne.s32.totalorder %s91, %s107
    %p109 = scmp.eq.s32.totalorder %s15, 0
    %p110 = por %p108, %p109
    %p111 = scmp.le.s32.totalorder 1, %s9
    %p112 = scmp.lt.s32.totalorder %s9, 3
    %p113 = pnand %p111, %p112
    %p114 = pneg %p113
    // Predicated region
    $region9: #{rnn_generator_forward.8} parent=5 // pred_check
      _
    $region10: #{rnn_generator_forward.8} parent=5 // pred_check_branch
      %116 = sbr.rel (%p113) target = $region12
    $region11: #{rnn_generator_forward.8} parent=5 // pred_region
      %s117 = ssub.s32 %s9, 1
      // Predicated region
      $region13: #{rnn_generator_forward.8} parent=11 // pred_check
        %p118 = pneg %p56
      $region14: #{rnn_generator_forward.8} parent=11 // pred_check_branch
        %120 = sbr.rel (%p118) target = $region16
      $region15: #{rnn_generator_forward.8} parent=11 // pred_region
        _
      $region16: #{rnn_generator_forward.8} parent=11 // pred_fallthru
        _
      // Predicated region
      $region17: #{rnn_generator_forward.8} parent=11 // pred_check
        %p121 = pneg %p77
      $region18: #{rnn_generator_forward.8} parent=11 // pred_check_branch
        %123 = sbr.rel (%p121) target = $region20
      $region19: #{rnn_generator_forward.8} parent=11 // pred_region
        _
      $region20: #{rnn_generator_forward.8} parent=11 // pred_fallthru
        _
    $region12: #{rnn_generator_forward.8} parent=5 // pred_fallthru
      _
    %p124 = scmp.lt.s32.totalorder %s9, 2
    // Predicated region
    $region21: #{rnn_generator_forward.8} parent=5 // pred_check
      %p125 = pneg %p124
    $region22: #{rnn_generator_forward.8} parent=5 // pred_check_branch
      %127 = sbr.rel (%p125) target = $region24
    $region23: #{rnn_generator_forward.8} parent=5 // pred_region
      // Predicated region
      $region25: #{rnn_generator_forward.8} parent=23 // pred_check
        %p128 = pneg %p29
      $region26: #{rnn_generator_forward.8} parent=23 // pred_check_branch
        %130 = sbr.rel (%p128) target = $region28
      $region27: #{rnn_generator_forward.8} parent=23 // pred_region
        %p131 = scmp.lt.s32.totalorder %s9, 1
        %s132 = scalar_select %p131, %s9, 1
        %s133 = smul.addr %s132, 2
        %s134 = smul.addr %s133, 4
        %s135 = scalar_lea.vmem %s0, %s134
      $region28: #{rnn_generator_forward.8} parent=23 // pred_fallthru
        _
    $region24: #{rnn_generator_forward.8} parent=5 // pred_fallthru
      _
    %p136 = scmp.le.s32.totalorder 1, %s9
    %p137 = scmp.lt.s32.totalorder %s9, 3
    %p138 = pnand %p136, %p137
    %p139 = pneg %p138
    // Predicated region
    $region29: #{rnn_generator_forward.8} parent=5 // pred_check
      _
    $region30: #{rnn_generator_forward.8} parent=5 // pred_check_branch
      %141 = sbr.rel (%p138) target = $region32
    $region31: #{rnn_generator_forward.8} parent=5 // pred_region
      %s142 = ssub.s32 %s9, 1
      %p143 = scmp.lt.s32.totalorder %s14, 1
      %s144 = scalar_select %p143, %s14, 1
      %s145 = smul.addr %s144, 2
      %s146 = smul.addr %s145, 4
      %s147 = scalar_lea.vmem %s0, %s146
      %p148 = pneg %p35
      %p149 = pneg %p32
      %p150 = pneg %p56
      %p151 = pneg %p53
      %p152 = pneg %p77
      %p153 = pneg %p74
      %p154 = pneg %p103
      %p155 = pneg %p100
      %p156 = scmp.lt.s32.totalorder %s14, 1
      %s157 = scalar_select %p156, %s14, 1
      %s158 = smul.addr %s157, 4
      %s159 = smul.addr %s158, 4
      %s160 = scalar_lea.vmem %s3, %s159
      %p161 = scmp.lt.s32.totalorder %s14, 1
      %s162 = scalar_select %p161, %s14, 1
      %s163 = smul.addr %s162, 2
      %s164 = smul.addr %s163, 4
      %s165 = scalar_lea.vmem %s0, %s164
      %p166 = scmp.lt.s32.totalorder %s14, 1
      %s167 = scalar_select %p166, %s14, 1
      %s168 = smul.addr %s167, 4
      %s169 = smul.addr %s168, 4
      %s170 = scalar_lea.vmem %s3, %s169
      %172 = vst [vmem:[#allocation2] sm:$0x1] 0.0
      %173 = vst [vmem:[#allocation2 + $0x11] sm:$0x1] 0.0
      %v174 = vld [vmem:[%s165] sm:$0xf]
      %v175 = vld [vmem:[%s165 + $0x4] sm:$0xf]
      %v176 = vunpack.c.l.bf16 %v174
      %v177 = vunpack.c.l.bf16 %v175
      %178 = vst [vmem:[#allocation2 + $0x1] sm:$0xff] %v176
      %179 = vst [vmem:[#allocation2 + $0x9] sm:$0xff] %v177
      %v180 = vld [vmem:[#allocation2] sm:$0xff]
      %v181 = vld [vmem:[#allocation2 + $0x8] sm:$0xff]
      %v182 = vld [vmem:[#allocation2 + $0x10] sm:$0x3]
      %vm186 = vcmask 1046528
      %v187 = vrot.slane %v180, 1
      %v188 = vrot.slane %v181, 1
      %v189 = vsel %vm186, %v187, %v188
      %v190 = vrot.slane %v182, 1
      %v191 = vsel %vm186, %v188, %v190
      %vm194 = vcmask 1045504
      %v195 = vrot.slane %v180, 2
      %v196 = vrot.slane %v181, 2
      %v197 = vsel %vm194, %v195, %v196
      %v198 = vrot.slane %v182, 2
      %v199 = vsel %vm194, %v196, %v198
      %v202 = vpack.c.bf16 %v181, %v180
      %v203 = vpack.c.bf16 %v191, %v189
      %v204 = vpack.c.bf16 %v199, %v197
      %v205 = vld [vmem:[%s1] sm:$0xff]
      %v206 = vld [vmem:[%s1 + $0x8] sm:$0xff]
      %v207 = vld [vmem:[%s1 + $0x10] sm:$0xff]
      %v208 = vld [vmem:[%s1 + $0x18] sm:$0xff]
      %v209 = vld [vmem:[%s1 + $0x20] sm:$0xff]
      %v210 = vld [vmem:[%s1 + $0x28] sm:$0xff]
      %v211 = vld [vmem:[%s1 + $0x30] sm:$0xff]
      %v212 = vld [vmem:[%s1 + $0x38] sm:$0xff]
      %v213 = vld [vmem:[%s1 + $0x40] sm:$0xff]
      %v214 = vld [vmem:[%s1 + $0x48] sm:$0xff]
      %v215 = vld [vmem:[%s1 + $0x50] sm:$0xff]
      %v216 = vld [vmem:[%s1 + $0x58] sm:$0xff]
      %v217 = vld [vmem:[%s1 + $0x60] sm:$0xff]
      %v218 = vld [vmem:[%s1 + $0x68] sm:$0xff]
      %v219 = vld [vmem:[%s1 + $0x70] sm:$0xff]
      %v220 = vld [vmem:[%s1 + $0x78] sm:$0xff]
      %v221 = vld [vmem:[%s1 + $0x80] sm:$0xff]
      %v222 = vld [vmem:[%s1 + $0x88] sm:$0xff]
      %v223 = vld [vmem:[%s1 + $0x90] sm:$0xff]
      %v224 = vld [vmem:[%s1 + $0x98] sm:$0xff]
      %v225 = vld [vmem:[%s1 + $0xa0] sm:$0xff]
      %v226 = vld [vmem:[%s1 + $0xa8] sm:$0xff]
      %v227 = vld [vmem:[%s1 + $0xb0] sm:$0xff]
      %v228 = vld [vmem:[%s1 + $0xb8] sm:$0xff]
      %v229 = vld [vmem:[%s1 + $0xc0] sm:$0xff]
      %v230 = vld [vmem:[%s1 + $0xc8] sm:$0xff]
      %v231 = vld [vmem:[%s1 + $0xd0] sm:$0xff]
      %v232 = vld [vmem:[%s1 + $0xd8] sm:$0xff]
      %v233 = vld [vmem:[%s1 + $0xe0] sm:$0xff]
      %v234 = vld [vmem:[%s1 + $0xe8] sm:$0xff]
      %v235 = vld [vmem:[%s1 + $0xf0] sm:$0xff]
      %v236 = vld [vmem:[%s1 + $0xf8] sm:$0xff]
      %v237 = vld [vmem:[%s1 + $0x100] sm:$0xff]
      %v238 = vld [vmem:[%s1 + $0x108] sm:$0xff]
      %v239 = vld [vmem:[%s1 + $0x110] sm:$0xff]
      %v240 = vld [vmem:[%s1 + $0x118] sm:$0xff]
      %v241 = vld [vmem:[%s1 + $0x120] sm:$0xff]
      %v242 = vld [vmem:[%s1 + $0x128] sm:$0xff]
      %v243 = vld [vmem:[%s1 + $0x130] sm:$0xff]
      %v244 = vld [vmem:[%s1 + $0x138] sm:$0xff]
      %v245 = vld [vmem:[%s1 + $0x140] sm:$0xff]
      %v246 = vld [vmem:[%s1 + $0x148] sm:$0xff]
      %v247 = vld [vmem:[%s1 + $0x150] sm:$0xff]
      %v248 = vld [vmem:[%s1 + $0x158] sm:$0xff]
      %v249 = vld [vmem:[%s1 + $0x160] sm:$0xff]
      %v250 = vld [vmem:[%s1 + $0x168] sm:$0xff]
      %v251 = vld [vmem:[%s1 + $0x170] sm:$0xff]
      %v252 = vld [vmem:[%s1 + $0x178] sm:$0xff]
      %v253 = vld [vmem:[%s2] sm:$0x3]
      %v255 = vlaneseq
      %v256 = vshrl.u32 %v255, 7
      %v257 = vsub.s32 0, %v256
      %v258 = vrot.slane %v253, %v257
      %v259 = vlaneseq
      %v260 = vshrl.u32 %v259, 7
      %v261 = vsub.s32 1, %v260
      %v262 = vrot.slane %v253, %v261
      %v313 = vunpack.c.l.b16 %v205
      %v314 = vunpack.c.h.b16 %v205
      %v315 = vunpack.c.l.b16 %v206
      %v316 = vunpack.c.h.b16 %v206
      %v317 = vunpack.c.l.b16 %v207
      %v318 = vunpack.c.h.b16 %v207
      %v319 = vunpack.c.l.b16 %v208
      %v320 = vunpack.c.h.b16 %v208
      %v321 = vunpack.c.l.b16 %v209
      %v322 = vunpack.c.h.b16 %v209
      %v323 = vunpack.c.l.b16 %v210
      %v324 = vunpack.c.h.b16 %v210
      %v325 = vunpack.c.l.b16 %v211
      %v326 = vunpack.c.h.b16 %v211
      %v327 = vunpack.c.l.b16 %v212
      %v328 = vunpack.c.h.b16 %v212
      %v329 = vunpack.c.l.b16 %v213
      %v330 = vunpack.c.h.b16 %v213
      %v331 = vunpack.c.l.b16 %v214
      %v332 = vunpack.c.h.b16 %v214
      %v333 = vunpack.c.l.b16 %v215
      %v334 = vunpack.c.h.b16 %v215
      %v335 = vunpack.c.l.b16 %v216
      %v336 = vunpack.c.h.b16 %v216
      %v337 = vunpack.c.l.b16 %v217
      %v338 = vunpack.c.h.b16 %v217
      %v339 = vunpack.c.l.b16 %v218
      %v340 = vunpack.c.h.b16 %v218
      %v341 = vunpack.c.l.b16 %v219
      %v342 = vunpack.c.h.b16 %v219
      %v343 = vunpack.c.l.b16 %v220
      %v344 = vunpack.c.h.b16 %v220
      %v345 = vunpack.c.l.b16 %v221
      %v346 = vunpack.c.h.b16 %v221
      %v347 = vunpack.c.l.b16 %v222
      %v348 = vunpack.c.h.b16 %v222
      %v349 = vunpack.c.l.b16 %v223
      %v350 = vunpack.c.h.b16 %v223
      %v351 = vunpack.c.l.b16 %v224
      %v352 = vunpack.c.h.b16 %v224
      %v353 = vunpack.c.l.b16 %v225
      %v354 = vunpack.c.h.b16 %v225
      %v355 = vunpack.c.l.b16 %v226
      %v356 = vunpack.c.h.b16 %v226
      %v357 = vunpack.c.l.b16 %v227
      %v358 = vunpack.c.h.b16 %v227
      %v359 = vunpack.c.l.b16 %v228
      %v360 = vunpack.c.h.b16 %v228
      %v361 = vunpack.c.l.b16 %v229
      %v362 = vunpack.c.h.b16 %v229
      %v363 = vunpack.c.l.b16 %v230
      %v364 = vunpack.c.h.b16 %v230
      %v365 = vunpack.c.l.b16 %v231
      %v366 = vunpack.c.h.b16 %v231
      %v367 = vunpack.c.l.b16 %v232
      %v368 = vunpack.c.h.b16 %v232
      %v369 = vunpack.c.l.b16 %v233
      %v370 = vunpack.c.h.b16 %v233
      %v371 = vunpack.c.l.b16 %v234
      %v372 = vunpack.c.h.b16 %v234
      %v373 = vunpack.c.l.b16 %v235
      %v374 = vunpack.c.h.b16 %v235
      %v375 = vunpack.c.l.b16 %v236
      %v376 = vunpack.c.h.b16 %v236
      %v377 = vunpack.c.l.b16 %v237
      %v378 = vunpack.c.h.b16 %v237
      %v379 = vunpack.c.l.b16 %v238
      %v380 = vunpack.c.h.b16 %v238
      %v381 = vunpack.c.l.b16 %v239
      %v382 = vunpack.c.h.b16 %v239
      %v383 = vunpack.c.l.b16 %v240
      %v384 = vunpack.c.h.b16 %v240
      %v385 = vunpack.c.l.b16 %v241
      %v386 = vunpack.c.h.b16 %v241
      %v387 = vunpack.c.l.b16 %v242
      %v388 = vunpack.c.h.b16 %v242
      %v389 = vunpack.c.l.b16 %v243
      %v390 = vunpack.c.h.b16 %v243
      %v391 = vunpack.c.l.b16 %v244
      %v392 = vunpack.c.h.b16 %v244
      %v393 = vunpack.c.l.b16 %v245
      %v394 = vunpack.c.h.b16 %v245
      %v395 = vunpack.c.l.b16 %v246
      %v396 = vunpack.c.h.b16 %v246
      %v397 = vunpack.c.l.b16 %v247
      %v398 = vunpack.c.h.b16 %v247
      %v399 = vunpack.c.l.b16 %v248
      %v400 = vunpack.c.h.b16 %v248
      %v401 = vunpack.c.l.b16 %v249
      %v402 = vunpack.c.h.b16 %v249
      %v403 = vunpack.c.l.b16 %v250
      %v404 = vunpack.c.h.b16 %v250
      %v405 = vunpack.c.l.b16 %v251
      %v406 = vunpack.c.h.b16 %v251
      %v407 = vunpack.c.l.b16 %v252
      %v408 = vunpack.c.h.b16 %v252
      %v409 = vpack.c.b16 %v315, %v313
      %v410 = vpack.c.b16 %v316, %v314
      %v411 = vpack.c.b16 %v319, %v317
      %v412 = vpack.c.b16 %v320, %v318
      %v413 = vpack.c.b16 %v323, %v321
      %v414 = vpack.c.b16 %v324, %v322
      %v415 = vpack.c.b16 %v327, %v325
      %v416 = vpack.c.b16 %v328, %v326
      %v417 = vpack.c.b16 %v331, %v329
      %v418 = vpack.c.b16 %v332, %v330
      %v419 = vpack.c.b16 %v335, %v333
      %v420 = vpack.c.b16 %v336, %v334
      %v421 = vpack.c.b16 %v339, %v337
      %v422 = vpack.c.b16 %v340, %v338
      %v423 = vpack.c.b16 %v343, %v341
      %v424 = vpack.c.b16 %v344, %v342
      %v425 = vpack.c.b16 %v347, %v345
      %v426 = vpack.c.b16 %v348, %v346
      %v427 = vpack.c.b16 %v351, %v349
      %v428 = vpack.c.b16 %v352, %v350
      %v429 = vpack.c.b16 %v355, %v353
      %v430 = vpack.c.b16 %v356, %v354
      %v431 = vpack.c.b16 %v359, %v357
      %v432 = vpack.c.b16 %v360, %v358
      %v433 = vpack.c.b16 %v363, %v361
      %v434 = vpack.c.b16 %v364, %v362
      %v435 = vpack.c.b16 %v367, %v365
      %v436 = vpack.c.b16 %v368, %v366
      %v437 = vpack.c.b16 %v371, %v369
      %v438 = vpack.c.b16 %v372, %v370
      %v439 = vpack.c.b16 %v375, %v373
      %v440 = vpack.c.b16 %v376, %v374
      %v441 = vpack.c.b16 %v379, %v377
      %v442 = vpack.c.b16 %v380, %v378
      %v443 = vpack.c.b16 %v383, %v381
      %v444 = vpack.c.b16 %v384, %v382
      %v445 = vpack.c.b16 %v387, %v385
      %v446 = vpack.c.b16 %v388, %v386
      %v447 = vpack.c.b16 %v391, %v389
      %v448 = vpack.c.b16 %v392, %v390
      %v449 = vpack.c.b16 %v395, %v393
      %v450 = vpack.c.b16 %v396, %v394
      %v451 = vpack.c.b16 %v399, %v397
      %v452 = vpack.c.b16 %v400, %v398
      %v453 = vpack.c.b16 %v403, %v401
      %v454 = vpack.c.b16 %v404, %v402
      %v455 = vpack.c.b16 %v407, %v405
      %v456 = vpack.c.b16 %v408, %v406
      %505 = vmatprep.subr.bf16.mxu0 %v424
      %506 = vmatpush1.bf16.msra.mxu0 %v423
      %507 = vmatprep.subr.bf16.mxu0 %v422
      %508 = vmatpush1.bf16.msra.mxu0 %v421
      %509 = vmatprep.subr.bf16.mxu0 %v420
      %510 = vmatpush1.bf16.msra.mxu0 %v419
      %511 = vmatprep.subr.bf16.mxu0 %v418
      %512 = vmatpush1.bf16.msra.mxu0 %v417
      %513 = vmatprep.subr.bf16.mxu0 %v416
      %514 = vmatpush1.bf16.msra.mxu0 %v415
      %515 = vmatprep.subr.bf16.mxu0 %v414
      %516 = vmatpush1.bf16.msra.mxu0 %v413
      %517 = vmatprep.subr.bf16.mxu0 %v412
      %518 = vmatpush1.bf16.msra.mxu0 %v411
      %519 = vmatprep.subr.bf16.mxu0 %v410
      %520 = vmatpush1.bf16.msra.mxu0 %v409
      %521 = vmatprep.subr.bf16.mxu0 %v440
      %522 = vmatpush2.bf16.msra.mxu0 %v439
      %523 = vmatprep.subr.bf16.mxu0 %v438
      %524 = vmatpush2.bf16.msra.mxu0 %v437
      %525 = vmatprep.subr.bf16.mxu0 %v436
      %526 = vmatpush2.bf16.msra.mxu0 %v435
      %527 = vmatprep.subr.bf16.mxu0 %v434
      %528 = vmatpush2.bf16.msra.mxu0 %v433
      %529 = vmatprep.subr.bf16.mxu0 %v432
      %530 = vmatpush2.bf16.msra.mxu0 %v431
      %531 = vmatprep.subr.bf16.mxu0 %v430
      %532 = vmatpush2.bf16.msra.mxu0 %v429
      %533 = vmatprep.subr.bf16.mxu0 %v428
      %534 = vmatpush2.bf16.msra.mxu0 %v427
      %535 = vmatprep.subr.bf16.mxu0 %v426
      %536 = vmatpush2.bf16.msra.mxu0 %v425
      %537 = vmatprep.mubr.bf16.mxu0 %v203
      %538 = vmatmul.mubr.bf16.gmra.mxu0 %v202
      %v539 = vpop.f32.mrf.mxu0
      %v540 = vadd.f32 %v258, %v539
      %v541 = vpop.f32.mrf.mxu0
      %v542 = vadd.f32 %v262, %v541
      %v543 = vpop.f32.mrf.mxu0
      %v544 = vadd.f32 %v258, %v543
      %v545 = vpop.f32.mrf.mxu0
      %v546 = vadd.f32 %v262, %v545
      %547 = vdwg.mxu0
      %548 = vmatprep.subr.bf16.mxu0 %v456
      %549 = vmatpush1.bf16.msra.mxu0 %v455
      %550 = vmatprep.subr.bf16.mxu0 %v454
      %551 = vmatpush1.bf16.msra.mxu0 %v453
      %552 = vmatprep.subr.bf16.mxu0 %v452
      %553 = vmatpush1.bf16.msra.mxu0 %v451
      %554 = vmatprep.subr.bf16.mxu0 %v450
      %555 = vmatpush1.bf16.msra.mxu0 %v449
      %556 = vmatprep.subr.bf16.mxu0 %v448
      %557 = vmatpush1.bf16.msra.mxu0 %v447
      %558 = vmatprep.subr.bf16.mxu0 %v446
      %559 = vmatpush1.bf16.msra.mxu0 %v445
      %560 = vmatprep.subr.bf16.mxu0 %v444
      %561 = vmatpush1.bf16.msra.mxu0 %v443
      %562 = vmatprep.subr.bf16.mxu0 %v442
      %563 = vmatpush1.bf16.msra.mxu0 %v441
      %564 = vmatprep.subr.bf16.mxu0 0
      %565 = vmatpush2.bf16.msra.mxu0 0
      %566 = vmatprep.subr.bf16.mxu0 0
      %567 = vmatpush2.bf16.msra.mxu0 0
      %568 = vmatprep.subr.bf16.mxu0 0
      %569 = vmatpush2.bf16.msra.mxu0 0
      %570 = vmatprep.subr.bf16.mxu0 0
      %571 = vmatpush2.bf16.msra.mxu0 0
      %572 = vmatprep.subr.bf16.mxu0 0
      %573 = vmatpush2.bf16.msra.mxu0 0
      %574 = vmatprep.subr.bf16.mxu0 0
      %575 = vmatpush2.bf16.msra.mxu0 0
      %576 = vmatprep.subr.bf16.mxu0 0
      %577 = vmatpush2.bf16.msra.mxu0 0
      %578 = vmatprep.subr.bf16.mxu0 0
      %579 = vmatpush2.bf16.msra.mxu0 0
      %580 = vmatprep.mubr.bf16.mxu0 0
      %581 = vmatmul.mubr.bf16.gmra.mxu0 %v204
      %v582 = vpop.f32.mrf.mxu0
      %v583 = vadd.f32 %v540, %v582
      %v584 = vpop.f32.mrf.mxu0
      %v585 = vadd.f32 %v542, %v584
      %v586 = vpop.f32.mrf.mxu0
      %v587 = vadd.f32 %v544, %v586
      %v588 = vpop.f32.mrf.mxu0
      %v589 = vadd.f32 %v546, %v588
      %590 = vdwg.mxu0
      %v591 = vmax.f32 %v583, 0.0
      %v592 = vmax.f32 %v585, 0.0
      %v593 = vmax.f32 %v587, 0.0
      %v594 = vmax.f32 %v589, 0.0
      %v595 = vpack.c.bf16 %v593, %v591
      %v596 = vpack.c.bf16 %v594, %v592
      %v599 = vunpack.c.l.b16 %v595
      %v600 = vunpack.c.l.b16 %v596
      %v601 = vunpack.c.h.b16 %v595
      %v602 = vunpack.c.h.b16 %v596
      %v603 = vpack.c.b16 %v600, %v599
      %v604 = vpack.c.b16 %v602, %v601
      %607 = vst [vmem:[%s170] sm:$0xff] %v603
      %608 = vst [vmem:[%s170 + $0x8] sm:$0xff] %v604
      %p609 = scmp.lt.s32.totalorder %s14, 1
      %s610 = scalar_select %p609, %s14, 1
      %s611 = smul.addr %s610, 4
      %s612 = smul.addr %s611, 4
      %s613 = scalar_lea.vmem %s3, %s612
      // Predicated region
      $region33: #{rnn_generator_forward.8} parent=31 // pred_check
        %p614 = pneg %p100
      $region34: #{rnn_generator_forward.8} parent=31 // pred_check_branch
        %616 = sbr.rel (%p614) target = $region36
      $region35: #{rnn_generator_forward.8} parent=31 // pred_region
        _
      $region36: #{rnn_generator_forward.8} parent=31 // pred_fallthru
        _
    $region32: #{rnn_generator_forward.8} parent=5 // pred_fallthru
      _
    %p617 = scmp.le.s32.totalorder 2, %s9
    // Predicated region
    $region37: #{rnn_generator_forward.8} parent=5 // pred_check
      %p618 = pneg %p617
    $region38: #{rnn_generator_forward.8} parent=5 // pred_check_branch
      %620 = sbr.rel (%p618) target = $region40
    $region39: #{rnn_generator_forward.8} parent=5 // pred_region
      %s621 = ssub.s32 %s9, 2
      // Predicated region
      $region41: #{rnn_generator_forward.8} parent=39 // pred_check
        %p622 = pneg %p106
      $region42: #{rnn_generator_forward.8} parent=39 // pred_check_branch
        %624 = sbr.rel (%p622) target = $region44
      $region43: #{rnn_generator_forward.8} parent=39 // pred_region
        %p625 = scmp.lt.s32.totalorder %s15, 1
        %s626 = scalar_select %p625, %s15, 1
        %s627 = smul.addr %s626, 4
        %s628 = smul.addr %s627, 4
        %s629 = scalar_lea.vmem %s3, %s628
      $region44: #{rnn_generator_forward.8} parent=39 // pred_fallthru
        _
    $region40: #{rnn_generator_forward.8} parent=5 // pred_fallthru
      _
  $region6: #{rnn_generator_forward.8} parent=0 // loop_footer
    %s13 = sadd.s32 1, %s9
  $region7: #{rnn_generator_forward.8} parent=0 // loop_footer_branch
    %8 = sbr.rel target = $region3
  $region8: #{rnn_generator_forward.8} parent=0 // loop_exit
    _

// kernel: rnn_generator_forward.9
$region0: #{rnn_generator_forward.9}
  #allocation0 [shape = 'u32[]', space=smem, size = 0x4, offset = 0x4, fixed_abs, tag = 'smem constant byte address 0x4 - core index']
  #allocation1 [shape = 'u32[144,128]{1,0:T(1,128)}', space=vmem, size = 0x12000, scoped, tag = 'internal scratch']
  #allocation2 [shape = 'f32[34,128]{1,0:T(8,128)}', space=vmem, size = 0x5000, scoped, tag = 'scratch operand']
  %s0 = inlined_call_operand.vmem [shape: bf16[2,32,128], index: 0, kind: input, shape index: {}]
  %s1 = inlined_call_operand.vmem [shape: bf16[384,2], index: 1, kind: input, shape index: {}]
  %s2 = inlined_call_operand.vmem [shape: f32[1,2], index: 2, kind: input, shape index: {}]
  %s3 = inlined_call_operand.vmem [shape: f32[2,32,2], index: 3, kind: output, shape index: {}]
  %s4 = sld [smem:[#allocation0]]
  $region45: #{rnn_generator_forward.9} parent=0
    _
  %s6 = ssub.s32 1, %s4
  %s7 = scalar_select 0, %s6, %s4
  loop: start=0, step=1, limit=4
  $region2: #{rnn_generator_forward.9} parent=0 // loop_pre_header
    _
  $region3: #{rnn_generator_forward.9} parent=0 // loop_header
    %s9 = sphi 0, %s13
    %p10 = scmp.ge.s32.totalorder %s9, 4
    %s19 = sphi 0, %s21
    %s22 = sphi 0, %s19
    %s23 = sphi 0, %s22
    %s39 = sphi 0, %s23
    %s43 = sphi 0, %s43
    %s45 = sphi 0, %s43
    %s46 = sphi 0, %s45
    %s60 = sphi 0, %s46
    %s64 = sphi 0, %s64
    %s66 = sphi 0, %s64
    %s67 = sphi 0, %s66
    %s81 = sphi 0, %s67
    %s87 = sphi 0, %s89
    %s90 = sphi 0, %s87
    %s91 = sphi 0, %s90
    %s107 = sphi 0, %s91
  $region4: #{rnn_generator_forward.9} parent=0 // loop_header_branch
    %12 = sbr.rel (%p10) target = $region8
  $region5: #{rnn_generator_forward.9} parent=0 // loop_body
    %s14 = ssub.s32 %s9, 1
    %s15 = ssub.s32 %s9, 2
    %s16 = sadd.s32 %s9, 1
    %s17 = ssub.s32 %s9, %s16
    %p18 = scmp.eq.s32.totalorder %s17, 0
    %s20 = sadd.s32 %s19, 1
    %s21 = scalar_select %p18, %s19, %s20
    %p24 = pneg %p18
    %p25 = scmp.eq.s32.totalorder %s9, 1
    %p26 = por %p24, %p25
    %p27 = scmp.ne.s32.totalorder %s19, %s22
    %p28 = scmp.eq.s32.totalorder %s9, 0
    %p29 = por %p27, %p28
    %p30 = scmp.ne.s32.totalorder %s19, %s22
    %p31 = scmp.eq.s32.totalorder %s14, 1
    %p32 = por %p30, %p31
    %p33 = scmp.ne.s32.totalorder %s22, %s23
    %p34 = scmp.eq.s32.totalorder %s14, 0
    %p35 = por %p33, %p34
    %p36 = scmp.ne.s32.totalorder %s22, %s23
    %p37 = scmp.eq.s32.totalorder %s15, 1
    %p38 = por %p36, %p37
    %p40 = scmp.ne.s32.totalorder %s23, %s39
    %p41 = scmp.eq.s32.totalorder %s15, 0
    %p42 = por %p40, %p41
    %s44 = sadd.s32 %s43, 1
    %p47 = scmp.eq.s32.totalorder %s9, 1
    %p48 = scmp.ne.s32.totalorder %s43, %s45
    %p49 = scmp.eq.s32.totalorder %s9, 0
    %p50 = por %p48, %p49
    %p51 = scmp.ne.s32.totalorder %s43, %s45
    %p52 = scmp.eq.s32.totalorder %s14, 1
    %p53 = por %p51, %p52
    %p54 = scmp.ne.s32.totalorder %s45, %s46
    %p55 = scmp.eq.s32.totalorder %s14, 0
    %p56 = por %p54, %p55
    %p57 = scmp.ne.s32.totalorder %s45, %s46
    %p58 = scmp.eq.s32.totalorder %s15, 1
    %p59 = por %p57, %p58
    %p61 = scmp.ne.s32.totalorder %s46, %s60
    %p62 = scmp.eq.s32.totalorder %s15, 0
    %p63 = por %p61, %p62
    %s65 = sadd.s32 %s64, 1
    %p68 = scmp.eq.s32.totalorder %s9, 1
    %p69 = scmp.ne.s32.totalorder %s64, %s66
    %p70 = scmp.eq.s32.totalorder %s9, 0
    %p71 = por %p69, %p70
    %p72 = scmp.ne.s32.totalorder %s64, %s66
    %p73 = scmp.eq.s32.totalorder %s14, 1
    %p74 = por %p72, %p73
    %p75 = scmp.ne.s32.totalorder %s66, %s67
    %p76 = scmp.eq.s32.totalorder %s14, 0
    %p77 = por %p75, %p76
    %p78 = scmp.ne.s32.totalorder %s66, %s67
    %p79 = scmp.eq.s32.totalorder %s15, 1
    %p80 = por %p78, %p79
    %p82 = scmp.ne.s32.totalorder %s67, %s81
    %p83 = scmp.eq.s32.totalorder %s15, 0
    %p84 = por %p82, %p83
    %s85 = ssub.s32 %s9, %s16
    %p86 = scmp.eq.s32.totalorder %s85, 0
    %s88 = sadd.s32 %s87, 1
    %s89 = scalar_select %p86, %s87, %s88
    %p92 = pneg %p86
    %p93 = scmp.eq.s32.totalorder %s9, 1
    %p94 = por %p92, %p93
    %p95 = scmp.ne.s32.totalorder %s87, %s90
    %p96 = scmp.eq.s32.totalorder %s9, 0
    %p97 = por %p95, %p96
    %p98 = scmp.ne.s32.totalorder %s87, %s90
    %p99 = scmp.eq.s32.totalorder %s14, 1
    %p100 = por %p98, %p99
    %p101 = scmp.ne.s32.totalorder %s90, %s91
    %p102 = scmp.eq.s32.totalorder %s14, 0
    %p103 = por %p101, %p102
    %p104 = scmp.ne.s32.totalorder %s90, %s91
    %p105 = scmp.eq.s32.totalorder %s15, 1
    %p106 = por %p104, %p105
    %p108 = scmp.ne.s32.totalorder %s91, %s107
    %p109 = scmp.eq.s32.totalorder %s15, 0
    %p110 = por %p108, %p109
    %p111 = scmp.le.s32.totalorder 1, %s9
    %p112 = scmp.lt.s32.totalorder %s9, 3
    %p113 = pnand %p111, %p112
    %p114 = pneg %p113
    // Predicated region
    $region9: #{rnn_generator_forward.9} parent=5 // pred_check
      _
    $region10: #{rnn_generator_forward.9} parent=5 // pred_check_branch
      %116 = sbr.rel (%p113) target = $region12
    $region11: #{rnn_generator_forward.9} parent=5 // pred_region
      %s117 = ssub.s32 %s9, 1
      // Predicated region
      $region13: #{rnn_generator_forward.9} parent=11 // pred_check
        %p118 = pneg %p56
      $region14: #{rnn_generator_forward.9} parent=11 // pred_check_branch
        %120 = sbr.rel (%p118) target = $region16
      $region15: #{rnn_generator_forward.9} parent=11 // pred_region
        _
      $region16: #{rnn_generator_forward.9} parent=11 // pred_fallthru
        _
      // Predicated region
      $region17: #{rnn_generator_forward.9} parent=11 // pred_check
        %p121 = pneg %p77
      $region18: #{rnn_generator_forward.9} parent=11 // pred_check_branch
        %123 = sbr.rel (%p121) target = $region20
      $region19: #{rnn_generator_forward.9} parent=11 // pred_region
        _
      $region20: #{rnn_generator_forward.9} parent=11 // pred_fallthru
        _
    $region12: #{rnn_generator_forward.9} parent=5 // pred_fallthru
      _
    %p124 = scmp.lt.s32.totalorder %s9, 2
    // Predicated region
    $region21: #{rnn_generator_forward.9} parent=5 // pred_check
      %p125 = pneg %p124
    $region22: #{rnn_generator_forward.9} parent=5 // pred_check_branch
      %127 = sbr.rel (%p125) target = $region24
    $region23: #{rnn_generator_forward.9} parent=5 // pred_region
      // Predicated region
      $region25: #{rnn_generator_forward.9} parent=23 // pred_check
        %p128 = pneg %p29
      $region26: #{rnn_generator_forward.9} parent=23 // pred_check_branch
        %130 = sbr.rel (%p128) target = $region28
      $region27: #{rnn_generator_forward.9} parent=23 // pred_region
        %p131 = scmp.lt.s32.totalorder %s9, 1
        %s132 = scalar_select %p131, %s9, 1
        %s133 = smul.addr %s132, 4
        %s134 = smul.addr %s133, 4
        %s135 = scalar_lea.vmem %s0, %s134
      $region28: #{rnn_generator_forward.9} parent=23 // pred_fallthru
        _
    $region24: #{rnn_generator_forward.9} parent=5 // pred_fallthru
      _
    %p136 = scmp.le.s32.totalorder 1, %s9
    %p137 = scmp.lt.s32.totalorder %s9, 3
    %p138 = pnand %p136, %p137
    %p139 = pneg %p138
    // Predicated region
    $region29: #{rnn_generator_forward.9} parent=5 // pred_check
      _
    $region30: #{rnn_generator_forward.9} parent=5 // pred_check_branch
      %141 = sbr.rel (%p138) target = $region32
    $region31: #{rnn_generator_forward.9} parent=5 // pred_region
      %s142 = ssub.s32 %s9, 1
      %p143 = scmp.lt.s32.totalorder %s14, 1
      %s144 = scalar_select %p143, %s14, 1
      %s145 = smul.addr %s144, 4
      %s146 = smul.addr %s145, 4
      %s147 = scalar_lea.vmem %s0, %s146
      %p148 = pneg %p35
      %p149 = pneg %p32
      %p150 = pneg %p56
      %p151 = pneg %p53
      %p152 = pneg %p77
      %p153 = pneg %p74
      %p154 = pneg %p103
      %p155 = pneg %p100
      %p156 = scmp.lt.s32.totalorder %s14, 1
      %s157 = scalar_select %p156, %s14, 1
      %s158 = smul.addr %s157, 4
      %s159 = smul.addr %s158, 8
      %s160 = scalar_lea.vmem %s3, %s159
      %p161 = scmp.lt.s32.totalorder %s14, 1
      %s162 = scalar_select %p161, %s14, 1
      %s163 = smul.addr %s162, 4
      %s164 = smul.addr %s163, 4
      %s165 = scalar_lea.vmem %s0, %s164
      %p166 = scmp.lt.s32.totalorder %s14, 1
      %s167 = scalar_select %p166, %s14, 1
      %s168 = smul.addr %s167, 4
      %s169 = smul.addr %s168, 8
      %s170 = scalar_lea.vmem %s3, %s169
      %172 = vst [vmem:[#allocation2] sm:$0x1] 0.0
      %173 = vst [vmem:[#allocation2 + $0x21] sm:$0x1] 0.0
      %v174 = vld [vmem:[%s165] sm:$0xf]
      %v175 = vld [vmem:[%s165 + $0x4] sm:$0xf]
      %v176 = vld [vmem:[%s165 + $0x8] sm:$0xf]
      %v177 = vld [vmem:[%s165 + $0xc] sm:$0xf]
      %v178 = vunpack.c.l.bf16 %v174
      %v179 = vunpack.c.l.bf16 %v175
      %v180 = vunpack.c.l.bf16 %v176
      %v181 = vunpack.c.l.bf16 %v177
      %182 = vst [vmem:[#allocation2 + $0x1] sm:$0xff] %v178
      %183 = vst [vmem:[#allocation2 + $0x9] sm:$0xff] %v179
      %184 = vst [vmem:[#allocation2 + $0x11] sm:$0xff] %v180
      %185 = vst [vmem:[#allocation2 + $0x19] sm:$0xff] %v181
      %v186 = vld [vmem:[#allocation2] sm:$0xff]
      %v187 = vld [vmem:[#allocation2 + $0x8] sm:$0xff]
      %v188 = vld [vmem:[#allocation2 + $0x10] sm:$0xff]
      %v189 = vld [vmem:[#allocation2 + $0x18] sm:$0xff]
      %v190 = vld [vmem:[#allocation2 + $0x20] sm:$0x3]
      %vm196 = vcmask 1046528
      %v197 = vrot.slane %v186, 1
      %v198 = vrot.slane %v187, 1
      %v199 = vsel %vm196, %v197, %v198
      %v200 = vrot.slane %v188, 1
      %v201 = vsel %vm196, %v198, %v200
      %v202 = vrot.slane %v189, 1
      %v203 = vsel %vm196, %v200, %v202
      %v204 = vrot.slane %v190, 1
      %v205 = vsel %vm196, %v202, %v204
      %vm210 = vcmask 1045504
      %v211 = vrot.slane %v186, 2
      %v212 = vrot.slane %v187, 2
      %v213 = vsel %vm210, %v211, %v212
      %v214 = vrot.slane %v188, 2
      %v215 = vsel %vm210, %v212, %v214
      %v216 = vrot.slane %v189, 2
      %v217 = vsel %vm210, %v214, %v216
      %v218 = vrot.slane %v190, 2
      %v219 = vsel %vm210, %v216, %v218
      %v224 = vpack.c.bf16 %v187, %v186
      %v225 = vpack.c.bf16 %v201, %v199
      %v226 = vpack.c.bf16 %v215, %v213
      %v227 = vpack.c.bf16 %v189, %v188
      %v228 = vpack.c.bf16 %v205, %v203
      %v229 = vpack.c.bf16 %v219, %v217
      %v230 = vld [vmem:[%s1] sm:$0xf]
      %v231 = vld [vmem:[%s1 + $0x4] sm:$0xf]
      %v232 = vld [vmem:[%s1 + $0x8] sm:$0xf]
      %v233 = vld [vmem:[%s1 + $0xc] sm:$0xf]
      %v234 = vld [vmem:[%s1 + $0x10] sm:$0xf]
      %v235 = vld [vmem:[%s1 + $0x14] sm:$0xf]
      %v236 = vld [vmem:[%s1 + $0x18] sm:$0xf]
      %v237 = vld [vmem:[%s1 + $0x1c] sm:$0xf]
      %v238 = vld [vmem:[%s1 + $0x20] sm:$0xf]
      %v239 = vld [vmem:[%s1 + $0x24] sm:$0xf]
      %v240 = vld [vmem:[%s1 + $0x28] sm:$0xf]
      %v241 = vld [vmem:[%s1 + $0x2c] sm:$0xf]
      %v242 = vld [vmem:[%s1 + $0x30] sm:$0xf]
      %v243 = vld [vmem:[%s1 + $0x34] sm:$0xf]
      %v244 = vld [vmem:[%s1 + $0x38] sm:$0xf]
      %v245 = vld [vmem:[%s1 + $0x3c] sm:$0xf]
      %v246 = vld [vmem:[%s1 + $0x40] sm:$0xf]
      %v247 = vld [vmem:[%s1 + $0x44] sm:$0xf]
      %v248 = vld [vmem:[%s1 + $0x48] sm:$0xf]
      %v249 = vld [vmem:[%s1 + $0x4c] sm:$0xf]
      %v250 = vld [vmem:[%s1 + $0x50] sm:$0xf]
      %v251 = vld [vmem:[%s1 + $0x54] sm:$0xf]
      %v252 = vld [vmem:[%s1 + $0x58] sm:$0xf]
      %v253 = vld [vmem:[%s1 + $0x5c] sm:$0xf]
      %v254 = vld [vmem:[%s1 + $0x60] sm:$0xf]
      %v255 = vld [vmem:[%s1 + $0x64] sm:$0xf]
      %v256 = vld [vmem:[%s1 + $0x68] sm:$0xf]
      %v257 = vld [vmem:[%s1 + $0x6c] sm:$0xf]
      %v258 = vld [vmem:[%s1 + $0x70] sm:$0xf]
      %v259 = vld [vmem:[%s1 + $0x74] sm:$0xf]
      %v260 = vld [vmem:[%s1 + $0x78] sm:$0xf]
      %v261 = vld [vmem:[%s1 + $0x7c] sm:$0xf]
      %v262 = vld [vmem:[%s1 + $0x80] sm:$0xf]
      %v263 = vld [vmem:[%s1 + $0x84] sm:$0xf]
      %v264 = vld [vmem:[%s1 + $0x88] sm:$0xf]
      %v265 = vld [vmem:[%s1 + $0x8c] sm:$0xf]
      %v266 = vld [vmem:[%s1 + $0x90] sm:$0xf]
      %v267 = vld [vmem:[%s1 + $0x94] sm:$0xf]
      %v268 = vld [vmem:[%s1 + $0x98] sm:$0xf]
      %v269 = vld [vmem:[%s1 + $0x9c] sm:$0xf]
      %v270 = vld [vmem:[%s1 + $0xa0] sm:$0xf]
      %v271 = vld [vmem:[%s1 + $0xa4] sm:$0xf]
      %v272 = vld [vmem:[%s1 + $0xa8] sm:$0xf]
      %v273 = vld [vmem:[%s1 + $0xac] sm:$0xf]
      %v274 = vld [vmem:[%s1 + $0xb0] sm:$0xf]
      %v275 = vld [vmem:[%s1 + $0xb4] sm:$0xf]
      %v276 = vld [vmem:[%s1 + $0xb8] sm:$0xf]
      %v277 = vld [vmem:[%s1 + $0xbc] sm:$0xf]
      %v278 = vld [vmem:[%s2] sm:$0x1]
      %v280 = vlaneseq
      %v281 = vshrl.u32 %v280, 7
      %v282 = vsub.s32 0, %v281
      %v283 = vrot.slane %v278, %v282
      %v333 = vunpack.c.l.b16 %v230
      %v334 = vunpack.c.l.b16 %v231
      %v335 = vunpack.c.l.b16 %v232
      %v336 = vunpack.c.l.b16 %v233
      %v337 = vunpack.c.l.b16 %v234
      %v338 = vunpack.c.l.b16 %v235
      %v339 = vunpack.c.l.b16 %v236
      %v340 = vunpack.c.l.b16 %v237
      %v341 = vunpack.c.l.b16 %v238
      %v342 = vunpack.c.l.b16 %v239
      %v343 = vunpack.c.l.b16 %v240
      %v344 = vunpack.c.l.b16 %v241
      %v345 = vunpack.c.l.b16 %v242
      %v346 = vunpack.c.l.b16 %v243
      %v347 = vunpack.c.l.b16 %v244
      %v348 = vunpack.c.l.b16 %v245
      %v349 = vunpack.c.l.b16 %v246
      %v350 = vunpack.c.l.b16 %v247
      %v351 = vunpack.c.l.b16 %v248
      %v352 = vunpack.c.l.b16 %v249
      %v353 = vunpack.c.l.b16 %v250
      %v354 = vunpack.c.l.b16 %v251
      %v355 = vunpack.c.l.b16 %v252
      %v356 = vunpack.c.l.b16 %v253
      %v357 = vunpack.c.l.b16 %v254
      %v358 = vunpack.c.l.b16 %v255
      %v359 = vunpack.c.l.b16 %v256
      %v360 = vunpack.c.l.b16 %v257
      %v361 = vunpack.c.l.b16 %v258
      %v362 = vunpack.c.l.b16 %v259
      %v363 = vunpack.c.l.b16 %v260
      %v364 = vunpack.c.l.b16 %v261
      %v365 = vunpack.c.l.b16 %v262
      %v366 = vunpack.c.l.b16 %v263
      %v367 = vunpack.c.l.b16 %v264
      %v368 = vunpack.c.l.b16 %v265
      %v369 = vunpack.c.l.b16 %v266
      %v370 = vunpack.c.l.b16 %v267
      %v371 = vunpack.c.l.b16 %v268
      %v372 = vunpack.c.l.b16 %v269
      %v373 = vunpack.c.l.b16 %v270
      %v374 = vunpack.c.l.b16 %v271
      %v375 = vunpack.c.l.b16 %v272
      %v376 = vunpack.c.l.b16 %v273
      %v377 = vunpack.c.l.b16 %v274
      %v378 = vunpack.c.l.b16 %v275
      %v379 = vunpack.c.l.b16 %v276
      %v380 = vunpack.c.l.b16 %v277
      %v381 = vpack.c.b16 %v334, %v333
      %v382 = vpack.c.b16 %v336, %v335
      %v383 = vpack.c.b16 %v338, %v337
      %v384 = vpack.c.b16 %v340, %v339
      %v385 = vpack.c.b16 %v342, %v341
      %v386 = vpack.c.b16 %v344, %v343
      %v387 = vpack.c.b16 %v346, %v345
      %v388 = vpack.c.b16 %v348, %v347
      %v389 = vpack.c.b16 %v350, %v349
      %v390 = vpack.c.b16 %v352, %v351
      %v391 = vpack.c.b16 %v354, %v353
      %v392 = vpack.c.b16 %v356, %v355
      %v393 = vpack.c.b16 %v358, %v357
      %v394 = vpack.c.b16 %v360, %v359
      %v395 = vpack.c.b16 %v362, %v361
      %v396 = vpack.c.b16 %v364, %v363
      %v397 = vpack.c.b16 %v366, %v365
      %v398 = vpack.c.b16 %v368, %v367
      %v399 = vpack.c.b16 %v370, %v369
      %v400 = vpack.c.b16 %v372, %v371
      %v401 = vpack.c.b16 %v374, %v373
      %v402 = vpack.c.b16 %v376, %v375
      %v403 = vpack.c.b16 %v378, %v377
      %v404 = vpack.c.b16 %v380, %v379
      %429 = vmatprep.subr.bf16.mxu0 0
      %430 = vmatpush1.bf16.msra.mxu0 %v388
      %431 = vmatprep.subr.bf16.mxu0 0
      %432 = vmatpush1.bf16.msra.mxu0 %v387
      %433 = vmatprep.subr.bf16.mxu0 0
      %434 = vmatpush1.bf16.msra.mxu0 %v386
      %435 = vmatprep.subr.bf16.mxu0 0
      %436 = vmatpush1.bf16.msra.mxu0 %v385
      %437 = vmatprep.subr.bf16.mxu0 0
      %438 = vmatpush1.bf16.msra.mxu0 %v384
      %439 = vmatprep.subr.bf16.mxu0 0
      %440 = vmatpush1.bf16.msra.mxu0 %v383
      %441 = vmatprep.subr.bf16.mxu0 0
      %442 = vmatpush1.bf16.msra.mxu0 %v382
      %443 = vmatprep.subr.bf16.mxu0 0
      %444 = vmatpush1.bf16.msra.mxu0 %v381
      %445 = vmatprep.subr.bf16.mxu0 0
      %446 = vmatpush2.bf16.msra.mxu0 %v396
      %447 = vmatprep.subr.bf16.mxu0 0
      %448 = vmatpush2.bf16.msra.mxu0 %v395
      %449 = vmatprep.subr.bf16.mxu0 0
      %450 = vmatpush2.bf16.msra.mxu0 %v394
      %451 = vmatprep.subr.bf16.mxu0 0
      %452 = vmatpush2.bf16.msra.mxu0 %v393
      %453 = vmatprep.subr.bf16.mxu0 0
      %454 = vmatpush2.bf16.msra.mxu0 %v392
      %455 = vmatprep.subr.bf16.mxu0 0
      %456 = vmatpush2.bf16.msra.mxu0 %v391
      %457 = vmatprep.subr.bf16.mxu0 0
      %458 = vmatpush2.bf16.msra.mxu0 %v390
      %459 = vmatprep.subr.bf16.mxu0 0
      %460 = vmatpush2.bf16.msra.mxu0 %v389
      %461 = vmatprep.mubr.bf16.mxu0 %v225
      %462 = vmatmul.mubr.bf16.gmra.mxu0 %v224
      %v463 = vpop.f32.mrf.mxu0
      %v464 = vadd.f32 %v283, %v463
      %v465 = vpop.f32.mrf.mxu0
      %v466 = vpop.f32.mrf.mxu0
      %v467 = vadd.f32 %v283, %v466
      %v468 = vpop.f32.mrf.mxu0
      %469 = vmatprep.mubr.bf16.mxu0 %v228
      %470 = vmatmul.mubr.bf16.gmra.mxu0 %v227
      %v471 = vpop.f32.mrf.mxu0
      %v472 = vadd.f32 %v283, %v471
      %v473 = vpop.f32.mrf.mxu0
      %v474 = vpop.f32.mrf.mxu0
      %v475 = vadd.f32 %v283, %v474
      %v476 = vpop.f32.mrf.mxu0
      %477 = vdwg.mxu0
      %478 = vmatprep.subr.bf16.mxu0 0
      %479 = vmatpush1.bf16.msra.mxu0 %v404
      %480 = vmatprep.subr.bf16.mxu0 0
      %481 = vmatpush1.bf16.msra.mxu0 %v403
      %482 = vmatprep.subr.bf16.mxu0 0
      %483 = vmatpush1.bf16.msra.mxu0 %v402
      %484 = vmatprep.subr.bf16.mxu0 0
      %485 = vmatpush1.bf16.msra.mxu0 %v401
      %486 = vmatprep.subr.bf16.mxu0 0
      %487 = vmatpush1.bf16.msra.mxu0 %v400
      %488 = vmatprep.subr.bf16.mxu0 0
      %489 = vmatpush1.bf16.msra.mxu0 %v399
      %490 = vmatprep.subr.bf16.mxu0 0
      %491 = vmatpush1.bf16.msra.mxu0 %v398
      %492 = vmatprep.subr.bf16.mxu0 0
      %493 = vmatpush1.bf16.msra.mxu0 %v397
      %494 = vmatprep.subr.bf16.mxu0 0
      %495 = vmatpush2.bf16.msra.mxu0 0
      %496 = vmatprep.subr.bf16.mxu0 0
      %497 = vmatpush2.bf16.msra.mxu0 0
      %498 = vmatprep.subr.bf16.mxu0 0
      %499 = vmatpush2.bf16.msra.mxu0 0
      %500 = vmatprep.subr.bf16.mxu0 0
      %501 = vmatpush2.bf16.msra.mxu0 0
      %502 = vmatprep.subr.bf16.mxu0 0
      %503 = vmatpush2.bf16.msra.mxu0 0
      %504 = vmatprep.subr.bf16.mxu0 0
      %505 = vmatpush2.bf16.msra.mxu0 0
      %506 = vmatprep.subr.bf16.mxu0 0
      %507 = vmatpush2.bf16.msra.mxu0 0
      %508 = vmatprep.subr.bf16.mxu0 0
      %509 = vmatpush2.bf16.msra.mxu0 0
      %510 = vmatprep.mubr.bf16.mxu0 0
      %511 = vmatmul.mubr.bf16.gmra.mxu0 %v226
      %v512 = vpop.f32.mrf.mxu0
      %v513 = vadd.f32 %v464, %v512
      %v514 = vpop.f32.mrf.mxu0
      %v515 = vpop.f32.mrf.mxu0
      %v516 = vadd.f32 %v467, %v515
      %v517 = vpop.f32.mrf.mxu0
      %518 = vmatprep.mubr.bf16.mxu0 0
      %519 = vmatmul.mubr.bf16.gmra.mxu0 %v229
      %v520 = vpop.f32.mrf.mxu0
      %v521 = vadd.f32 %v472, %v520
      %v522 = vpop.f32.mrf.mxu0
      %v523 = vpop.f32.mrf.mxu0
      %v524 = vadd.f32 %v475, %v523
      %v525 = vpop.f32.mrf.mxu0
      %526 = vdwg.mxu0
      %v527 = vtanh.pop %v513
      %v528 = vtanh.pop %v516
      %v529 = vtanh.pop %v521
      %v530 = vtanh.pop %v524
      %vm531 = vcmask 15360
      %532 = vst.msk [vmem:[%s170] sm:$0xff] %vm531, %v527
      %533 = vst.msk [vmem:[%s170 + $0x8] sm:$0xff] %vm531, %v528
      %534 = vst.msk [vmem:[%s170 + $0x10] sm:$0xff] %vm531, %v529
      %535 = vst.msk [vmem:[%s170 + $0x18] sm:$0xff] %vm531, %v530
      %p536 = scmp.lt.s32.totalorder %s14, 1
      %s537 = scalar_select %p536, %s14, 1
      %s538 = smul.addr %s537, 4
      %s539 = smul.addr %s538, 8
      %s540 = scalar_lea.vmem %s3, %s539
      // Predicated region
      $region33: #{rnn_generator_forward.9} parent=31 // pred_check
        %p541 = pneg %p100
      $region34: #{rnn_generator_forward.9} parent=31 // pred_check_branch
        %543 = sbr.rel (%p541) target = $region36
      $region35: #{rnn_generator_forward.9} parent=31 // pred_region
        _
      $region36: #{rnn_generator_forward.9} parent=31 // pred_fallthru
        _
    $region32: #{rnn_generator_forward.9} parent=5 // pred_fallthru
      _
    %p544 = scmp.le.s32.totalorder 2, %s9
    // Predicated region
    $region37: #{rnn_generator_forward.9} parent=5 // pred_check
      %p545 = pneg %p544
    $region38: #{rnn_generator_forward.9} parent=5 // pred_check_branch
      %547 = sbr.rel (%p545) target = $region40
    $region39: #{rnn_generator_forward.9} parent=5 // pred_region
      %s548 = ssub.s32 %s9, 2
      // Predicated region
      $region41: #{rnn_generator_forward.9} parent=39 // pred_check
        %p549 = pneg %p106
      $region42: #{rnn_generator_forward.9} parent=39 // pred_check_branch
        %551 = sbr.rel (%p549) target = $region44
      $region43: #{rnn_generator_forward.9} parent=39 // pred_region
        %p552 = scmp.lt.s32.totalorder %s15, 1
        %s553 = scalar_select %p552, %s15, 1
        %s554 = smul.addr %s553, 4
        %s555 = smul.addr %s554, 8
        %s556 = scalar_lea.vmem %s3, %s555
      $region44: #{rnn_generator_forward.9} parent=39 // pred_fallthru
        _
    $region40: #{rnn_generator_forward.9} parent=5 // pred_fallthru
      _
  $region6: #{rnn_generator_forward.9} parent=0 // loop_footer
    %s13 = sadd.s32 1, %s9
  $region7: #{rnn_generator_forward.9} parent=0 // loop_footer_branch
    %8 = sbr.rel target = $region3
  $region8: #{rnn_generator_forward.9} parent=0 // loop_exit
    _

</llo_original>
